<compile_context>
chip_gen: v6e
topology: v6e:2x2x1
jax: 0.10.0
libtpu: 0.0.40
codegen_flags: <defaults>
</compile_context>

<pallas_src>
import functools

import jax
import jax.numpy as jnp
from jax.experimental import pallas as pl
from jax.experimental.pallas import tpu as pltpu

IN_FEATURES = 196608
OUT_FEATURES = 10
LANES = 128
K_ROWS = IN_FEATURES // LANES      # 1536 rows of 128 features
TKR = 384                          # rows per reduction tile (= 49152 features)


def _num_k_splits():
    """2 on chips with 2 TensorCores per device (v7x, v4/v5p megacore), else 1."""
    try:
        kind = jax.devices()[0].device_kind.lower()
    except Exception:
        return 1
    return 2 if any(tag in kind for tag in ("v7", "v5p", "v4")) else 1


def _linear_kernel(x_ref, w_ref, b_ref, o_ref, acc_ref):
    """VPU per-lane partial-sum reduction (avoids tiny-M MXU matmuls).

    x_ref  : [B, TKR, 128] f32     activation tile
    w_ref  : [OUT, TKR, 128] f32   lane-dense weight tile
    b_ref  : [1, OUT] f32          bias
    o_ref  : [B, OUT] f32          per-split output block (resident over k)
    acc_ref: [B, OUT, 128] f32     per-lane partial sums (VMEM scratch)
    """
    c = pl.program_id(0)           # K-split (TensorCore) index
    k = pl.program_id(1)           # reduction step within the split
    batch = x_ref.shape[0]
    n_out = w_ref.shape[0]

    @pl.when(k == 0)
    def _():
        acc_ref[...] = jnp.zeros_like(acc_ref)

    # Unrolled over (batch, out_feature): fine for small batch; each pair does
    # full-vreg multiplies and a sublane-axis reduce into 128 lane partials.
    for b in range(batch):
        xb = x_ref[b]                                   # [TKR, 128]
        for o in range(n_out):
            prod = xb * w_ref[o]                        # [TKR, 128] VPU mults
            part = jnp.sum(prod, axis=0, keepdims=True)  # [1, 128]
            acc_ref[b, o:o + 1, :] += part

    @pl.when(k == pl.num_programs(1) - 1)
    def _():
        out = jnp.sum(acc_ref[...], axis=-1)            # [B, OUT] lane-reduce
        # Add the bias exactly once (split 0); other splits hold pure partials.
        gate = jnp.where(c == 0, 1.0, 0.0).astype(jnp.float32)
        o_ref[...] = out + gate * b_ref[...]


@functools.partial(jax.jit, static_argnames=("num_splits", "tkr"))
def tudui_forward(x, w, b, *, num_splits, tkr=TKR):
    """x: [B, 196608] f32; w: [10, 1536, 128] f32 (PyTorch [10, K] row-split); b: [10] f32."""
    B, K = x.shape
    assert K == IN_FEATURES
    k_rows = K // LANES
    assert k_rows % (num_splits * tkr) == 0, "K rows must tile into splits * tkr"
    kpc = k_rows // (num_splits * tkr)      # reduction steps per split

    x3 = x.reshape(B, k_rows, LANES)        # trailing-dim split: free bitcast reshape
    b2 = b.reshape(1, OUT_FEATURES)

    cost = pl.CostEstimate(
        flops=2 * B * K * OUT_FEATURES,
        transcendentals=0,
        bytes_accessed=(B * K + OUT_FEATURES * K + OUT_FEATURES
                        + num_splits * B * OUT_FEATURES) * 4,
    )

    partials = pl.pallas_call(
        _linear_kernel,
        out_shape=jax.ShapeDtypeStruct((num_splits, B, OUT_FEATURES), jnp.float32),
        grid_spec=pltpu.PrefetchScalarGridSpec(
            num_scalar_prefetch=0,
            grid=(num_splits, kpc),
            in_specs=[
                # x tile [B, TKR, 128]; row-block index = c * kpc + k
                pl.BlockSpec((B, tkr, LANES), lambda c, k: (0, c * kpc + k, 0)),
                # lane-dense weight tile [OUT, TKR, 128] (no lane padding)
                pl.BlockSpec((OUT_FEATURES, tkr, LANES),
                             lambda c, k: (0, c * kpc + k, 0)),
                # tiny bias, same block every step
                pl.BlockSpec((1, OUT_FEATURES), lambda c, k: (0, 0)),
            ],
            # one [B, 10] block per split, resident across the reduction axis
            out_specs=pl.BlockSpec((None, B, OUT_FEATURES), lambda c, k: (c, 0, 0)),
            scratch_shapes=[pltpu.VMEM((B, OUT_FEATURES, LANES), jnp.float32)],
        ),
        compiler_params=pltpu.CompilerParams(
            dimension_semantics=("parallel", "arbitrary"),
            vmem_limit_bytes=32 * 1024 * 1024,
        ),
        cost_estimate=cost,
    )(x3, w, b2)

    if num_splits == 1:
        return partials[0]                  # free squeeze; bias already applied
    return partials.sum(axis=0)             # tiny cross-TC combine (bias on split 0)


def init_params(key):
    """Deterministic init matching nn.Linear's uniform(-1/sqrt(K), 1/sqrt(K)).

    The weight keeps PyTorch's [out, in] orientation; to import real PyTorch
    weights use `w_torch.reshape(10, K_ROWS, LANES)`.
    """
    kw, kb = jax.random.split(key)
    bound = 1.0 / jnp.sqrt(jnp.float32(IN_FEATURES))
    w = jax.random.uniform(
        kw, (OUT_FEATURES, IN_FEATURES), jnp.float32, -bound, bound
    ).reshape(OUT_FEATURES, K_ROWS, LANES)
    b = jax.random.uniform(kb, (OUT_FEATURES,), jnp.float32, -bound, bound)
    return w, b


if __name__ == "__main__":
    key = jax.random.PRNGKey(0)
    k_param, k_x = jax.random.split(key)

    # Small batch; the feature dim is fixed by the module (flattened 3x256x256).
    B = 2
    x = jax.random.normal(k_x, (B, IN_FEATURES), jnp.float32)
    w, b = init_params(k_param)

    num_splits = _num_k_splits()
    out = tudui_forward(x, w, b, num_splits=num_splits)
    out = jax.block_until_ready(out)

    # High-precision reference (kernel accumulates in exact f32 on the VPU).
    w2d = w.reshape(OUT_FEATURES, IN_FEATURES)
    ref = jnp.dot(x, w2d.T, precision=jax.lax.Precision.HIGHEST) + b[None, :]
    assert out.shape == (B, OUT_FEATURES), out.shape
    assert jnp.allclose(out, ref, atol=1e-3, rtol=1e-3), (
        float(jnp.max(jnp.abs(out - ref)))
    )
    print("KERNEL_OK")
</pallas_src>

<mosaic_0001>
module attributes {stable_mosaic.version = 11 : i64} {
  func.func @_linear_kernel(%arg0: i32, %arg1: i32, %arg2: memref<2x384x128xf32, #tpu.memory_space<vmem>>, %arg3: memref<10x384x128xf32, #tpu.memory_space<vmem>>, %arg4: memref<1x10xf32, #tpu.memory_space<vmem>>, %arg5: memref<1x2x10xf32, #tpu.memory_space<vmem>>, %arg6: memref<2x10x128xf32, #tpu.memory_space<vmem>>) attributes {dimension_semantics = [#tpu.dimension_semantics<parallel>, #tpu.dimension_semantics<arbitrary>], iteration_bounds = array<i64: 1, 4>, scalar_prefetch = 0 : i64, scratch_operands = 1 : i64, tpu.core_type = #tpu.core_type<tc>, window_params = [{transform_indices = @transform_0, window_bounds = array<i64: 2, 384, 128>}, {transform_indices = @transform_1, window_bounds = array<i64: 10, 384, 128>}, {pipeline_mode = #tpu.pipeline_mode<synchronous>, transform_indices = @transform_2, window_bounds = array<i64: 1, 10>}, {transform_indices = @transform_3, window_bounds = array<i64: 1, 2, 10>}]} {
    %c0_i32 = arith.constant 0 : i32
    %0 = arith.cmpi eq, %arg1, %c0_i32 : i32
    %1 = arith.extui %0 : i1 to i32
    %c0_i32_0 = arith.constant 0 : i32
    %2 = arith.cmpi ne, %1, %c0_i32_0 : i32
    scf.if %2 {
      %cst_197 = arith.constant 0.000000e+00 : f32
      %230 = vector.broadcast %cst_197 : f32 to vector<2x10x128xf32>
      %c0_198 = arith.constant 0 : index
      %c0_199 = arith.constant 0 : index
      %c0_200 = arith.constant 0 : index
      %231 = vector.load %arg6[%c0_198, %c0_199, %c0_200] : memref<2x10x128xf32, #tpu.memory_space<vmem>>, vector<2x10x128xf32>
      tpu.vector_store %arg6[%c0_198, %c0_199, %c0_200], %230 {strides = array<i32>} : memref<2x10x128xf32, #tpu.memory_space<vmem>>, vector<2x10x128xf32>,
    } else {
    }
    %c0 = arith.constant 0 : index
    %c0_1 = arith.constant 0 : index
    %c0_2 = arith.constant 0 : index
    %3 = vector.load %arg2[%c0, %c0_1, %c0_2] : memref<2x384x128xf32, #tpu.memory_space<vmem>>, vector<1x384x128xf32>
    %4 = vector.shape_cast %3 : vector<1x384x128xf32> to vector<384x128xf32>
    %c0_3 = arith.constant 0 : index
    %c0_4 = arith.constant 0 : index
    %c0_5 = arith.constant 0 : index
    %5 = vector.load %arg3[%c0_3, %c0_4, %c0_5] : memref<10x384x128xf32, #tpu.memory_space<vmem>>, vector<1x384x128xf32>
    %6 = vector.shape_cast %5 : vector<1x384x128xf32> to vector<384x128xf32>
    %7 = arith.mulf %4, %6 : vector<384x128xf32>
    %cst = arith.constant dense<0.000000e+00> : vector<128xf32>
    %8 = vector.multi_reduction <add>, %7, %cst [0] : vector<384x128xf32> to vector<128xf32>
    %9 = vector.shape_cast %8 : vector<128xf32> to vector<1x128xf32>
    %c0_6 = arith.constant 0 : index
    %c0_7 = arith.constant 0 : index
    %c0_8 = arith.constant 0 : index
    %10 = vector.load %arg6[%c0_6, %c0_7, %c0_8] : memref<2x10x128xf32, #tpu.memory_space<vmem>>, vector<1x1x128xf32>
    %11 = vector.shape_cast %10 : vector<1x1x128xf32> to vector<1x128xf32>
    %12 = arith.addf %11, %9 : vector<1x128xf32>
    %c0_9 = arith.constant 0 : index
    %c0_10 = arith.constant 0 : index
    %c0_11 = arith.constant 0 : index
    %13 = vector.load %arg6[%c0_9, %c0_10, %c0_11] : memref<2x10x128xf32, #tpu.memory_space<vmem>>, vector<1x1x128xf32>
    %14 = vector.shape_cast %13 : vector<1x1x128xf32> to vector<1x128xf32>
    %15 = vector.shape_cast %12 : vector<1x128xf32> to vector<1x1x128xf32>
    tpu.vector_store %arg6[%c0_9, %c0_10, %c0_11], %15 {strides = array<i32>} : memref<2x10x128xf32, #tpu.memory_space<vmem>>, vector<1x1x128xf32>,
    %c1 = arith.constant 1 : index
    %c0_12 = arith.constant 0 : index
    %c0_13 = arith.constant 0 : index
    %16 = vector.load %arg3[%c1, %c0_12, %c0_13] : memref<10x384x128xf32, #tpu.memory_space<vmem>>, vector<1x384x128xf32>
    %17 = vector.shape_cast %16 : vector<1x384x128xf32> to vector<384x128xf32>
    %18 = arith.mulf %4, %17 : vector<384x128xf32>
    %cst_14 = arith.constant dense<0.000000e+00> : vector<128xf32>
    %19 = vector.multi_reduction <add>, %18, %cst_14 [0] : vector<384x128xf32> to vector<128xf32>
    %20 = vector.shape_cast %19 : vector<128xf32> to vector<1x128xf32>
    %c0_15 = arith.constant 0 : index
    %c1_16 = arith.constant 1 : index
    %c0_17 = arith.constant 0 : index
    %21 = vector.load %arg6[%c0_15, %c1_16, %c0_17] : memref<2x10x128xf32, #tpu.memory_space<vmem>>, vector<1x1x128xf32>
    %22 = vector.shape_cast %21 : vector<1x1x128xf32> to vector<1x128xf32>
    %23 = arith.addf %22, %20 : vector<1x128xf32>
    %c0_18 = arith.constant 0 : index
    %c1_19 = arith.constant 1 : index
    %c0_20 = arith.constant 0 : index
    %24 = vector.load %arg6[%c0_18, %c1_19, %c0_20] : memref<2x10x128xf32, #tpu.memory_space<vmem>>, vector<1x1x128xf32>
    %25 = vector.shape_cast %24 : vector<1x1x128xf32> to vector<1x128xf32>
    %26 = vector.shape_cast %23 : vector<1x128xf32> to vector<1x1x128xf32>
    tpu.vector_store %arg6[%c0_18, %c1_19, %c0_20], %26 {strides = array<i32>} : memref<2x10x128xf32, #tpu.memory_space<vmem>>, vector<1x1x128xf32>,
    %c2 = arith.constant 2 : index
    %c0_21 = arith.constant 0 : index
    %c0_22 = arith.constant 0 : index
    %27 = vector.load %arg3[%c2, %c0_21, %c0_22] : memref<10x384x128xf32, #tpu.memory_space<vmem>>, vector<1x384x128xf32>
    %28 = vector.shape_cast %27 : vector<1x384x128xf32> to vector<384x128xf32>
    %29 = arith.mulf %4, %28 : vector<384x128xf32>
    %cst_23 = arith.constant dense<0.000000e+00> : vector<128xf32>
    %30 = vector.multi_reduction <add>, %29, %cst_23 [0] : vector<384x128xf32> to vector<128xf32>
    %31 = vector.shape_cast %30 : vector<128xf32> to vector<1x128xf32>
    %c0_24 = arith.constant 0 : index
    %c2_25 = arith.constant 2 : index
    %c0_26 = arith.constant 0 : index
    %32 = vector.load %arg6[%c0_24, %c2_25, %c0_26] : memref<2x10x128xf32, #tpu.memory_space<vmem>>, vector<1x1x128xf32>
    %33 = vector.shape_cast %32 : vector<1x1x128xf32> to vector<1x128xf32>
    %34 = arith.addf %33, %31 : vector<1x128xf32>
    %c0_27 = arith.constant 0 : index
    %c2_28 = arith.constant 2 : index
    %c0_29 = arith.constant 0 : index
    %35 = vector.load %arg6[%c0_27, %c2_28, %c0_29] : memref<2x10x128xf32, #tpu.memory_space<vmem>>, vector<1x1x128xf32>
    %36 = vector.shape_cast %35 : vector<1x1x128xf32> to vector<1x128xf32>
    %37 = vector.shape_cast %34 : vector<1x128xf32> to vector<1x1x128xf32>
    tpu.vector_store %arg6[%c0_27, %c2_28, %c0_29], %37 {strides = array<i32>} : memref<2x10x128xf32, #tpu.memory_space<vmem>>, vector<1x1x128xf32>,
    %c3 = arith.constant 3 : index
    %c0_30 = arith.constant 0 : index
    %c0_31 = arith.constant 0 : index
    %38 = vector.load %arg3[%c3, %c0_30, %c0_31] : memref<10x384x128xf32, #tpu.memory_space<vmem>>, vector<1x384x128xf32>
    %39 = vector.shape_cast %38 : vector<1x384x128xf32> to vector<384x128xf32>
    %40 = arith.mulf %4, %39 : vector<384x128xf32>
    %cst_32 = arith.constant dense<0.000000e+00> : vector<128xf32>
    %41 = vector.multi_reduction <add>, %40, %cst_32 [0] : vector<384x128xf32> to vector<128xf32>
    %42 = vector.shape_cast %41 : vector<128xf32> to vector<1x128xf32>
    %c0_33 = arith.constant 0 : index
    %c3_34 = arith.constant 3 : index
    %c0_35 = arith.constant 0 : index
    %43 = vector.load %arg6[%c0_33, %c3_34, %c0_35] : memref<2x10x128xf32, #tpu.memory_space<vmem>>, vector<1x1x128xf32>
    %44 = vector.shape_cast %43 : vector<1x1x128xf32> to vector<1x128xf32>
    %45 = arith.addf %44, %42 : vector<1x128xf32>
    %c0_36 = arith.constant 0 : index
    %c3_37 = arith.constant 3 : index
    %c0_38 = arith.constant 0 : index
    %46 = vector.load %arg6[%c0_36, %c3_37, %c0_38] : memref<2x10x128xf32, #tpu.memory_space<vmem>>, vector<1x1x128xf32>
    %47 = vector.shape_cast %46 : vector<1x1x128xf32> to vector<1x128xf32>
    %48 = vector.shape_cast %45 : vector<1x128xf32> to vector<1x1x128xf32>
    tpu.vector_store %arg6[%c0_36, %c3_37, %c0_38], %48 {strides = array<i32>} : memref<2x10x128xf32, #tpu.memory_space<vmem>>, vector<1x1x128xf32>,
    %c4 = arith.constant 4 : index
    %c0_39 = arith.constant 0 : index
    %c0_40 = arith.constant 0 : index
    %49 = vector.load %arg3[%c4, %c0_39, %c0_40] : memref<10x384x128xf32, #tpu.memory_space<vmem>>, vector<1x384x128xf32>
    %50 = vector.shape_cast %49 : vector<1x384x128xf32> to vector<384x128xf32>
    %51 = arith.mulf %4, %50 : vector<384x128xf32>
    %cst_41 = arith.constant dense<0.000000e+00> : vector<128xf32>
    %52 = vector.multi_reduction <add>, %51, %cst_41 [0] : vector<384x128xf32> to vector<128xf32>
    %53 = vector.shape_cast %52 : vector<128xf32> to vector<1x128xf32>
    %c0_42 = arith.constant 0 : index
    %c4_43 = arith.constant 4 : index
    %c0_44 = arith.constant 0 : index
    %54 = vector.load %arg6[%c0_42, %c4_43, %c0_44] : memref<2x10x128xf32, #tpu.memory_space<vmem>>, vector<1x1x128xf32>
    %55 = vector.shape_cast %54 : vector<1x1x128xf32> to vector<1x128xf32>
    %56 = arith.addf %55, %53 : vector<1x128xf32>
    %c0_45 = arith.constant 0 : index
    %c4_46 = arith.constant 4 : index
    %c0_47 = arith.constant 0 : index
    %57 = vector.load %arg6[%c0_45, %c4_46, %c0_47] : memref<2x10x128xf32, #tpu.memory_space<vmem>>, vector<1x1x128xf32>
    %58 = vector.shape_cast %57 : vector<1x1x128xf32> to vector<1x128xf32>
    %59 = vector.shape_cast %56 : vector<1x128xf32> to vector<1x1x128xf32>
    tpu.vector_store %arg6[%c0_45, %c4_46, %c0_47], %59 {strides = array<i32>} : memref<2x10x128xf32, #tpu.memory_space<vmem>>, vector<1x1x128xf32>,
    %c5 = arith.constant 5 : index
    %c0_48 = arith.constant 0 : index
    %c0_49 = arith.constant 0 : index
    %60 = vector.load %arg3[%c5, %c0_48, %c0_49] : memref<10x384x128xf32, #tpu.memory_space<vmem>>, vector<1x384x128xf32>
    %61 = vector.shape_cast %60 : vector<1x384x128xf32> to vector<384x128xf32>
    %62 = arith.mulf %4, %61 : vector<384x128xf32>
    %cst_50 = arith.constant dense<0.000000e+00> : vector<128xf32>
    %63 = vector.multi_reduction <add>, %62, %cst_50 [0] : vector<384x128xf32> to vector<128xf32>
    %64 = vector.shape_cast %63 : vector<128xf32> to vector<1x128xf32>
    %c0_51 = arith.constant 0 : index
    %c5_52 = arith.constant 5 : index
    %c0_53 = arith.constant 0 : index
    %65 = vector.load %arg6[%c0_51, %c5_52, %c0_53] : memref<2x10x128xf32, #tpu.memory_space<vmem>>, vector<1x1x128xf32>
    %66 = vector.shape_cast %65 : vector<1x1x128xf32> to vector<1x128xf32>
    %67 = arith.addf %66, %64 : vector<1x128xf32>
    %c0_54 = arith.constant 0 : index
    %c5_55 = arith.constant 5 : index
    %c0_56 = arith.constant 0 : index
    %68 = vector.load %arg6[%c0_54, %c5_55, %c0_56] : memref<2x10x128xf32, #tpu.memory_space<vmem>>, vector<1x1x128xf32>
    %69 = vector.shape_cast %68 : vector<1x1x128xf32> to vector<1x128xf32>
    %70 = vector.shape_cast %67 : vector<1x128xf32> to vector<1x1x128xf32>
    tpu.vector_store %arg6[%c0_54, %c5_55, %c0_56], %70 {strides = array<i32>} : memref<2x10x128xf32, #tpu.memory_space<vmem>>, vector<1x1x128xf32>,
    %c6 = arith.constant 6 : index
    %c0_57 = arith.constant 0 : index
    %c0_58 = arith.constant 0 : index
    %71 = vector.load %arg3[%c6, %c0_57, %c0_58] : memref<10x384x128xf32, #tpu.memory_space<vmem>>, vector<1x384x128xf32>
    %72 = vector.shape_cast %71 : vector<1x384x128xf32> to vector<384x128xf32>
    %73 = arith.mulf %4, %72 : vector<384x128xf32>
    %cst_59 = arith.constant dense<0.000000e+00> : vector<128xf32>
    %74 = vector.multi_reduction <add>, %73, %cst_59 [0] : vector<384x128xf32> to vector<128xf32>
    %75 = vector.shape_cast %74 : vector<128xf32> to vector<1x128xf32>
    %c0_60 = arith.constant 0 : index
    %c6_61 = arith.constant 6 : index
    %c0_62 = arith.constant 0 : index
    %76 = vector.load %arg6[%c0_60, %c6_61, %c0_62] : memref<2x10x128xf32, #tpu.memory_space<vmem>>, vector<1x1x128xf32>
    %77 = vector.shape_cast %76 : vector<1x1x128xf32> to vector<1x128xf32>
    %78 = arith.addf %77, %75 : vector<1x128xf32>
    %c0_63 = arith.constant 0 : index
    %c6_64 = arith.constant 6 : index
    %c0_65 = arith.constant 0 : index
    %79 = vector.load %arg6[%c0_63, %c6_64, %c0_65] : memref<2x10x128xf32, #tpu.memory_space<vmem>>, vector<1x1x128xf32>
    %80 = vector.shape_cast %79 : vector<1x1x128xf32> to vector<1x128xf32>
    %81 = vector.shape_cast %78 : vector<1x128xf32> to vector<1x1x128xf32>
    tpu.vector_store %arg6[%c0_63, %c6_64, %c0_65], %81 {strides = array<i32>} : memref<2x10x128xf32, #tpu.memory_space<vmem>>, vector<1x1x128xf32>,
    %c7 = arith.constant 7 : index
    %c0_66 = arith.constant 0 : index
    %c0_67 = arith.constant 0 : index
    %82 = vector.load %arg3[%c7, %c0_66, %c0_67] : memref<10x384x128xf32, #tpu.memory_space<vmem>>, vector<1x384x128xf32>
    %83 = vector.shape_cast %82 : vector<1x384x128xf32> to vector<384x128xf32>
    %84 = arith.mulf %4, %83 : vector<384x128xf32>
    %cst_68 = arith.constant dense<0.000000e+00> : vector<128xf32>
    %85 = vector.multi_reduction <add>, %84, %cst_68 [0] : vector<384x128xf32> to vector<128xf32>
    %86 = vector.shape_cast %85 : vector<128xf32> to vector<1x128xf32>
    %c0_69 = arith.constant 0 : index
    %c7_70 = arith.constant 7 : index
    %c0_71 = arith.constant 0 : index
    %87 = vector.load %arg6[%c0_69, %c7_70, %c0_71] : memref<2x10x128xf32, #tpu.memory_space<vmem>>, vector<1x1x128xf32>
    %88 = vector.shape_cast %87 : vector<1x1x128xf32> to vector<1x128xf32>
    %89 = arith.addf %88, %86 : vector<1x128xf32>
    %c0_72 = arith.constant 0 : index
    %c7_73 = arith.constant 7 : index
    %c0_74 = arith.constant 0 : index
    %90 = vector.load %arg6[%c0_72, %c7_73, %c0_74] : memref<2x10x128xf32, #tpu.memory_space<vmem>>, vector<1x1x128xf32>
    %91 = vector.shape_cast %90 : vector<1x1x128xf32> to vector<1x128xf32>
    %92 = vector.shape_cast %89 : vector<1x128xf32> to vector<1x1x128xf32>
    tpu.vector_store %arg6[%c0_72, %c7_73, %c0_74], %92 {strides = array<i32>} : memref<2x10x128xf32, #tpu.memory_space<vmem>>, vector<1x1x128xf32>,
    %c8 = arith.constant 8 : index
    %c0_75 = arith.constant 0 : index
    %c0_76 = arith.constant 0 : index
    %93 = vector.load %arg3[%c8, %c0_75, %c0_76] : memref<10x384x128xf32, #tpu.memory_space<vmem>>, vector<1x384x128xf32>
    %94 = vector.shape_cast %93 : vector<1x384x128xf32> to vector<384x128xf32>
    %95 = arith.mulf %4, %94 : vector<384x128xf32>
    %cst_77 = arith.constant dense<0.000000e+00> : vector<128xf32>
    %96 = vector.multi_reduction <add>, %95, %cst_77 [0] : vector<384x128xf32> to vector<128xf32>
    %97 = vector.shape_cast %96 : vector<128xf32> to vector<1x128xf32>
    %c0_78 = arith.constant 0 : index
    %c8_79 = arith.constant 8 : index
    %c0_80 = arith.constant 0 : index
    %98 = vector.load %arg6[%c0_78, %c8_79, %c0_80] : memref<2x10x128xf32, #tpu.memory_space<vmem>>, vector<1x1x128xf32>
    %99 = vector.shape_cast %98 : vector<1x1x128xf32> to vector<1x128xf32>
    %100 = arith.addf %99, %97 : vector<1x128xf32>
    %c0_81 = arith.constant 0 : index
    %c8_82 = arith.constant 8 : index
    %c0_83 = arith.constant 0 : index
    %101 = vector.load %arg6[%c0_81, %c8_82, %c0_83] : memref<2x10x128xf32, #tpu.memory_space<vmem>>, vector<1x1x128xf32>
    %102 = vector.shape_cast %101 : vector<1x1x128xf32> to vector<1x128xf32>
    %103 = vector.shape_cast %100 : vector<1x128xf32> to vector<1x1x128xf32>
    tpu.vector_store %arg6[%c0_81, %c8_82, %c0_83], %103 {strides = array<i32>} : memref<2x10x128xf32, #tpu.memory_space<vmem>>, vector<1x1x128xf32>,
    %c9 = arith.constant 9 : index
    %c0_84 = arith.constant 0 : index
    %c0_85 = arith.constant 0 : index
    %104 = vector.load %arg3[%c9, %c0_84, %c0_85] : memref<10x384x128xf32, #tpu.memory_space<vmem>>, vector<1x384x128xf32>
    %105 = vector.shape_cast %104 : vector<1x384x128xf32> to vector<384x128xf32>
    %106 = arith.mulf %4, %105 : vector<384x128xf32>
    %cst_86 = arith.constant dense<0.000000e+00> : vector<128xf32>
    %107 = vector.multi_reduction <add>, %106, %cst_86 [0] : vector<384x128xf32> to vector<128xf32>
    %108 = vector.shape_cast %107 : vector<128xf32> to vector<1x128xf32>
    %c0_87 = arith.constant 0 : index
    %c9_88 = arith.constant 9 : index
    %c0_89 = arith.constant 0 : index
    %109 = vector.load %arg6[%c0_87, %c9_88, %c0_89] : memref<2x10x128xf32, #tpu.memory_space<vmem>>, vector<1x1x128xf32>
    %110 = vector.shape_cast %109 : vector<1x1x128xf32> to vector<1x128xf32>
    %111 = arith.addf %110, %108 : vector<1x128xf32>
    %c0_90 = arith.constant 0 : index
    %c9_91 = arith.constant 9 : index
    %c0_92 = arith.constant 0 : index
    %112 = vector.load %arg6[%c0_90, %c9_91, %c0_92] : memref<2x10x128xf32, #tpu.memory_space<vmem>>, vector<1x1x128xf32>
    %113 = vector.shape_cast %112 : vector<1x1x128xf32> to vector<1x128xf32>
    %114 = vector.shape_cast %111 : vector<1x128xf32> to vector<1x1x128xf32>
    tpu.vector_store %arg6[%c0_90, %c9_91, %c0_92], %114 {strides = array<i32>} : memref<2x10x128xf32, #tpu.memory_space<vmem>>, vector<1x1x128xf32>,
    %c1_93 = arith.constant 1 : index
    %c0_94 = arith.constant 0 : index
    %c0_95 = arith.constant 0 : index
    %115 = vector.load %arg2[%c1_93, %c0_94, %c0_95] : memref<2x384x128xf32, #tpu.memory_space<vmem>>, vector<1x384x128xf32>
    %116 = vector.shape_cast %115 : vector<1x384x128xf32> to vector<384x128xf32>
    %c0_96 = arith.constant 0 : index
    %c0_97 = arith.constant 0 : index
    %c0_98 = arith.constant 0 : index
    %117 = vector.load %arg3[%c0_96, %c0_97, %c0_98] : memref<10x384x128xf32, #tpu.memory_space<vmem>>, vector<1x384x128xf32>
    %118 = vector.shape_cast %117 : vector<1x384x128xf32> to vector<384x128xf32>
    %119 = arith.mulf %116, %118 : vector<384x128xf32>
    %cst_99 = arith.constant dense<0.000000e+00> : vector<128xf32>
    %120 = vector.multi_reduction <add>, %119, %cst_99 [0] : vector<384x128xf32> to vector<128xf32>
    %121 = vector.shape_cast %120 : vector<128xf32> to vector<1x128xf32>
    %c1_100 = arith.constant 1 : index
    %c0_101 = arith.constant 0 : index
    %c0_102 = arith.constant 0 : index
    %122 = vector.load %arg6[%c1_100, %c0_101, %c0_102] : memref<2x10x128xf32, #tpu.memory_space<vmem>>, vector<1x1x128xf32>
    %123 = vector.shape_cast %122 : vector<1x1x128xf32> to vector<1x128xf32>
    %124 = arith.addf %123, %121 : vector<1x128xf32>
    %c1_103 = arith.constant 1 : index
    %c0_104 = arith.constant 0 : index
    %c0_105 = arith.constant 0 : index
    %125 = vector.load %arg6[%c1_103, %c0_104, %c0_105] : memref<2x10x128xf32, #tpu.memory_space<vmem>>, vector<1x1x128xf32>
    %126 = vector.shape_cast %125 : vector<1x1x128xf32> to vector<1x128xf32>
    %127 = vector.shape_cast %124 : vector<1x128xf32> to vector<1x1x128xf32>
    tpu.vector_store %arg6[%c1_103, %c0_104, %c0_105], %127 {strides = array<i32>} : memref<2x10x128xf32, #tpu.memory_space<vmem>>, vector<1x1x128xf32>,
    %c1_106 = arith.constant 1 : index
    %c0_107 = arith.constant 0 : index
    %c0_108 = arith.constant 0 : index
    %128 = vector.load %arg3[%c1_106, %c0_107, %c0_108] : memref<10x384x128xf32, #tpu.memory_space<vmem>>, vector<1x384x128xf32>
    %129 = vector.shape_cast %128 : vector<1x384x128xf32> to vector<384x128xf32>
    %130 = arith.mulf %116, %129 : vector<384x128xf32>
    %cst_109 = arith.constant dense<0.000000e+00> : vector<128xf32>
    %131 = vector.multi_reduction <add>, %130, %cst_109 [0] : vector<384x128xf32> to vector<128xf32>
    %132 = vector.shape_cast %131 : vector<128xf32> to vector<1x128xf32>
    %c1_110 = arith.constant 1 : index
    %c1_111 = arith.constant 1 : index
    %c0_112 = arith.constant 0 : index
    %133 = vector.load %arg6[%c1_110, %c1_111, %c0_112] : memref<2x10x128xf32, #tpu.memory_space<vmem>>, vector<1x1x128xf32>
    %134 = vector.shape_cast %133 : vector<1x1x128xf32> to vector<1x128xf32>
    %135 = arith.addf %134, %132 : vector<1x128xf32>
    %c1_113 = arith.constant 1 : index
    %c1_114 = arith.constant 1 : index
    %c0_115 = arith.constant 0 : index
    %136 = vector.load %arg6[%c1_113, %c1_114, %c0_115] : memref<2x10x128xf32, #tpu.memory_space<vmem>>, vector<1x1x128xf32>
    %137 = vector.shape_cast %136 : vector<1x1x128xf32> to vector<1x128xf32>
    %138 = vector.shape_cast %135 : vector<1x128xf32> to vector<1x1x128xf32>
    tpu.vector_store %arg6[%c1_113, %c1_114, %c0_115], %138 {strides = array<i32>} : memref<2x10x128xf32, #tpu.memory_space<vmem>>, vector<1x1x128xf32>,
    %c2_116 = arith.constant 2 : index
    %c0_117 = arith.constant 0 : index
    %c0_118 = arith.constant 0 : index
    %139 = vector.load %arg3[%c2_116, %c0_117, %c0_118] : memref<10x384x128xf32, #tpu.memory_space<vmem>>, vector<1x384x128xf32>
    %140 = vector.shape_cast %139 : vector<1x384x128xf32> to vector<384x128xf32>
    %141 = arith.mulf %116, %140 : vector<384x128xf32>
    %cst_119 = arith.constant dense<0.000000e+00> : vector<128xf32>
    %142 = vector.multi_reduction <add>, %141, %cst_119 [0] : vector<384x128xf32> to vector<128xf32>
    %143 = vector.shape_cast %142 : vector<128xf32> to vector<1x128xf32>
    %c1_120 = arith.constant 1 : index
    %c2_121 = arith.constant 2 : index
    %c0_122 = arith.constant 0 : index
    %144 = vector.load %arg6[%c1_120, %c2_121, %c0_122] : memref<2x10x128xf32, #tpu.memory_space<vmem>>, vector<1x1x128xf32>
    %145 = vector.shape_cast %144 : vector<1x1x128xf32> to vector<1x128xf32>
    %146 = arith.addf %145, %143 : vector<1x128xf32>
    %c1_123 = arith.constant 1 : index
    %c2_124 = arith.constant 2 : index
    %c0_125 = arith.constant 0 : index
    %147 = vector.load %arg6[%c1_123, %c2_124, %c0_125] : memref<2x10x128xf32, #tpu.memory_space<vmem>>, vector<1x1x128xf32>
    %148 = vector.shape_cast %147 : vector<1x1x128xf32> to vector<1x128xf32>
    %149 = vector.shape_cast %146 : vector<1x128xf32> to vector<1x1x128xf32>
    tpu.vector_store %arg6[%c1_123, %c2_124, %c0_125], %149 {strides = array<i32>} : memref<2x10x128xf32, #tpu.memory_space<vmem>>, vector<1x1x128xf32>,
    %c3_126 = arith.constant 3 : index
    %c0_127 = arith.constant 0 : index
    %c0_128 = arith.constant 0 : index
    %150 = vector.load %arg3[%c3_126, %c0_127, %c0_128] : memref<10x384x128xf32, #tpu.memory_space<vmem>>, vector<1x384x128xf32>
    %151 = vector.shape_cast %150 : vector<1x384x128xf32> to vector<384x128xf32>
    %152 = arith.mulf %116, %151 : vector<384x128xf32>
    %cst_129 = arith.constant dense<0.000000e+00> : vector<128xf32>
    %153 = vector.multi_reduction <add>, %152, %cst_129 [0] : vector<384x128xf32> to vector<128xf32>
    %154 = vector.shape_cast %153 : vector<128xf32> to vector<1x128xf32>
    %c1_130 = arith.constant 1 : index
    %c3_131 = arith.constant 3 : index
    %c0_132 = arith.constant 0 : index
    %155 = vector.load %arg6[%c1_130, %c3_131, %c0_132] : memref<2x10x128xf32, #tpu.memory_space<vmem>>, vector<1x1x128xf32>
    %156 = vector.shape_cast %155 : vector<1x1x128xf32> to vector<1x128xf32>
    %157 = arith.addf %156, %154 : vector<1x128xf32>
    %c1_133 = arith.constant 1 : index
    %c3_134 = arith.constant 3 : index
    %c0_135 = arith.constant 0 : index
    %158 = vector.load %arg6[%c1_133, %c3_134, %c0_135] : memref<2x10x128xf32, #tpu.memory_space<vmem>>, vector<1x1x128xf32>
    %159 = vector.shape_cast %158 : vector<1x1x128xf32> to vector<1x128xf32>
    %160 = vector.shape_cast %157 : vector<1x128xf32> to vector<1x1x128xf32>
    tpu.vector_store %arg6[%c1_133, %c3_134, %c0_135], %160 {strides = array<i32>} : memref<2x10x128xf32, #tpu.memory_space<vmem>>, vector<1x1x128xf32>,
    %c4_136 = arith.constant 4 : index
    %c0_137 = arith.constant 0 : index
    %c0_138 = arith.constant 0 : index
    %161 = vector.load %arg3[%c4_136, %c0_137, %c0_138] : memref<10x384x128xf32, #tpu.memory_space<vmem>>, vector<1x384x128xf32>
    %162 = vector.shape_cast %161 : vector<1x384x128xf32> to vector<384x128xf32>
    %163 = arith.mulf %116, %162 : vector<384x128xf32>
    %cst_139 = arith.constant dense<0.000000e+00> : vector<128xf32>
    %164 = vector.multi_reduction <add>, %163, %cst_139 [0] : vector<384x128xf32> to vector<128xf32>
    %165 = vector.shape_cast %164 : vector<128xf32> to vector<1x128xf32>
    %c1_140 = arith.constant 1 : index
    %c4_141 = arith.constant 4 : index
    %c0_142 = arith.constant 0 : index
    %166 = vector.load %arg6[%c1_140, %c4_141, %c0_142] : memref<2x10x128xf32, #tpu.memory_space<vmem>>, vector<1x1x128xf32>
    %167 = vector.shape_cast %166 : vector<1x1x128xf32> to vector<1x128xf32>
    %168 = arith.addf %167, %165 : vector<1x128xf32>
    %c1_143 = arith.constant 1 : index
    %c4_144 = arith.constant 4 : index
    %c0_145 = arith.constant 0 : index
    %169 = vector.load %arg6[%c1_143, %c4_144, %c0_145] : memref<2x10x128xf32, #tpu.memory_space<vmem>>, vector<1x1x128xf32>
    %170 = vector.shape_cast %169 : vector<1x1x128xf32> to vector<1x128xf32>
    %171 = vector.shape_cast %168 : vector<1x128xf32> to vector<1x1x128xf32>
    tpu.vector_store %arg6[%c1_143, %c4_144, %c0_145], %171 {strides = array<i32>} : memref<2x10x128xf32, #tpu.memory_space<vmem>>, vector<1x1x128xf32>,
    %c5_146 = arith.constant 5 : index
    %c0_147 = arith.constant 0 : index
    %c0_148 = arith.constant 0 : index
    %172 = vector.load %arg3[%c5_146, %c0_147, %c0_148] : memref<10x384x128xf32, #tpu.memory_space<vmem>>, vector<1x384x128xf32>
    %173 = vector.shape_cast %172 : vector<1x384x128xf32> to vector<384x128xf32>
    %174 = arith.mulf %116, %173 : vector<384x128xf32>
    %cst_149 = arith.constant dense<0.000000e+00> : vector<128xf32>
    %175 = vector.multi_reduction <add>, %174, %cst_149 [0] : vector<384x128xf32> to vector<128xf32>
    %176 = vector.shape_cast %175 : vector<128xf32> to vector<1x128xf32>
    %c1_150 = arith.constant 1 : index
    %c5_151 = arith.constant 5 : index
    %c0_152 = arith.constant 0 : index
    %177 = vector.load %arg6[%c1_150, %c5_151, %c0_152] : memref<2x10x128xf32, #tpu.memory_space<vmem>>, vector<1x1x128xf32>
    %178 = vector.shape_cast %177 : vector<1x1x128xf32> to vector<1x128xf32>
    %179 = arith.addf %178, %176 : vector<1x128xf32>
    %c1_153 = arith.constant 1 : index
    %c5_154 = arith.constant 5 : index
    %c0_155 = arith.constant 0 : index
    %180 = vector.load %arg6[%c1_153, %c5_154, %c0_155] : memref<2x10x128xf32, #tpu.memory_space<vmem>>, vector<1x1x128xf32>
    %181 = vector.shape_cast %180 : vector<1x1x128xf32> to vector<1x128xf32>
    %182 = vector.shape_cast %179 : vector<1x128xf32> to vector<1x1x128xf32>
    tpu.vector_store %arg6[%c1_153, %c5_154, %c0_155], %182 {strides = array<i32>} : memref<2x10x128xf32, #tpu.memory_space<vmem>>, vector<1x1x128xf32>,
    %c6_156 = arith.constant 6 : index
    %c0_157 = arith.constant 0 : index
    %c0_158 = arith.constant 0 : index
    %183 = vector.load %arg3[%c6_156, %c0_157, %c0_158] : memref<10x384x128xf32, #tpu.memory_space<vmem>>, vector<1x384x128xf32>
    %184 = vector.shape_cast %183 : vector<1x384x128xf32> to vector<384x128xf32>
    %185 = arith.mulf %116, %184 : vector<384x128xf32>
    %cst_159 = arith.constant dense<0.000000e+00> : vector<128xf32>
    %186 = vector.multi_reduction <add>, %185, %cst_159 [0] : vector<384x128xf32> to vector<128xf32>
    %187 = vector.shape_cast %186 : vector<128xf32> to vector<1x128xf32>
    %c1_160 = arith.constant 1 : index
    %c6_161 = arith.constant 6 : index
    %c0_162 = arith.constant 0 : index
    %188 = vector.load %arg6[%c1_160, %c6_161, %c0_162] : memref<2x10x128xf32, #tpu.memory_space<vmem>>, vector<1x1x128xf32>
    %189 = vector.shape_cast %188 : vector<1x1x128xf32> to vector<1x128xf32>
    %190 = arith.addf %189, %187 : vector<1x128xf32>
    %c1_163 = arith.constant 1 : index
    %c6_164 = arith.constant 6 : index
    %c0_165 = arith.constant 0 : index
    %191 = vector.load %arg6[%c1_163, %c6_164, %c0_165] : memref<2x10x128xf32, #tpu.memory_space<vmem>>, vector<1x1x128xf32>
    %192 = vector.shape_cast %191 : vector<1x1x128xf32> to vector<1x128xf32>
    %193 = vector.shape_cast %190 : vector<1x128xf32> to vector<1x1x128xf32>
    tpu.vector_store %arg6[%c1_163, %c6_164, %c0_165], %193 {strides = array<i32>} : memref<2x10x128xf32, #tpu.memory_space<vmem>>, vector<1x1x128xf32>,
    %c7_166 = arith.constant 7 : index
    %c0_167 = arith.constant 0 : index
    %c0_168 = arith.constant 0 : index
    %194 = vector.load %arg3[%c7_166, %c0_167, %c0_168] : memref<10x384x128xf32, #tpu.memory_space<vmem>>, vector<1x384x128xf32>
    %195 = vector.shape_cast %194 : vector<1x384x128xf32> to vector<384x128xf32>
    %196 = arith.mulf %116, %195 : vector<384x128xf32>
    %cst_169 = arith.constant dense<0.000000e+00> : vector<128xf32>
    %197 = vector.multi_reduction <add>, %196, %cst_169 [0] : vector<384x128xf32> to vector<128xf32>
    %198 = vector.shape_cast %197 : vector<128xf32> to vector<1x128xf32>
    %c1_170 = arith.constant 1 : index
    %c7_171 = arith.constant 7 : index
    %c0_172 = arith.constant 0 : index
    %199 = vector.load %arg6[%c1_170, %c7_171, %c0_172] : memref<2x10x128xf32, #tpu.memory_space<vmem>>, vector<1x1x128xf32>
    %200 = vector.shape_cast %199 : vector<1x1x128xf32> to vector<1x128xf32>
    %201 = arith.addf %200, %198 : vector<1x128xf32>
    %c1_173 = arith.constant 1 : index
    %c7_174 = arith.constant 7 : index
    %c0_175 = arith.constant 0 : index
    %202 = vector.load %arg6[%c1_173, %c7_174, %c0_175] : memref<2x10x128xf32, #tpu.memory_space<vmem>>, vector<1x1x128xf32>
    %203 = vector.shape_cast %202 : vector<1x1x128xf32> to vector<1x128xf32>
    %204 = vector.shape_cast %201 : vector<1x128xf32> to vector<1x1x128xf32>
    tpu.vector_store %arg6[%c1_173, %c7_174, %c0_175], %204 {strides = array<i32>} : memref<2x10x128xf32, #tpu.memory_space<vmem>>, vector<1x1x128xf32>,
    %c8_176 = arith.constant 8 : index
    %c0_177 = arith.constant 0 : index
    %c0_178 = arith.constant 0 : index
    %205 = vector.load %arg3[%c8_176, %c0_177, %c0_178] : memref<10x384x128xf32, #tpu.memory_space<vmem>>, vector<1x384x128xf32>
    %206 = vector.shape_cast %205 : vector<1x384x128xf32> to vector<384x128xf32>
    %207 = arith.mulf %116, %206 : vector<384x128xf32>
    %cst_179 = arith.constant dense<0.000000e+00> : vector<128xf32>
    %208 = vector.multi_reduction <add>, %207, %cst_179 [0] : vector<384x128xf32> to vector<128xf32>
    %209 = vector.shape_cast %208 : vector<128xf32> to vector<1x128xf32>
    %c1_180 = arith.constant 1 : index
    %c8_181 = arith.constant 8 : index
    %c0_182 = arith.constant 0 : index
    %210 = vector.load %arg6[%c1_180, %c8_181, %c0_182] : memref<2x10x128xf32, #tpu.memory_space<vmem>>, vector<1x1x128xf32>
    %211 = vector.shape_cast %210 : vector<1x1x128xf32> to vector<1x128xf32>
    %212 = arith.addf %211, %209 : vector<1x128xf32>
    %c1_183 = arith.constant 1 : index
    %c8_184 = arith.constant 8 : index
    %c0_185 = arith.constant 0 : index
    %213 = vector.load %arg6[%c1_183, %c8_184, %c0_185] : memref<2x10x128xf32, #tpu.memory_space<vmem>>, vector<1x1x128xf32>
    %214 = vector.shape_cast %213 : vector<1x1x128xf32> to vector<1x128xf32>
    %215 = vector.shape_cast %212 : vector<1x128xf32> to vector<1x1x128xf32>
    tpu.vector_store %arg6[%c1_183, %c8_184, %c0_185], %215 {strides = array<i32>} : memref<2x10x128xf32, #tpu.memory_space<vmem>>, vector<1x1x128xf32>,
    %c9_186 = arith.constant 9 : index
    %c0_187 = arith.constant 0 : index
    %c0_188 = arith.constant 0 : index
    %216 = vector.load %arg3[%c9_186, %c0_187, %c0_188] : memref<10x384x128xf32, #tpu.memory_space<vmem>>, vector<1x384x128xf32>
    %217 = vector.shape_cast %216 : vector<1x384x128xf32> to vector<384x128xf32>
    %218 = arith.mulf %116, %217 : vector<384x128xf32>
    %cst_189 = arith.constant dense<0.000000e+00> : vector<128xf32>
    %219 = vector.multi_reduction <add>, %218, %cst_189 [0] : vector<384x128xf32> to vector<128xf32>
    %220 = vector.shape_cast %219 : vector<128xf32> to vector<1x128xf32>
    %c1_190 = arith.constant 1 : index
    %c9_191 = arith.constant 9 : index
    %c0_192 = arith.constant 0 : index
    %221 = vector.load %arg6[%c1_190, %c9_191, %c0_192] : memref<2x10x128xf32, #tpu.memory_space<vmem>>, vector<1x1x128xf32>
    %222 = vector.shape_cast %221 : vector<1x1x128xf32> to vector<1x128xf32>
    %223 = arith.addf %222, %220 : vector<1x128xf32>
    %c1_193 = arith.constant 1 : index
    %c9_194 = arith.constant 9 : index
    %c0_195 = arith.constant 0 : index
    %224 = vector.load %arg6[%c1_193, %c9_194, %c0_195] : memref<2x10x128xf32, #tpu.memory_space<vmem>>, vector<1x1x128xf32>
    %225 = vector.shape_cast %224 : vector<1x1x128xf32> to vector<1x128xf32>
    %226 = vector.shape_cast %223 : vector<1x128xf32> to vector<1x1x128xf32>
    tpu.vector_store %arg6[%c1_193, %c9_194, %c0_195], %226 {strides = array<i32>} : memref<2x10x128xf32, #tpu.memory_space<vmem>>, vector<1x1x128xf32>,
    %c3_i32 = arith.constant 3 : i32
    %227 = arith.cmpi eq, %arg1, %c3_i32 : i32
    %228 = arith.extui %227 : i1 to i32
    %c0_i32_196 = arith.constant 0 : i32
    %229 = arith.cmpi ne, %228, %c0_i32_196 : i32
    scf.if %229 {
      %c0_197 = arith.constant 0 : index
      %c0_198 = arith.constant 0 : index
      %c0_199 = arith.constant 0 : index
      %230 = vector.load %arg6[%c0_197, %c0_198, %c0_199] : memref<2x10x128xf32, #tpu.memory_space<vmem>>, vector<2x10x128xf32>
      %cst_200 = arith.constant dense<0.000000e+00> : vector<2x10xf32>
      %231 = vector.multi_reduction <add>, %230, %cst_200 [2] : vector<2x10x128xf32> to vector<2x10xf32>
      %c0_i32_201 = arith.constant 0 : i32
      %232 = arith.cmpi eq, %arg0, %c0_i32_201 : i32
      %cst_202 = arith.constant 1.000000e+00 : f32
      %cst_203 = arith.constant 0.000000e+00 : f32
      %233 = arith.select %232, %cst_202, %cst_203 : f32
      %c0_204 = arith.constant 0 : index
      %c0_205 = arith.constant 0 : index
      %234 = vector.load %arg4[%c0_204, %c0_205] : memref<1x10xf32, #tpu.memory_space<vmem>>, vector<1x10xf32>
      %235 = vector.broadcast %233 : f32 to vector<1x10xf32>
      %236 = arith.mulf %235, %234 : vector<1x10xf32>
      %237 = vector.broadcast %236 : vector<1x10xf32> to vector<2x10xf32>
      %238 = arith.addf %231, %237 : vector<2x10xf32>
      %c0_206 = arith.constant 0 : index
      %c0_207 = arith.constant 0 : index
      %c0_208 = arith.constant 0 : index
      %239 = vector.load %arg5[%c0_206, %c0_207, %c0_208] : memref<1x2x10xf32, #tpu.memory_space<vmem>>, vector<1x2x10xf32>
      %240 = vector.shape_cast %239 : vector<1x2x10xf32> to vector<2x10xf32>
      %241 = vector.shape_cast %238 : vector<2x10xf32> to vector<1x2x10xf32>
      tpu.vector_store %arg5[%c0_206, %c0_207, %c0_208], %241 {strides = array<i32>} : memref<1x2x10xf32, #tpu.memory_space<vmem>>, vector<1x2x10xf32>,
    } else {
    }
    return
  }
  func.func @transform_0(%arg0: i32, %arg1: i32) -> (i32, i32, i32) {
    %c4_i32 = arith.constant 4 : i32
    %0 = arith.muli %arg0, %c4_i32 : i32
    %1 = arith.addi %0, %arg1 : i32
    %c0_i32 = arith.constant 0 : i32
    %c0_i32_0 = arith.constant 0 : i32
    %c0_i32_1 = arith.constant 0 : i32
    return %c0_i32, %1, %c0_i32_0 : i32, i32, i32
  }
  func.func @transform_1(%arg0: i32, %arg1: i32) -> (i32, i32, i32) {
    %c4_i32 = arith.constant 4 : i32
    %0 = arith.muli %arg0, %c4_i32 : i32
    %1 = arith.addi %0, %arg1 : i32
    %c0_i32 = arith.constant 0 : i32
    %c0_i32_0 = arith.constant 0 : i32
    %c0_i32_1 = arith.constant 0 : i32
    return %c0_i32, %1, %c0_i32_0 : i32, i32, i32
  }
  func.func @transform_2(%arg0: i32, %arg1: i32) -> (i32, i32) {
    %c0_i32 = arith.constant 0 : i32
    %c0_i32_0 = arith.constant 0 : i32
    %c0_i32_1 = arith.constant 0 : i32
    return %c0_i32, %c0_i32_0 : i32, i32
  }
  func.func @transform_3(%arg0: i32, %arg1: i32) -> (i32, i32, i32) {
    %c0_i32 = arith.constant 0 : i32
    %c0_i32_0 = arith.constant 0 : i32
    %c0_i32_1 = arith.constant 0 : i32
    return %arg0, %c0_i32, %c0_i32_0 : i32, i32, i32
  }
}

</mosaic_0001>

<llo_original>
// kernel: tudui_forward.1
$region0: #{tudui_forward.1}
  #allocation0 [shape = 'u32[]', space=smem, size = 0x4, offset = 0x4, fixed_abs, tag = 'smem constant byte address 0x4 - core index']
  #allocation1 [shape = 'u32[144,128]{1,0:T(1,128)}', space=vmem, size = 0x12000, scoped, tag = 'internal scratch']
  #allocation2 [shape = 'f32[2,10,128]{2,1,0:T(8,128)}', space=vmem, size = 0x4000, scoped, tag = 'scratch operand']
  #allocation8 [shape = 's32[]', space=sflag, size = 0x4, offset = 0, fixed_abs, tag = 'sflag constant byte address 0x0 - dummy sync flag']
  %s0 = inlined_call_operand.vmem [shape: f32[2,1536,128], index: 0, kind: input, shape index: {}]
  %s1 = inlined_call_operand.hbm [shape: f32[10,1536,128], index: 1, kind: input, shape index: {}]
  %s2 = inlined_call_operand.vmem [shape: f32[1,10], index: 2, kind: input, shape index: {}]
  %s3 = inlined_call_operand.hbm [shape: f32[1,2,10], index: 3, kind: output, shape index: {}]
  %s4 = sld [smem:[#allocation0]]
  $region95: #{tudui_forward.1} parent=0
    _
  %s6 = ssub.s32 1, %s4
  %s7 = scalar_select 0, %s6, %s4
  $region1: #{tudui_forward.1} parent=0
    #allocation3 [shape = 'u8[786432]{0}', space=vmem, size = 0xc0000, scoped, tag = 'input window, operand 0']
    #allocation4 [shape = 'u8[3932160]{0}', space=vmem, size = 0x3c0000, scoped, tag = 'input window, operand 1']
    #allocation5 [shape = 's32[2]{0}', space=sflag, size = 0x8, scoped, tag = 'scoped memory for tudui_forward.1']
    #allocation6 [shape = 's32[2]{0}', space=sflag, size = 0x8, scoped, tag = 'scoped memory for tudui_forward.1']
    #allocation7 [shape = 'u8[1024]{0}', space=vmem, size = 0x400, scoped, tag = 'output window, operand 0, single buffered']
    %8 = vsyncpa [#allocation5], 0
    %s9 = scalar_lea.sflag [#allocation5], 1
    %10 = vsyncpa %s9, 0
    %11 = vsyncpa [#allocation6], 0
    loop: start=0, step=1, limit=6
    $region2: #{tudui_forward.1} parent=1 // loop_pre_header
      _
    $region3: #{tudui_forward.1} parent=1 // loop_header
      %s13 = sphi 0, %s17
      %p14 = scmp.ge.s32.totalorder %s13, 6
      %s20 = sphi 0, %s32
      %s21 = sphi 0, %s28
      %s22 = sphi 0, %s20
      %s23 = sphi 0, %s21
      %s24 = sphi 0, %s22
      %s25 = sphi 0, %s23
      %s39 = sphi 0, %s41
      %s42 = sphi 0, %s39
      %s43 = sphi 0, %s42
      %s59 = sphi 0, %s43
      %s69 = sphi 0, %s71
      %s72 = sphi 0, %s69
      %s73 = sphi 0, %s72
      %s89 = sphi 0, %s73
      %s93 = sphi 0, %s93
      %s95 = sphi 0, %s93
      %s96 = sphi 0, %s95
      %s110 = sphi 0, %s96
      %s116 = sphi 0, %s118
      %s119 = sphi 0, %s116
      %s120 = sphi 0, %s119
      %s136 = sphi 0, %s120
    $region4: #{tudui_forward.1} parent=1 // loop_header_branch
      %16 = sbr.rel (%p14) target = $region8
    $region5: #{tudui_forward.1} parent=1 // loop_body
      %s18 = ssub.s32 %s13, 1
      %s19 = ssub.s32 %s13, 2
      %s26 = sadd.s32 1, %s21
      %p27 = scmp.ge.s32.totalorder %s26, 4
      %s28 = scalar_select %p27, 0, %s26
      %s29 = sadd.s32 1, %s20
      %s30 = scalar_select %p27, %s29, %s20
      %p31 = scmp.ge.s32.totalorder %s30, 1
      %s32 = scalar_select %p31, 0, %s30
      %s33 = smul.u32 %s20, 4
      %s34 = sadd.s32 %s33, %s21
      %s35 = smul.u32 %s32, 4
      %s36 = sadd.s32 %s35, %s28
      %s37 = ssub.s32 %s34, %s36
      %p38 = scmp.eq.s32.totalorder %s37, 0
      %s40 = sadd.s32 %s39, 1
      %s41 = scalar_select %p38, %s39, %s40
      %p44 = pneg %p38
      %p45 = scmp.eq.s32.totalorder %s13, 3
      %p46 = por %p44, %p45
      %p47 = scmp.ne.s32.totalorder %s39, %s42
      %p48 = scmp.eq.s32.totalorder %s13, 0
      %p49 = por %p47, %p48
      %p50 = scmp.ne.s32.totalorder %s39, %s42
      %p51 = scmp.eq.s32.totalorder %s18, 3
      %p52 = por %p50, %p51
      %p53 = scmp.ne.s32.totalorder %s42, %s43
      %p54 = scmp.eq.s32.totalorder %s18, 0
      %p55 = por %p53, %p54
      %p56 = scmp.ne.s32.totalorder %s42, %s43
      %p57 = scmp.eq.s32.totalorder %s19, 3
      %p58 = por %p56, %p57
      %p60 = scmp.ne.s32.totalorder %s43, %s59
      %p61 = scmp.eq.s32.totalorder %s19, 0
      %p62 = por %p60, %p61
      %s63 = smul.u32 %s20, 4
      %s64 = sadd.s32 %s63, %s21
      %s65 = smul.u32 %s32, 4
      %s66 = sadd.s32 %s65, %s28
      %s67 = ssub.s32 %s64, %s66
      %p68 = scmp.eq.s32.totalorder %s67, 0
      %s70 = sadd.s32 %s69, 1
      %s71 = scalar_select %p68, %s69, %s70
      %p74 = pneg %p68
      %p75 = scmp.eq.s32.totalorder %s13, 3
      %p76 = por %p74, %p75
      %p77 = scmp.ne.s32.totalorder %s69, %s72
      %p78 = scmp.eq.s32.totalorder %s13, 0
      %p79 = por %p77, %p78
      %p80 = scmp.ne.s32.totalorder %s69, %s72
      %p81 = scmp.eq.s32.totalorder %s18, 3
      %p82 = por %p80, %p81
      %p83 = scmp.ne.s32.totalorder %s72, %s73
      %p84 = scmp.eq.s32.totalorder %s18, 0
      %p85 = por %p83, %p84
      %p86 = scmp.ne.s32.totalorder %s72, %s73
      %p87 = scmp.eq.s32.totalorder %s19, 3
      %p88 = por %p86, %p87
      %p90 = scmp.ne.s32.totalorder %s73, %s89
      %p91 = scmp.eq.s32.totalorder %s19, 0
      %p92 = por %p90, %p91
      %s94 = sadd.s32 %s93, 1
      %p97 = scmp.eq.s32.totalorder %s13, 3
      %p98 = scmp.ne.s32.totalorder %s93, %s95
      %p99 = scmp.eq.s32.totalorder %s13, 0
      %p100 = por %p98, %p99
      %p101 = scmp.ne.s32.totalorder %s93, %s95
      %p102 = scmp.eq.s32.totalorder %s18, 3
      %p103 = por %p101, %p102
      %p104 = scmp.ne.s32.totalorder %s95, %s96
      %p105 = scmp.eq.s32.totalorder %s18, 0
      %p106 = por %p104, %p105
      %p107 = scmp.ne.s32.totalorder %s95, %s96
      %p108 = scmp.eq.s32.totalorder %s19, 3
      %p109 = por %p107, %p108
      %p111 = scmp.ne.s32.totalorder %s96, %s110
      %p112 = scmp.eq.s32.totalorder %s19, 0
      %p113 = por %p111, %p112
      %s114 = ssub.s32 %s20, %s32
      %p115 = scmp.eq.s32.totalorder %s114, 0
      %s117 = sadd.s32 %s116, 1
      %s118 = scalar_select %p115, %s116, %s117
      %p121 = pneg %p115
      %p122 = scmp.eq.s32.totalorder %s13, 3
      %p123 = por %p121, %p122
      %p124 = scmp.ne.s32.totalorder %s116, %s119
      %p125 = scmp.eq.s32.totalorder %s13, 0
      %p126 = por %p124, %p125
      %p127 = scmp.ne.s32.totalorder %s116, %s119
      %p128 = scmp.eq.s32.totalorder %s18, 3
      %p129 = por %p127, %p128
      %p130 = scmp.ne.s32.totalorder %s119, %s120
      %p131 = scmp.eq.s32.totalorder %s18, 0
      %p132 = por %p130, %p131
      %p133 = scmp.ne.s32.totalorder %s119, %s120
      %p134 = scmp.eq.s32.totalorder %s19, 3
      %p135 = por %p133, %p134
      %p137 = scmp.ne.s32.totalorder %s120, %s136
      %p138 = scmp.eq.s32.totalorder %s19, 0
      %p139 = por %p137, %p138
      %p140 = scmp.le.s32.totalorder 1, %s13
      %p141 = scmp.lt.s32.totalorder %s13, 5
      %p142 = pnand %p140, %p141
      %p143 = pneg %p142
      // Predicated region
      $region9: #{tudui_forward.1} parent=5 // pred_check
        _
      $region10: #{tudui_forward.1} parent=5 // pred_check_branch
        %145 = sbr.rel (%p142) target = $region12
      $region11: #{tudui_forward.1} parent=5 // pred_region
        %s146 = ssub.s32 %s13, 1
        // Predicated region
        $region13: #{tudui_forward.1} parent=11 // pred_check
          %p147 = pneg %p106
        $region14: #{tudui_forward.1} parent=11 // pred_check_branch
          %149 = sbr.rel (%p147) target = $region16
        $region15: #{tudui_forward.1} parent=11 // pred_region
          _
        $region16: #{tudui_forward.1} parent=11 // pred_fallthru
          _
      $region12: #{tudui_forward.1} parent=5 // pred_fallthru
        _
      %p150 = scmp.lt.s32.totalorder %s13, 4
      // Predicated region
      $region17: #{tudui_forward.1} parent=5 // pred_check
        %p151 = pneg %p150
      $region18: #{tudui_forward.1} parent=5 // pred_check_branch
        %153 = sbr.rel (%p151) target = $region20
      $region19: #{tudui_forward.1} parent=5 // pred_region
        // Predicated region
        $region21: #{tudui_forward.1} parent=19 // pred_check
          %p154 = pneg %p49
        $region22: #{tudui_forward.1} parent=19 // pred_check_branch
          %156 = sbr.rel (%p154) target = $region24
        $region23: #{tudui_forward.1} parent=19 // pred_region
          %s157 = sand.u32 %s39, 1
          %s158 = sand.u32 %s39, 1
          %s159 = smul.addr %s158, 768
          %s160 = scalar_lea.vmem [#allocation3], %s159
          %s161 = smul.u32 %s20, 4
          %s162 = sadd.s32 %s161, %s21
          %s163 = smul.u32 48, %s162
          %s164 = smul.addr %s163, 8
          %s165 = scalar_lea.vmem %s0, %s164
          // Predicated region
          $region25: #{tudui_forward.1} parent=23 // pred_check
            _
          $region26: #{tudui_forward.1} parent=23 // pred_check_branch
            %167 = sbr.rel (0) target = $region28
          $region27: #{tudui_forward.1} parent=23 // pred_region
            // Predicated region
            $region29: #{tudui_forward.1} parent=27 // pred_check
              _
            $region30: #{tudui_forward.1} parent=27 // pred_check_branch
              %169 = sbr.rel (0) target = $region32
            $region31: #{tudui_forward.1} parent=27 // pred_region
              // Predicated region
              $region44: #{tudui_forward.1} parent=31 // pred_check
                _
              $region45: #{tudui_forward.1} parent=31 // pred_check_branch
                %375 = sbr.rel (0) target = $region47
              $region46: #{tudui_forward.1} parent=31 // pred_region
                loop: start=0, step=1, limit=1
                $region48: #{tudui_forward.1} parent=46 // loop_pre_header
                  _
                $region49: #{tudui_forward.1} parent=46 // loop_header
                  %s377 = sphi 0, %s381
                  %p378 = scmp.ge.s32.totalorder %s377, 1
                  %s382 = sphi %s165, %s165
                  %s383 = sphi %s160, %s160
                $region50: #{tudui_forward.1} parent=46 // loop_header_branch
                  %380 = sbr.rel (%p378) target = $region54
                $region51: #{tudui_forward.1} parent=46 // loop_body
                  %v384 = vld [vmem:[%s382] sm:$0xff]
                  %385 = vst [vmem:[%s383] sm:$0xff] %v384
                  %v386 = vld [vmem:[%s382 + $0x8] sm:$0xff]
                  %387 = vst [vmem:[%s383 + $0x8] sm:$0xff] %v386
                  %v388 = vld [vmem:[%s382 + $0x10] sm:$0xff]
                  %389 = vst [vmem:[%s383 + $0x10] sm:$0xff] %v388
                  %v390 = vld [vmem:[%s382 + $0x18] sm:$0xff]
                  %391 = vst [vmem:[%s383 + $0x18] sm:$0xff] %v390
                  %v392 = vld [vmem:[%s382 + $0x20] sm:$0xff]
                  %393 = vst [vmem:[%s383 + $0x20] sm:$0xff] %v392
                  %v394 = vld [vmem:[%s382 + $0x28] sm:$0xff]
                  %395 = vst [vmem:[%s383 + $0x28] sm:$0xff] %v394
                  %v396 = vld [vmem:[%s382 + $0x30] sm:$0xff]
                  %397 = vst [vmem:[%s383 + $0x30] sm:$0xff] %v396
                  %v398 = vld [vmem:[%s382 + $0x38] sm:$0xff]
                  %399 = vst [vmem:[%s383 + $0x38] sm:$0xff] %v398
                  %v400 = vld [vmem:[%s382 + $0x40] sm:$0xff]
                  %401 = vst [vmem:[%s383 + $0x40] sm:$0xff] %v400
                  %v402 = vld [vmem:[%s382 + $0x48] sm:$0xff]
                  %403 = vst [vmem:[%s383 + $0x48] sm:$0xff] %v402
                  %v404 = vld [vmem:[%s382 + $0x50] sm:$0xff]
                  %405 = vst [vmem:[%s383 + $0x50] sm:$0xff] %v404
                  %v406 = vld [vmem:[%s382 + $0x58] sm:$0xff]
                  %407 = vst [vmem:[%s383 + $0x58] sm:$0xff] %v406
                  %v408 = vld [vmem:[%s382 + $0x60] sm:$0xff]
                  %409 = vst [vmem:[%s383 + $0x60] sm:$0xff] %v408
                  %v410 = vld [vmem:[%s382 + $0x68] sm:$0xff]
                  %411 = vst [vmem:[%s383 + $0x68] sm:$0xff] %v410
                  %v412 = vld [vmem:[%s382 + $0x70] sm:$0xff]
                  %413 = vst [vmem:[%s383 + $0x70] sm:$0xff] %v412
                  %v414 = vld [vmem:[%s382 + $0x78] sm:$0xff]
                  %415 = vst [vmem:[%s383 + $0x78] sm:$0xff] %v414
                  %v416 = vld [vmem:[%s382 + $0x80] sm:$0xff]
                  %417 = vst [vmem:[%s383 + $0x80] sm:$0xff] %v416
                  %v418 = vld [vmem:[%s382 + $0x88] sm:$0xff]
                  %419 = vst [vmem:[%s383 + $0x88] sm:$0xff] %v418
                  %v420 = vld [vmem:[%s382 + $0x90] sm:$0xff]
                  %421 = vst [vmem:[%s383 + $0x90] sm:$0xff] %v420
                  %v422 = vld [vmem:[%s382 + $0x98] sm:$0xff]
                  %423 = vst [vmem:[%s383 + $0x98] sm:$0xff] %v422
                  %v424 = vld [vmem:[%s382 + $0xa0] sm:$0xff]
                  %425 = vst [vmem:[%s383 + $0xa0] sm:$0xff] %v424
                  %v426 = vld [vmem:[%s382 + $0xa8] sm:$0xff]
                  %427 = vst [vmem:[%s383 + $0xa8] sm:$0xff] %v426
                  %v428 = vld [vmem:[%s382 + $0xb0] sm:$0xff]
                  %429 = vst [vmem:[%s383 + $0xb0] sm:$0xff] %v428
                  %v430 = vld [vmem:[%s382 + $0xb8] sm:$0xff]
                  %431 = vst [vmem:[%s383 + $0xb8] sm:$0xff] %v430
                  %v432 = vld [vmem:[%s382 + $0xc0] sm:$0xff]
                  %433 = vst [vmem:[%s383 + $0xc0] sm:$0xff] %v432
                  %v434 = vld [vmem:[%s382 + $0xc8] sm:$0xff]
                  %435 = vst [vmem:[%s383 + $0xc8] sm:$0xff] %v434
                  %v436 = vld [vmem:[%s382 + $0xd0] sm:$0xff]
                  %437 = vst [vmem:[%s383 + $0xd0] sm:$0xff] %v436
                  %v438 = vld [vmem:[%s382 + $0xd8] sm:$0xff]
                  %439 = vst [vmem:[%s383 + $0xd8] sm:$0xff] %v438
                  %v440 = vld [vmem:[%s382 + $0xe0] sm:$0xff]
                  %441 = vst [vmem:[%s383 + $0xe0] sm:$0xff] %v440
                  %v442 = vld [vmem:[%s382 + $0xe8] sm:$0xff]
                  %443 = vst [vmem:[%s383 + $0xe8] sm:$0xff] %v442
                  %v444 = vld [vmem:[%s382 + $0xf0] sm:$0xff]
                  %445 = vst [vmem:[%s383 + $0xf0] sm:$0xff] %v444
                  %v446 = vld [vmem:[%s382 + $0xf8] sm:$0xff]
                  %447 = vst [vmem:[%s383 + $0xf8] sm:$0xff] %v446
                  %v448 = vld [vmem:[%s382 + $0x100] sm:$0xff]
                  %449 = vst [vmem:[%s383 + $0x100] sm:$0xff] %v448
                  %v450 = vld [vmem:[%s382 + $0x108] sm:$0xff]
                  %451 = vst [vmem:[%s383 + $0x108] sm:$0xff] %v450
                  %v452 = vld [vmem:[%s382 + $0x110] sm:$0xff]
                  %453 = vst [vmem:[%s383 + $0x110] sm:$0xff] %v452
                  %v454 = vld [vmem:[%s382 + $0x118] sm:$0xff]
                  %455 = vst [vmem:[%s383 + $0x118] sm:$0xff] %v454
                  %v456 = vld [vmem:[%s382 + $0x120] sm:$0xff]
                  %457 = vst [vmem:[%s383 + $0x120] sm:$0xff] %v456
                  %v458 = vld [vmem:[%s382 + $0x128] sm:$0xff]
                  %459 = vst [vmem:[%s383 + $0x128] sm:$0xff] %v458
                  %v460 = vld [vmem:[%s382 + $0x130] sm:$0xff]
                  %461 = vst [vmem:[%s383 + $0x130] sm:$0xff] %v460
                  %v462 = vld [vmem:[%s382 + $0x138] sm:$0xff]
                  %463 = vst [vmem:[%s383 + $0x138] sm:$0xff] %v462
                  %v464 = vld [vmem:[%s382 + $0x140] sm:$0xff]
                  %465 = vst [vmem:[%s383 + $0x140] sm:$0xff] %v464
                  %v466 = vld [vmem:[%s382 + $0x148] sm:$0xff]
                  %467 = vst [vmem:[%s383 + $0x148] sm:$0xff] %v466
                  %v468 = vld [vmem:[%s382 + $0x150] sm:$0xff]
                  %469 = vst [vmem:[%s383 + $0x150] sm:$0xff] %v468
                  %v470 = vld [vmem:[%s382 + $0x158] sm:$0xff]
                  %471 = vst [vmem:[%s383 + $0x158] sm:$0xff] %v470
                  %v472 = vld [vmem:[%s382 + $0x160] sm:$0xff]
                  %473 = vst [vmem:[%s383 + $0x160] sm:$0xff] %v472
                  %v474 = vld [vmem:[%s382 + $0x168] sm:$0xff]
                  %475 = vst [vmem:[%s383 + $0x168] sm:$0xff] %v474
                  %v476 = vld [vmem:[%s382 + $0x170] sm:$0xff]
                  %477 = vst [vmem:[%s383 + $0x170] sm:$0xff] %v476
                  %v478 = vld [vmem:[%s382 + $0x178] sm:$0xff]
                  %479 = vst [vmem:[%s383 + $0x178] sm:$0xff] %v478
                  %v480 = vld [vmem:[%s382 + $0x600] sm:$0xff]
                  %481 = vst [vmem:[%s383 + $0x180] sm:$0xff] %v480
                  %v482 = vld [vmem:[%s382 + $0x608] sm:$0xff]
                  %483 = vst [vmem:[%s383 + $0x188] sm:$0xff] %v482
                  %v484 = vld [vmem:[%s382 + $0x610] sm:$0xff]
                  %485 = vst [vmem:[%s383 + $0x190] sm:$0xff] %v484
                  %v486 = vld [vmem:[%s382 + $0x618] sm:$0xff]
                  %487 = vst [vmem:[%s383 + $0x198] sm:$0xff] %v486
                  %v488 = vld [vmem:[%s382 + $0x620] sm:$0xff]
                  %489 = vst [vmem:[%s383 + $0x1a0] sm:$0xff] %v488
                  %v490 = vld [vmem:[%s382 + $0x628] sm:$0xff]
                  %491 = vst [vmem:[%s383 + $0x1a8] sm:$0xff] %v490
                  %v492 = vld [vmem:[%s382 + $0x630] sm:$0xff]
                  %493 = vst [vmem:[%s383 + $0x1b0] sm:$0xff] %v492
                  %v494 = vld [vmem:[%s382 + $0x638] sm:$0xff]
                  %495 = vst [vmem:[%s383 + $0x1b8] sm:$0xff] %v494
                  %v496 = vld [vmem:[%s382 + $0x640] sm:$0xff]
                  %497 = vst [vmem:[%s383 + $0x1c0] sm:$0xff] %v496
                  %v498 = vld [vmem:[%s382 + $0x648] sm:$0xff]
                  %499 = vst [vmem:[%s383 + $0x1c8] sm:$0xff] %v498
                  %v500 = vld [vmem:[%s382 + $0x650] sm:$0xff]
                  %501 = vst [vmem:[%s383 + $0x1d0] sm:$0xff] %v500
                  %v502 = vld [vmem:[%s382 + $0x658] sm:$0xff]
                  %503 = vst [vmem:[%s383 + $0x1d8] sm:$0xff] %v502
                  %v504 = vld [vmem:[%s382 + $0x660] sm:$0xff]
                  %505 = vst [vmem:[%s383 + $0x1e0] sm:$0xff] %v504
                  %v506 = vld [vmem:[%s382 + $0x668] sm:$0xff]
                  %507 = vst [vmem:[%s383 + $0x1e8] sm:$0xff] %v506
                  %v508 = vld [vmem:[%s382 + $0x670] sm:$0xff]
                  %509 = vst [vmem:[%s383 + $0x1f0] sm:$0xff] %v508
                  %v510 = vld [vmem:[%s382 + $0x678] sm:$0xff]
                  %511 = vst [vmem:[%s383 + $0x1f8] sm:$0xff] %v510
                  %v512 = vld [vmem:[%s382 + $0x680] sm:$0xff]
                  %513 = vst [vmem:[%s383 + $0x200] sm:$0xff] %v512
                  %v514 = vld [vmem:[%s382 + $0x688] sm:$0xff]
                  %515 = vst [vmem:[%s383 + $0x208] sm:$0xff] %v514
                  %v516 = vld [vmem:[%s382 + $0x690] sm:$0xff]
                  %517 = vst [vmem:[%s383 + $0x210] sm:$0xff] %v516
                  %v518 = vld [vmem:[%s382 + $0x698] sm:$0xff]
                  %519 = vst [vmem:[%s383 + $0x218] sm:$0xff] %v518
                  %v520 = vld [vmem:[%s382 + $0x6a0] sm:$0xff]
                  %521 = vst [vmem:[%s383 + $0x220] sm:$0xff] %v520
                  %v522 = vld [vmem:[%s382 + $0x6a8] sm:$0xff]
                  %523 = vst [vmem:[%s383 + $0x228] sm:$0xff] %v522
                  %v524 = vld [vmem:[%s382 + $0x6b0] sm:$0xff]
                  %525 = vst [vmem:[%s383 + $0x230] sm:$0xff] %v524
                  %v526 = vld [vmem:[%s382 + $0x6b8] sm:$0xff]
                  %527 = vst [vmem:[%s383 + $0x238] sm:$0xff] %v526
                  %v528 = vld [vmem:[%s382 + $0x6c0] sm:$0xff]
                  %529 = vst [vmem:[%s383 + $0x240] sm:$0xff] %v528
                  %v530 = vld [vmem:[%s382 + $0x6c8] sm:$0xff]
                  %531 = vst [vmem:[%s383 + $0x248] sm:$0xff] %v530
                  %v532 = vld [vmem:[%s382 + $0x6d0] sm:$0xff]
                  %533 = vst [vmem:[%s383 + $0x250] sm:$0xff] %v532
                  %v534 = vld [vmem:[%s382 + $0x6d8] sm:$0xff]
                  %535 = vst [vmem:[%s383 + $0x258] sm:$0xff] %v534
                  %v536 = vld [vmem:[%s382 + $0x6e0] sm:$0xff]
                  %537 = vst [vmem:[%s383 + $0x260] sm:$0xff] %v536
                  %v538 = vld [vmem:[%s382 + $0x6e8] sm:$0xff]
                  %539 = vst [vmem:[%s383 + $0x268] sm:$0xff] %v538
                  %v540 = vld [vmem:[%s382 + $0x6f0] sm:$0xff]
                  %541 = vst [vmem:[%s383 + $0x270] sm:$0xff] %v540
                  %v542 = vld [vmem:[%s382 + $0x6f8] sm:$0xff]
                  %543 = vst [vmem:[%s383 + $0x278] sm:$0xff] %v542
                  %v544 = vld [vmem:[%s382 + $0x700] sm:$0xff]
                  %545 = vst [vmem:[%s383 + $0x280] sm:$0xff] %v544
                  %v546 = vld [vmem:[%s382 + $0x708] sm:$0xff]
                  %547 = vst [vmem:[%s383 + $0x288] sm:$0xff] %v546
                  %v548 = vld [vmem:[%s382 + $0x710] sm:$0xff]
                  %549 = vst [vmem:[%s383 + $0x290] sm:$0xff] %v548
                  %v550 = vld [vmem:[%s382 + $0x718] sm:$0xff]
                  %551 = vst [vmem:[%s383 + $0x298] sm:$0xff] %v550
                  %v552 = vld [vmem:[%s382 + $0x720] sm:$0xff]
                  %553 = vst [vmem:[%s383 + $0x2a0] sm:$0xff] %v552
                  %v554 = vld [vmem:[%s382 + $0x728] sm:$0xff]
                  %555 = vst [vmem:[%s383 + $0x2a8] sm:$0xff] %v554
                  %v556 = vld [vmem:[%s382 + $0x730] sm:$0xff]
                  %557 = vst [vmem:[%s383 + $0x2b0] sm:$0xff] %v556
                  %v558 = vld [vmem:[%s382 + $0x738] sm:$0xff]
                  %559 = vst [vmem:[%s383 + $0x2b8] sm:$0xff] %v558
                  %v560 = vld [vmem:[%s382 + $0x740] sm:$0xff]
                  %561 = vst [vmem:[%s383 + $0x2c0] sm:$0xff] %v560
                  %v562 = vld [vmem:[%s382 + $0x748] sm:$0xff]
                  %563 = vst [vmem:[%s383 + $0x2c8] sm:$0xff] %v562
                  %v564 = vld [vmem:[%s382 + $0x750] sm:$0xff]
                  %565 = vst [vmem:[%s383 + $0x2d0] sm:$0xff] %v564
                  %v566 = vld [vmem:[%s382 + $0x758] sm:$0xff]
                  %567 = vst [vmem:[%s383 + $0x2d8] sm:$0xff] %v566
                  %v568 = vld [vmem:[%s382 + $0x760] sm:$0xff]
                  %569 = vst [vmem:[%s383 + $0x2e0] sm:$0xff] %v568
                  %v570 = vld [vmem:[%s382 + $0x768] sm:$0xff]
                  %571 = vst [vmem:[%s383 + $0x2e8] sm:$0xff] %v570
                  %v572 = vld [vmem:[%s382 + $0x770] sm:$0xff]
                  %573 = vst [vmem:[%s383 + $0x2f0] sm:$0xff] %v572
                  %v574 = vld [vmem:[%s382 + $0x778] sm:$0xff]
                  %575 = vst [vmem:[%s383 + $0x2f8] sm:$0xff] %v574
                $region52: #{tudui_forward.1} parent=46 // loop_footer
                  %s381 = sadd.s32 1, %s377
                $region53: #{tudui_forward.1} parent=46 // loop_footer_branch
                  %376 = sbr.rel target = $region49
                $region54: #{tudui_forward.1} parent=46 // loop_exit
                  _
              $region47: #{tudui_forward.1} parent=31 // pred_fallthru
                _
              // Predicated region
              $region55: #{tudui_forward.1} parent=31 // pred_check
                _
              $region56: #{tudui_forward.1} parent=31 // pred_check_branch
                %577 = sbr.rel target = $region58
              $region57: #{tudui_forward.1} parent=31 // pred_region
                _
              $region58: #{tudui_forward.1} parent=31 // pred_fallthru
                _
            $region32: #{tudui_forward.1} parent=27 // pred_fallthru
              _
            // Predicated region
            $region33: #{tudui_forward.1} parent=27 // pred_check
              _
            $region34: #{tudui_forward.1} parent=27 // pred_check_branch
              %171 = sbr.rel target = $region36
            $region35: #{tudui_forward.1} parent=27 // pred_region
              %s173 = ssub.s32 256, 1
              loop: start=0, step=1, limit=1
              $region37: #{tudui_forward.1} parent=35 // loop_pre_header
                _
              $region38: #{tudui_forward.1} parent=35 // loop_header
                %s175 = sphi 0, %s179
                %p176 = scmp.ge.s32.totalorder %s175, 1
                %s180 = sphi %s165, %s165
                %s181 = sphi %s160, %s160
              $region39: #{tudui_forward.1} parent=35 // loop_header_branch
                %178 = sbr.rel (%p176) target = $region43
              $region40: #{tudui_forward.1} parent=35 // loop_body
                %v182 = vld [vmem:[%s180] sm:%s173]
                %183 = vst [vmem:[%s181] sm:%s173] %v182
                %v184 = vld [vmem:[%s180 + $0x8] sm:%s173]
                %185 = vst [vmem:[%s181 + $0x8] sm:%s173] %v184
                %v186 = vld [vmem:[%s180 + $0x10] sm:%s173]
                %187 = vst [vmem:[%s181 + $0x10] sm:%s173] %v186
                %v188 = vld [vmem:[%s180 + $0x18] sm:%s173]
                %189 = vst [vmem:[%s181 + $0x18] sm:%s173] %v188
                %v190 = vld [vmem:[%s180 + $0x20] sm:%s173]
                %191 = vst [vmem:[%s181 + $0x20] sm:%s173] %v190
                %v192 = vld [vmem:[%s180 + $0x28] sm:%s173]
                %193 = vst [vmem:[%s181 + $0x28] sm:%s173] %v192
                %v194 = vld [vmem:[%s180 + $0x30] sm:%s173]
                %195 = vst [vmem:[%s181 + $0x30] sm:%s173] %v194
                %v196 = vld [vmem:[%s180 + $0x38] sm:%s173]
                %197 = vst [vmem:[%s181 + $0x38] sm:%s173] %v196
                %v198 = vld [vmem:[%s180 + $0x40] sm:%s173]
                %199 = vst [vmem:[%s181 + $0x40] sm:%s173] %v198
                %v200 = vld [vmem:[%s180 + $0x48] sm:%s173]
                %201 = vst [vmem:[%s181 + $0x48] sm:%s173] %v200
                %v202 = vld [vmem:[%s180 + $0x50] sm:%s173]
                %203 = vst [vmem:[%s181 + $0x50] sm:%s173] %v202
                %v204 = vld [vmem:[%s180 + $0x58] sm:%s173]
                %205 = vst [vmem:[%s181 + $0x58] sm:%s173] %v204
                %v206 = vld [vmem:[%s180 + $0x60] sm:%s173]
                %207 = vst [vmem:[%s181 + $0x60] sm:%s173] %v206
                %v208 = vld [vmem:[%s180 + $0x68] sm:%s173]
                %209 = vst [vmem:[%s181 + $0x68] sm:%s173] %v208
                %v210 = vld [vmem:[%s180 + $0x70] sm:%s173]
                %211 = vst [vmem:[%s181 + $0x70] sm:%s173] %v210
                %v212 = vld [vmem:[%s180 + $0x78] sm:%s173]
                %213 = vst [vmem:[%s181 + $0x78] sm:%s173] %v212
                %v214 = vld [vmem:[%s180 + $0x80] sm:%s173]
                %215 = vst [vmem:[%s181 + $0x80] sm:%s173] %v214
                %v216 = vld [vmem:[%s180 + $0x88] sm:%s173]
                %217 = vst [vmem:[%s181 + $0x88] sm:%s173] %v216
                %v218 = vld [vmem:[%s180 + $0x90] sm:%s173]
                %219 = vst [vmem:[%s181 + $0x90] sm:%s173] %v218
                %v220 = vld [vmem:[%s180 + $0x98] sm:%s173]
                %221 = vst [vmem:[%s181 + $0x98] sm:%s173] %v220
                %v222 = vld [vmem:[%s180 + $0xa0] sm:%s173]
                %223 = vst [vmem:[%s181 + $0xa0] sm:%s173] %v222
                %v224 = vld [vmem:[%s180 + $0xa8] sm:%s173]
                %225 = vst [vmem:[%s181 + $0xa8] sm:%s173] %v224
                %v226 = vld [vmem:[%s180 + $0xb0] sm:%s173]
                %227 = vst [vmem:[%s181 + $0xb0] sm:%s173] %v226
                %v228 = vld [vmem:[%s180 + $0xb8] sm:%s173]
                %229 = vst [vmem:[%s181 + $0xb8] sm:%s173] %v228
                %v230 = vld [vmem:[%s180 + $0xc0] sm:%s173]
                %231 = vst [vmem:[%s181 + $0xc0] sm:%s173] %v230
                %v232 = vld [vmem:[%s180 + $0xc8] sm:%s173]
                %233 = vst [vmem:[%s181 + $0xc8] sm:%s173] %v232
                %v234 = vld [vmem:[%s180 + $0xd0] sm:%s173]
                %235 = vst [vmem:[%s181 + $0xd0] sm:%s173] %v234
                %v236 = vld [vmem:[%s180 + $0xd8] sm:%s173]
                %237 = vst [vmem:[%s181 + $0xd8] sm:%s173] %v236
                %v238 = vld [vmem:[%s180 + $0xe0] sm:%s173]
                %239 = vst [vmem:[%s181 + $0xe0] sm:%s173] %v238
                %v240 = vld [vmem:[%s180 + $0xe8] sm:%s173]
                %241 = vst [vmem:[%s181 + $0xe8] sm:%s173] %v240
                %v242 = vld [vmem:[%s180 + $0xf0] sm:%s173]
                %243 = vst [vmem:[%s181 + $0xf0] sm:%s173] %v242
                %v244 = vld [vmem:[%s180 + $0xf8] sm:%s173]
                %245 = vst [vmem:[%s181 + $0xf8] sm:%s173] %v244
                %v246 = vld [vmem:[%s180 + $0x100] sm:%s173]
                %247 = vst [vmem:[%s181 + $0x100] sm:%s173] %v246
                %v248 = vld [vmem:[%s180 + $0x108] sm:%s173]
                %249 = vst [vmem:[%s181 + $0x108] sm:%s173] %v248
                %v250 = vld [vmem:[%s180 + $0x110] sm:%s173]
                %251 = vst [vmem:[%s181 + $0x110] sm:%s173] %v250
                %v252 = vld [vmem:[%s180 + $0x118] sm:%s173]
                %253 = vst [vmem:[%s181 + $0x118] sm:%s173] %v252
                %v254 = vld [vmem:[%s180 + $0x120] sm:%s173]
                %255 = vst [vmem:[%s181 + $0x120] sm:%s173] %v254
                %v256 = vld [vmem:[%s180 + $0x128] sm:%s173]
                %257 = vst [vmem:[%s181 + $0x128] sm:%s173] %v256
                %v258 = vld [vmem:[%s180 + $0x130] sm:%s173]
                %259 = vst [vmem:[%s181 + $0x130] sm:%s173] %v258
                %v260 = vld [vmem:[%s180 + $0x138] sm:%s173]
                %261 = vst [vmem:[%s181 + $0x138] sm:%s173] %v260
                %v262 = vld [vmem:[%s180 + $0x140] sm:%s173]
                %263 = vst [vmem:[%s181 + $0x140] sm:%s173] %v262
                %v264 = vld [vmem:[%s180 + $0x148] sm:%s173]
                %265 = vst [vmem:[%s181 + $0x148] sm:%s173] %v264
                %v266 = vld [vmem:[%s180 + $0x150] sm:%s173]
                %267 = vst [vmem:[%s181 + $0x150] sm:%s173] %v266
                %v268 = vld [vmem:[%s180 + $0x158] sm:%s173]
                %269 = vst [vmem:[%s181 + $0x158] sm:%s173] %v268
                %v270 = vld [vmem:[%s180 + $0x160] sm:%s173]
                %271 = vst [vmem:[%s181 + $0x160] sm:%s173] %v270
                %v272 = vld [vmem:[%s180 + $0x168] sm:%s173]
                %273 = vst [vmem:[%s181 + $0x168] sm:%s173] %v272
                %v274 = vld [vmem:[%s180 + $0x170] sm:%s173]
                %275 = vst [vmem:[%s181 + $0x170] sm:%s173] %v274
                %v276 = vld [vmem:[%s180 + $0x178] sm:%s173]
                %277 = vst [vmem:[%s181 + $0x178] sm:%s173] %v276
                %v278 = vld [vmem:[%s180 + $0x600] sm:%s173]
                %279 = vst [vmem:[%s181 + $0x180] sm:%s173] %v278
                %v280 = vld [vmem:[%s180 + $0x608] sm:%s173]
                %281 = vst [vmem:[%s181 + $0x188] sm:%s173] %v280
                %v282 = vld [vmem:[%s180 + $0x610] sm:%s173]
                %283 = vst [vmem:[%s181 + $0x190] sm:%s173] %v282
                %v284 = vld [vmem:[%s180 + $0x618] sm:%s173]
                %285 = vst [vmem:[%s181 + $0x198] sm:%s173] %v284
                %v286 = vld [vmem:[%s180 + $0x620] sm:%s173]
                %287 = vst [vmem:[%s181 + $0x1a0] sm:%s173] %v286
                %v288 = vld [vmem:[%s180 + $0x628] sm:%s173]
                %289 = vst [vmem:[%s181 + $0x1a8] sm:%s173] %v288
                %v290 = vld [vmem:[%s180 + $0x630] sm:%s173]
                %291 = vst [vmem:[%s181 + $0x1b0] sm:%s173] %v290
                %v292 = vld [vmem:[%s180 + $0x638] sm:%s173]
                %293 = vst [vmem:[%s181 + $0x1b8] sm:%s173] %v292
                %v294 = vld [vmem:[%s180 + $0x640] sm:%s173]
                %295 = vst [vmem:[%s181 + $0x1c0] sm:%s173] %v294
                %v296 = vld [vmem:[%s180 + $0x648] sm:%s173]
                %297 = vst [vmem:[%s181 + $0x1c8] sm:%s173] %v296
                %v298 = vld [vmem:[%s180 + $0x650] sm:%s173]
                %299 = vst [vmem:[%s181 + $0x1d0] sm:%s173] %v298
                %v300 = vld [vmem:[%s180 + $0x658] sm:%s173]
                %301 = vst [vmem:[%s181 + $0x1d8] sm:%s173] %v300
                %v302 = vld [vmem:[%s180 + $0x660] sm:%s173]
                %303 = vst [vmem:[%s181 + $0x1e0] sm:%s173] %v302
                %v304 = vld [vmem:[%s180 + $0x668] sm:%s173]
                %305 = vst [vmem:[%s181 + $0x1e8] sm:%s173] %v304
                %v306 = vld [vmem:[%s180 + $0x670] sm:%s173]
                %307 = vst [vmem:[%s181 + $0x1f0] sm:%s173] %v306
                %v308 = vld [vmem:[%s180 + $0x678] sm:%s173]
                %309 = vst [vmem:[%s181 + $0x1f8] sm:%s173] %v308
                %v310 = vld [vmem:[%s180 + $0x680] sm:%s173]
                %311 = vst [vmem:[%s181 + $0x200] sm:%s173] %v310
                %v312 = vld [vmem:[%s180 + $0x688] sm:%s173]
                %313 = vst [vmem:[%s181 + $0x208] sm:%s173] %v312
                %v314 = vld [vmem:[%s180 + $0x690] sm:%s173]
                %315 = vst [vmem:[%s181 + $0x210] sm:%s173] %v314
                %v316 = vld [vmem:[%s180 + $0x698] sm:%s173]
                %317 = vst [vmem:[%s181 + $0x218] sm:%s173] %v316
                %v318 = vld [vmem:[%s180 + $0x6a0] sm:%s173]
                %319 = vst [vmem:[%s181 + $0x220] sm:%s173] %v318
                %v320 = vld [vmem:[%s180 + $0x6a8] sm:%s173]
                %321 = vst [vmem:[%s181 + $0x228] sm:%s173] %v320
                %v322 = vld [vmem:[%s180 + $0x6b0] sm:%s173]
                %323 = vst [vmem:[%s181 + $0x230] sm:%s173] %v322
                %v324 = vld [vmem:[%s180 + $0x6b8] sm:%s173]
                %325 = vst [vmem:[%s181 + $0x238] sm:%s173] %v324
                %v326 = vld [vmem:[%s180 + $0x6c0] sm:%s173]
                %327 = vst [vmem:[%s181 + $0x240] sm:%s173] %v326
                %v328 = vld [vmem:[%s180 + $0x6c8] sm:%s173]
                %329 = vst [vmem:[%s181 + $0x248] sm:%s173] %v328
                %v330 = vld [vmem:[%s180 + $0x6d0] sm:%s173]
                %331 = vst [vmem:[%s181 + $0x250] sm:%s173] %v330
                %v332 = vld [vmem:[%s180 + $0x6d8] sm:%s173]
                %333 = vst [vmem:[%s181 + $0x258] sm:%s173] %v332
                %v334 = vld [vmem:[%s180 + $0x6e0] sm:%s173]
                %335 = vst [vmem:[%s181 + $0x260] sm:%s173] %v334
                %v336 = vld [vmem:[%s180 + $0x6e8] sm:%s173]
                %337 = vst [vmem:[%s181 + $0x268] sm:%s173] %v336
                %v338 = vld [vmem:[%s180 + $0x6f0] sm:%s173]
                %339 = vst [vmem:[%s181 + $0x270] sm:%s173] %v338
                %v340 = vld [vmem:[%s180 + $0x6f8] sm:%s173]
                %341 = vst [vmem:[%s181 + $0x278] sm:%s173] %v340
                %v342 = vld [vmem:[%s180 + $0x700] sm:%s173]
                %343 = vst [vmem:[%s181 + $0x280] sm:%s173] %v342
                %v344 = vld [vmem:[%s180 + $0x708] sm:%s173]
                %345 = vst [vmem:[%s181 + $0x288] sm:%s173] %v344
                %v346 = vld [vmem:[%s180 + $0x710] sm:%s173]
                %347 = vst [vmem:[%s181 + $0x290] sm:%s173] %v346
                %v348 = vld [vmem:[%s180 + $0x718] sm:%s173]
                %349 = vst [vmem:[%s181 + $0x298] sm:%s173] %v348
                %v350 = vld [vmem:[%s180 + $0x720] sm:%s173]
                %351 = vst [vmem:[%s181 + $0x2a0] sm:%s173] %v350
                %v352 = vld [vmem:[%s180 + $0x728] sm:%s173]
                %353 = vst [vmem:[%s181 + $0x2a8] sm:%s173] %v352
                %v354 = vld [vmem:[%s180 + $0x730] sm:%s173]
                %355 = vst [vmem:[%s181 + $0x2b0] sm:%s173] %v354
                %v356 = vld [vmem:[%s180 + $0x738] sm:%s173]
                %357 = vst [vmem:[%s181 + $0x2b8] sm:%s173] %v356
                %v358 = vld [vmem:[%s180 + $0x740] sm:%s173]
                %359 = vst [vmem:[%s181 + $0x2c0] sm:%s173] %v358
                %v360 = vld [vmem:[%s180 + $0x748] sm:%s173]
                %361 = vst [vmem:[%s181 + $0x2c8] sm:%s173] %v360
                %v362 = vld [vmem:[%s180 + $0x750] sm:%s173]
                %363 = vst [vmem:[%s181 + $0x2d0] sm:%s173] %v362
                %v364 = vld [vmem:[%s180 + $0x758] sm:%s173]
                %365 = vst [vmem:[%s181 + $0x2d8] sm:%s173] %v364
                %v366 = vld [vmem:[%s180 + $0x760] sm:%s173]
                %367 = vst [vmem:[%s181 + $0x2e0] sm:%s173] %v366
                %v368 = vld [vmem:[%s180 + $0x768] sm:%s173]
                %369 = vst [vmem:[%s181 + $0x2e8] sm:%s173] %v368
                %v370 = vld [vmem:[%s180 + $0x770] sm:%s173]
                %371 = vst [vmem:[%s181 + $0x2f0] sm:%s173] %v370
                %v372 = vld [vmem:[%s180 + $0x778] sm:%s173]
                %373 = vst [vmem:[%s181 + $0x2f8] sm:%s173] %v372
              $region41: #{tudui_forward.1} parent=35 // loop_footer
                %s179 = sadd.s32 1, %s175
              $region42: #{tudui_forward.1} parent=35 // loop_footer_branch
                %174 = sbr.rel target = $region38
              $region43: #{tudui_forward.1} parent=35 // loop_exit
                _
            $region36: #{tudui_forward.1} parent=27 // pred_fallthru
              _
          $region28: #{tudui_forward.1} parent=23 // pred_fallthru
            _
          %578 = vnop
        $region24: #{tudui_forward.1} parent=19 // pred_fallthru
          _
        // Predicated region
        $region59: #{tudui_forward.1} parent=19 // pred_check
          %p579 = pneg %p79
        $region60: #{tudui_forward.1} parent=19 // pred_check_branch
          %581 = sbr.rel (%p579) target = $region62
        $region61: #{tudui_forward.1} parent=19 // pred_region
          #allocation9 [shape = 'u32[6]{0}', space=smem, size = 0x18, scoped, tag = 'DMA stride descriptor']
          %s582 = sand.u32 %s69, 1
          %s583 = scalar_lea.sflag [#allocation5], %s582
          %s584 = sand.u32 %s69, 1
          %s585 = smul.addr %s584, 3840
          %s586 = scalar_lea.vmem [#allocation4], %s585
          %s587 = smul.u32 %s20, 4
          %s588 = sadd.s32 %s587, %s21
          %s589 = smul.u32 48, %s588
          %s591 = ssub.s32 61440, 61440
          %592 = vsyncadd %s583, %s591
          %s593 = smul.addr %s589, 128
          %s594 = scalar_lea.hbm %s1, %s593
          %s596 = sshll.u32 1, 14
          %s597 = sxor.u32 4294967295, %s596
          %s599 = sld [smem:[#allocation0]]
          %s600 = sadd.s32 2, %s599
          %s602 = sshll.u32 7, 26
          %s603 = sxor.u32 4294967295, %s602
          %s604 = sand.u32 0, %s603
          %s605 = sshll.u32 %s600, 26
          %s606 = sor.u32 %s604, %s605
          %s607 = sshll.u32 %s586, 4
          %s608 = int_to_ptr.vmem [resolvable:$true] %s607
          %614 = sst [smem:[#allocation9]] 24576
          %s615 = scalar_lea.smem [#allocation9], 1
          %616 = sst [smem:[%s615]] 6144
          %s617 = scalar_lea.smem [#allocation9], 2
          %618 = sst [smem:[%s617]] 48
          %s619 = scalar_lea.smem [#allocation9], 3
          %620 = sst [smem:[%s619]] 128
          %s621 = scalar_lea.smem [#allocation9], 4
          %622 = sst [smem:[%s621]] 128
          %s623 = scalar_lea.smem [#allocation9], 5
          %624 = sst [smem:[%s623]] 8
          %626 = dma.general %s594, 61440, %s608, %s583, 131072, [#allocation9], %s606, 0
        $region62: #{tudui_forward.1} parent=19 // pred_fallthru
          _
      $region20: #{tudui_forward.1} parent=5 // pred_fallthru
        _
      %p627 = scmp.le.s32.totalorder 1, %s13
      %p628 = scmp.lt.s32.totalorder %s13, 5
      %p629 = pnand %p627, %p628
      %p630 = pneg %p629
      // Predicated region
      $region63: #{tudui_forward.1} parent=5 // pred_check
        _
      $region64: #{tudui_forward.1} parent=5 // pred_check_branch
        %632 = sbr.rel (%p629) target = $region66
      $region65: #{tudui_forward.1} parent=5 // pred_region
        %s633 = ssub.s32 %s13, 1
        %s634 = sand.u32 %s42, 1
        %s635 = sand.u32 %s42, 1
        %s636 = smul.addr %s635, 768
        %s637 = scalar_lea.vmem [#allocation3], %s636
        // Predicated region
        $region67: #{tudui_forward.1} parent=65 // pred_check
          %p638 = pneg %p55
        $region68: #{tudui_forward.1} parent=65 // pred_check_branch
          %640 = sbr.rel (%p638) target = $region70
        $region69: #{tudui_forward.1} parent=65 // pred_region
          _
        $region70: #{tudui_forward.1} parent=65 // pred_fallthru
          _
        %s641 = sand.u32 %s72, 1
        %s642 = scalar_lea.sflag [#allocation5], %s641
        %s643 = sand.u32 %s72, 1
        %s644 = smul.addr %s643, 3840
        %s645 = scalar_lea.vmem [#allocation4], %s644
        // Predicated region
        $region71: #{tudui_forward.1} parent=65 // pred_check
          %p646 = pneg %p85
        $region72: #{tudui_forward.1} parent=65 // pred_check_branch
          %648 = sbr.rel (%p646) target = $region74
        $region73: #{tudui_forward.1} parent=65 // pred_region
          %649 = dma.done %s642, 61440
        $region74: #{tudui_forward.1} parent=65 // pred_fallthru
          _
        %s650 = sand.u32 %s42, 1
        %s651 = sand.u32 %s42, 1
        %s652 = smul.addr %s651, 768
        %s653 = scalar_lea.vmem [#allocation3], %s652
        %p654 = pneg %p55
        %p655 = pneg %p52
        %s656 = sand.u32 %s72, 1
        %s657 = scalar_lea.sflag [#allocation5], %s656
        %s658 = sand.u32 %s72, 1
        %s659 = smul.addr %s658, 3840
        %s660 = scalar_lea.vmem [#allocation4], %s659
        %p661 = pneg %p85
        %p662 = pneg %p82
        %p663 = pneg %p106
        %p664 = pneg %p103
        %p665 = pneg %p132
        %p666 = pneg %p129
        %s667 = smul.u32 %s22, 4
        %s668 = sadd.s32 %s667, %s23
        %s669 = smul.u32 48, %s668
        %s670 = smul.u32 %s22, 4
        %s671 = sadd.s32 %s670, %s23
        %s672 = smul.u32 48, %s671
        %p673 = scmp.eq.s32.totalorder %s23, 0
        // Predicated region
        $region75: #{tudui_forward.1} parent=65 // pred_check
          %p674 = pneg %p673
        $region76: #{tudui_forward.1} parent=65 // pred_check_branch
          %676 = sbr.rel (%p674) target = $region78
        $region77: #{tudui_forward.1} parent=65 // pred_region
          %677 = vst [vmem:[#allocation2] sm:$0xff] 0.0
          %678 = vst [vmem:[#allocation2 + $0x8] sm:$0x3] 0.0
          %679 = vst [vmem:[#allocation2 + $0x10] sm:$0xff] 0.0
          %680 = vst [vmem:[#allocation2 + $0x18] sm:$0x3] 0.0
        $region78: #{tudui_forward.1} parent=65 // pred_fallthru
          _
        %v681 = vld [vmem:[%s637] sm:$0xff]
        %v682 = vld [vmem:[%s637 + $0x8] sm:$0xff]
        %v683 = vld [vmem:[%s637 + $0x10] sm:$0xff]
        %v684 = vld [vmem:[%s637 + $0x18] sm:$0xff]
        %v685 = vld [vmem:[%s637 + $0x20] sm:$0xff]
        %v686 = vld [vmem:[%s637 + $0x28] sm:$0xff]
        %v687 = vld [vmem:[%s637 + $0x30] sm:$0xff]
        %v688 = vld [vmem:[%s637 + $0x38] sm:$0xff]
        %v689 = vld [vmem:[%s637 + $0x40] sm:$0xff]
        %v690 = vld [vmem:[%s637 + $0x48] sm:$0xff]
        %v691 = vld [vmem:[%s637 + $0x50] sm:$0xff]
        %v692 = vld [vmem:[%s637 + $0x58] sm:$0xff]
        %v693 = vld [vmem:[%s637 + $0x60] sm:$0xff]
        %v694 = vld [vmem:[%s637 + $0x68] sm:$0xff]
        %v695 = vld [vmem:[%s637 + $0x70] sm:$0xff]
        %v696 = vld [vmem:[%s637 + $0x78] sm:$0xff]
        %v697 = vld [vmem:[%s637 + $0x80] sm:$0xff]
        %v698 = vld [vmem:[%s637 + $0x88] sm:$0xff]
        %v699 = vld [vmem:[%s637 + $0x90] sm:$0xff]
        %v700 = vld [vmem:[%s637 + $0x98] sm:$0xff]
        %v701 = vld [vmem:[%s637 + $0xa0] sm:$0xff]
        %v702 = vld [vmem:[%s637 + $0xa8] sm:$0xff]
        %v703 = vld [vmem:[%s637 + $0xb0] sm:$0xff]
        %v704 = vld [vmem:[%s637 + $0xb8] sm:$0xff]
        %v705 = vld [vmem:[%s637 + $0xc0] sm:$0xff]
        %v706 = vld [vmem:[%s637 + $0xc8] sm:$0xff]
        %v707 = vld [vmem:[%s637 + $0xd0] sm:$0xff]
        %v708 = vld [vmem:[%s637 + $0xd8] sm:$0xff]
        %v709 = vld [vmem:[%s637 + $0xe0] sm:$0xff]
        %v710 = vld [vmem:[%s637 + $0xe8] sm:$0xff]
        %v711 = vld [vmem:[%s637 + $0xf0] sm:$0xff]
        %v712 = vld [vmem:[%s637 + $0xf8] sm:$0xff]
        %v713 = vld [vmem:[%s637 + $0x100] sm:$0xff]
        %v714 = vld [vmem:[%s637 + $0x108] sm:$0xff]
        %v715 = vld [vmem:[%s637 + $0x110] sm:$0xff]
        %v716 = vld [vmem:[%s637 + $0x118] sm:$0xff]
        %v717 = vld [vmem:[%s637 + $0x120] sm:$0xff]
        %v718 = vld [vmem:[%s637 + $0x128] sm:$0xff]
        %v719 = vld [vmem:[%s637 + $0x130] sm:$0xff]
        %v720 = vld [vmem:[%s637 + $0x138] sm:$0xff]
        %v721 = vld [vmem:[%s637 + $0x140] sm:$0xff]
        %v722 = vld [vmem:[%s637 + $0x148] sm:$0xff]
        %v723 = vld [vmem:[%s637 + $0x150] sm:$0xff]
        %v724 = vld [vmem:[%s637 + $0x158] sm:$0xff]
        %v725 = vld [vmem:[%s637 + $0x160] sm:$0xff]
        %v726 = vld [vmem:[%s637 + $0x168] sm:$0xff]
        %v727 = vld [vmem:[%s637 + $0x170] sm:$0xff]
        %v728 = vld [vmem:[%s637 + $0x178] sm:$0xff]
        %v729 = vld [vmem:[%s645] sm:$0xff]
        %v730 = vld [vmem:[%s645 + $0x8] sm:$0xff]
        %v731 = vld [vmem:[%s645 + $0x10] sm:$0xff]
        %v732 = vld [vmem:[%s645 + $0x18] sm:$0xff]
        %v733 = vld [vmem:[%s645 + $0x20] sm:$0xff]
        %v734 = vld [vmem:[%s645 + $0x28] sm:$0xff]
        %v735 = vld [vmem:[%s645 + $0x30] sm:$0xff]
        %v736 = vld [vmem:[%s645 + $0x38] sm:$0xff]
        %v737 = vld [vmem:[%s645 + $0x40] sm:$0xff]
        %v738 = vld [vmem:[%s645 + $0x48] sm:$0xff]
        %v739 = vld [vmem:[%s645 + $0x50] sm:$0xff]
        %v740 = vld [vmem:[%s645 + $0x58] sm:$0xff]
        %v741 = vld [vmem:[%s645 + $0x60] sm:$0xff]
        %v742 = vld [vmem:[%s645 + $0x68] sm:$0xff]
        %v743 = vld [vmem:[%s645 + $0x70] sm:$0xff]
        %v744 = vld [vmem:[%s645 + $0x78] sm:$0xff]
        %v745 = vld [vmem:[%s645 + $0x80] sm:$0xff]
        %v746 = vld [vmem:[%s645 + $0x88] sm:$0xff]
        %v747 = vld [vmem:[%s645 + $0x90] sm:$0xff]
        %v748 = vld [vmem:[%s645 + $0x98] sm:$0xff]
        %v749 = vld [vmem:[%s645 + $0xa0] sm:$0xff]
        %v750 = vld [vmem:[%s645 + $0xa8] sm:$0xff]
        %v751 = vld [vmem:[%s645 + $0xb0] sm:$0xff]
        %v752 = vld [vmem:[%s645 + $0xb8] sm:$0xff]
        %v753 = vld [vmem:[%s645 + $0xc0] sm:$0xff]
        %v754 = vld [vmem:[%s645 + $0xc8] sm:$0xff]
        %v755 = vld [vmem:[%s645 + $0xd0] sm:$0xff]
        %v756 = vld [vmem:[%s645 + $0xd8] sm:$0xff]
        %v757 = vld [vmem:[%s645 + $0xe0] sm:$0xff]
        %v758 = vld [vmem:[%s645 + $0xe8] sm:$0xff]
        %v759 = vld [vmem:[%s645 + $0xf0] sm:$0xff]
        %v760 = vld [vmem:[%s645 + $0xf8] sm:$0xff]
        %v761 = vld [vmem:[%s645 + $0x100] sm:$0xff]
        %v762 = vld [vmem:[%s645 + $0x108] sm:$0xff]
        %v763 = vld [vmem:[%s645 + $0x110] sm:$0xff]
        %v764 = vld [vmem:[%s645 + $0x118] sm:$0xff]
        %v765 = vld [vmem:[%s645 + $0x120] sm:$0xff]
        %v766 = vld [vmem:[%s645 + $0x128] sm:$0xff]
        %v767 = vld [vmem:[%s645 + $0x130] sm:$0xff]
        %v768 = vld [vmem:[%s645 + $0x138] sm:$0xff]
        %v769 = vld [vmem:[%s645 + $0x140] sm:$0xff]
        %v770 = vld [vmem:[%s645 + $0x148] sm:$0xff]
        %v771 = vld [vmem:[%s645 + $0x150] sm:$0xff]
        %v772 = vld [vmem:[%s645 + $0x158] sm:$0xff]
        %v773 = vld [vmem:[%s645 + $0x160] sm:$0xff]
        %v774 = vld [vmem:[%s645 + $0x168] sm:$0xff]
        %v775 = vld [vmem:[%s645 + $0x170] sm:$0xff]
        %v776 = vld [vmem:[%s645 + $0x178] sm:$0xff]
        %v777 = vmul.f32 %v681, %v729
        %v778 = vmul.f32 %v682, %v730
        %v779 = vmul.f32 %v683, %v731
        %v780 = vmul.f32 %v684, %v732
        %v781 = vmul.f32 %v685, %v733
        %v782 = vmul.f32 %v686, %v734
        %v783 = vmul.f32 %v687, %v735
        %v784 = vmul.f32 %v688, %v736
        %v785 = vmul.f32 %v689, %v737
        %v786 = vmul.f32 %v690, %v738
        %v787 = vmul.f32 %v691, %v739
        %v788 = vmul.f32 %v692, %v740
        %v789 = vmul.f32 %v693, %v741
        %v790 = vmul.f32 %v694, %v742
        %v791 = vmul.f32 %v695, %v743
        %v792 = vmul.f32 %v696, %v744
        %v793 = vmul.f32 %v697, %v745
        %v794 = vmul.f32 %v698, %v746
        %v795 = vmul.f32 %v699, %v747
        %v796 = vmul.f32 %v700, %v748
        %v797 = vmul.f32 %v701, %v749
        %v798 = vmul.f32 %v702, %v750
        %v799 = vmul.f32 %v703, %v751
        %v800 = vmul.f32 %v704, %v752
        %v801 = vmul.f32 %v705, %v753
        %v802 = vmul.f32 %v706, %v754
        %v803 = vmul.f32 %v707, %v755
        %v804 = vmul.f32 %v708, %v756
        %v805 = vmul.f32 %v709, %v757
        %v806 = vmul.f32 %v710, %v758
        %v807 = vmul.f32 %v711, %v759
        %v808 = vmul.f32 %v712, %v760
        %v809 = vmul.f32 %v713, %v761
        %v810 = vmul.f32 %v714, %v762
        %v811 = vmul.f32 %v715, %v763
        %v812 = vmul.f32 %v716, %v764
        %v813 = vmul.f32 %v717, %v765
        %v814 = vmul.f32 %v718, %v766
        %v815 = vmul.f32 %v719, %v767
        %v816 = vmul.f32 %v720, %v768
        %v817 = vmul.f32 %v721, %v769
        %v818 = vmul.f32 %v722, %v770
        %v819 = vmul.f32 %v723, %v771
        %v820 = vmul.f32 %v724, %v772
        %v821 = vmul.f32 %v725, %v773
        %v822 = vmul.f32 %v726, %v774
        %v823 = vmul.f32 %v727, %v775
        %v824 = vmul.f32 %v728, %v776
        %v825 = vadd.f32 %v777, %v778
        %v826 = vadd.f32 %v825, %v779
        %v827 = vadd.f32 %v826, %v780
        %v828 = vadd.f32 %v827, %v781
        %v829 = vadd.f32 %v828, %v782
        %v830 = vadd.f32 %v829, %v783
        %v831 = vadd.f32 %v830, %v784
        %v832 = vadd.f32 %v831, %v785
        %v833 = vadd.f32 %v832, %v786
        %v834 = vadd.f32 %v833, %v787
        %v835 = vadd.f32 %v834, %v788
        %v836 = vadd.f32 %v835, %v789
        %v837 = vadd.f32 %v836, %v790
        %v838 = vadd.f32 %v837, %v791
        %v839 = vadd.f32 %v838, %v792
        %v840 = vadd.f32 %v839, %v793
        %v841 = vadd.f32 %v840, %v794
        %v842 = vadd.f32 %v841, %v795
        %v843 = vadd.f32 %v842, %v796
        %v844 = vadd.f32 %v843, %v797
        %v845 = vadd.f32 %v844, %v798
        %v846 = vadd.f32 %v845, %v799
        %v847 = vadd.f32 %v846, %v800
        %v848 = vadd.f32 %v847, %v801
        %v849 = vadd.f32 %v848, %v802
        %v850 = vadd.f32 %v849, %v803
        %v851 = vadd.f32 %v850, %v804
        %v852 = vadd.f32 %v851, %v805
        %v853 = vadd.f32 %v852, %v806
        %v854 = vadd.f32 %v853, %v807
        %v855 = vadd.f32 %v854, %v808
        %v856 = vadd.f32 %v855, %v809
        %v857 = vadd.f32 %v856, %v810
        %v858 = vadd.f32 %v857, %v811
        %v859 = vadd.f32 %v858, %v812
        %v860 = vadd.f32 %v859, %v813
        %v861 = vadd.f32 %v860, %v814
        %v862 = vadd.f32 %v861, %v815
        %v863 = vadd.f32 %v862, %v816
        %v864 = vadd.f32 %v863, %v817
        %v865 = vadd.f32 %v864, %v818
        %v866 = vadd.f32 %v865, %v819
        %v867 = vadd.f32 %v866, %v820
        %v868 = vadd.f32 %v867, %v821
        %v869 = vadd.f32 %v868, %v822
        %v870 = vadd.f32 %v869, %v823
        %v871 = vadd.f32 %v870, %v824
        %v872 = vrot.slane %v871, 4
        %v873 = vadd.f32 %v871, %v872
        %v874 = vrot.slane %v873, 2
        %v875 = vadd.f32 %v873, %v874
        %v876 = vrot.slane %v875, 1
        %v877 = vadd.f32 %v875, %v876
        %v878 = vld [vmem:[#allocation2] sm:$0x1]
        %v879 = vadd.f32 %v878, %v877
        %880 = vst [vmem:[#allocation2] sm:$0x1] %v879
        %s881 = scalar_lea.vmem %s645, 384 [#allocation4]
        %v882 = vld [vmem:[%s881] sm:$0xff]
        %v883 = vld [vmem:[%s881 + $0x8] sm:$0xff]
        %v884 = vld [vmem:[%s881 + $0x10] sm:$0xff]
        %v885 = vld [vmem:[%s881 + $0x18] sm:$0xff]
        %v886 = vld [vmem:[%s881 + $0x20] sm:$0xff]
        %v887 = vld [vmem:[%s881 + $0x28] sm:$0xff]
        %v888 = vld [vmem:[%s881 + $0x30] sm:$0xff]
        %v889 = vld [vmem:[%s881 + $0x38] sm:$0xff]
        %v890 = vld [vmem:[%s881 + $0x40] sm:$0xff]
        %v891 = vld [vmem:[%s881 + $0x48] sm:$0xff]
        %v892 = vld [vmem:[%s881 + $0x50] sm:$0xff]
        %v893 = vld [vmem:[%s881 + $0x58] sm:$0xff]
        %v894 = vld [vmem:[%s881 + $0x60] sm:$0xff]
        %v895 = vld [vmem:[%s881 + $0x68] sm:$0xff]
        %v896 = vld [vmem:[%s881 + $0x70] sm:$0xff]
        %v897 = vld [vmem:[%s881 + $0x78] sm:$0xff]
        %v898 = vld [vmem:[%s881 + $0x80] sm:$0xff]
        %v899 = vld [vmem:[%s881 + $0x88] sm:$0xff]
        %v900 = vld [vmem:[%s881 + $0x90] sm:$0xff]
        %v901 = vld [vmem:[%s881 + $0x98] sm:$0xff]
        %v902 = vld [vmem:[%s881 + $0xa0] sm:$0xff]
        %v903 = vld [vmem:[%s881 + $0xa8] sm:$0xff]
        %v904 = vld [vmem:[%s881 + $0xb0] sm:$0xff]
        %v905 = vld [vmem:[%s881 + $0xb8] sm:$0xff]
        %v906 = vld [vmem:[%s881 + $0xc0] sm:$0xff]
        %v907 = vld [vmem:[%s881 + $0xc8] sm:$0xff]
        %v908 = vld [vmem:[%s881 + $0xd0] sm:$0xff]
        %v909 = vld [vmem:[%s881 + $0xd8] sm:$0xff]
        %v910 = vld [vmem:[%s881 + $0xe0] sm:$0xff]
        %v911 = vld [vmem:[%s881 + $0xe8] sm:$0xff]
        %v912 = vld [vmem:[%s881 + $0xf0] sm:$0xff]
        %v913 = vld [vmem:[%s881 + $0xf8] sm:$0xff]
        %v914 = vld [vmem:[%s881 + $0x100] sm:$0xff]
        %v915 = vld [vmem:[%s881 + $0x108] sm:$0xff]
        %v916 = vld [vmem:[%s881 + $0x110] sm:$0xff]
        %v917 = vld [vmem:[%s881 + $0x118] sm:$0xff]
        %v918 = vld [vmem:[%s881 + $0x120] sm:$0xff]
        %v919 = vld [vmem:[%s881 + $0x128] sm:$0xff]
        %v920 = vld [vmem:[%s881 + $0x130] sm:$0xff]
        %v921 = vld [vmem:[%s881 + $0x138] sm:$0xff]
        %v922 = vld [vmem:[%s881 + $0x140] sm:$0xff]
        %v923 = vld [vmem:[%s881 + $0x148] sm:$0xff]
        %v924 = vld [vmem:[%s881 + $0x150] sm:$0xff]
        %v925 = vld [vmem:[%s881 + $0x158] sm:$0xff]
        %v926 = vld [vmem:[%s881 + $0x160] sm:$0xff]
        %v927 = vld [vmem:[%s881 + $0x168] sm:$0xff]
        %v928 = vld [vmem:[%s881 + $0x170] sm:$0xff]
        %v929 = vld [vmem:[%s881 + $0x178] sm:$0xff]
        %v930 = vmul.f32 %v681, %v882
        %v931 = vmul.f32 %v682, %v883
        %v932 = vmul.f32 %v683, %v884
        %v933 = vmul.f32 %v684, %v885
        %v934 = vmul.f32 %v685, %v886
        %v935 = vmul.f32 %v686, %v887
        %v936 = vmul.f32 %v687, %v888
        %v937 = vmul.f32 %v688, %v889
        %v938 = vmul.f32 %v689, %v890
        %v939 = vmul.f32 %v690, %v891
        %v940 = vmul.f32 %v691, %v892
        %v941 = vmul.f32 %v692, %v893
        %v942 = vmul.f32 %v693, %v894
        %v943 = vmul.f32 %v694, %v895
        %v944 = vmul.f32 %v695, %v896
        %v945 = vmul.f32 %v696, %v897
        %v946 = vmul.f32 %v697, %v898
        %v947 = vmul.f32 %v698, %v899
        %v948 = vmul.f32 %v699, %v900
        %v949 = vmul.f32 %v700, %v901
        %v950 = vmul.f32 %v701, %v902
        %v951 = vmul.f32 %v702, %v903
        %v952 = vmul.f32 %v703, %v904
        %v953 = vmul.f32 %v704, %v905
        %v954 = vmul.f32 %v705, %v906
        %v955 = vmul.f32 %v706, %v907
        %v956 = vmul.f32 %v707, %v908
        %v957 = vmul.f32 %v708, %v909
        %v958 = vmul.f32 %v709, %v910
        %v959 = vmul.f32 %v710, %v911
        %v960 = vmul.f32 %v711, %v912
        %v961 = vmul.f32 %v712, %v913
        %v962 = vmul.f32 %v713, %v914
        %v963 = vmul.f32 %v714, %v915
        %v964 = vmul.f32 %v715, %v916
        %v965 = vmul.f32 %v716, %v917
        %v966 = vmul.f32 %v717, %v918
        %v967 = vmul.f32 %v718, %v919
        %v968 = vmul.f32 %v719, %v920
        %v969 = vmul.f32 %v720, %v921
        %v970 = vmul.f32 %v721, %v922
        %v971 = vmul.f32 %v722, %v923
        %v972 = vmul.f32 %v723, %v924
        %v973 = vmul.f32 %v724, %v925
        %v974 = vmul.f32 %v725, %v926
        %v975 = vmul.f32 %v726, %v927
        %v976 = vmul.f32 %v727, %v928
        %v977 = vmul.f32 %v728, %v929
        %v978 = vadd.f32 %v930, %v931
        %v979 = vadd.f32 %v978, %v932
        %v980 = vadd.f32 %v979, %v933
        %v981 = vadd.f32 %v980, %v934
        %v982 = vadd.f32 %v981, %v935
        %v983 = vadd.f32 %v982, %v936
        %v984 = vadd.f32 %v983, %v937
        %v985 = vadd.f32 %v984, %v938
        %v986 = vadd.f32 %v985, %v939
        %v987 = vadd.f32 %v986, %v940
        %v988 = vadd.f32 %v987, %v941
        %v989 = vadd.f32 %v988, %v942
        %v990 = vadd.f32 %v989, %v943
        %v991 = vadd.f32 %v990, %v944
        %v992 = vadd.f32 %v991, %v945
        %v993 = vadd.f32 %v992, %v946
        %v994 = vadd.f32 %v993, %v947
        %v995 = vadd.f32 %v994, %v948
        %v996 = vadd.f32 %v995, %v949
        %v997 = vadd.f32 %v996, %v950
        %v998 = vadd.f32 %v997, %v951
        %v999 = vadd.f32 %v998, %v952
        %v1000 = vadd.f32 %v999, %v953
        %v1001 = vadd.f32 %v1000, %v954
        %v1002 = vadd.f32 %v1001, %v955
        %v1003 = vadd.f32 %v1002, %v956
        %v1004 = vadd.f32 %v1003, %v957
        %v1005 = vadd.f32 %v1004, %v958
        %v1006 = vadd.f32 %v1005, %v959
        %v1007 = vadd.f32 %v1006, %v960
        %v1008 = vadd.f32 %v1007, %v961
        %v1009 = vadd.f32 %v1008, %v962
        %v1010 = vadd.f32 %v1009, %v963
        %v1011 = vadd.f32 %v1010, %v964
        %v1012 = vadd.f32 %v1011, %v965
        %v1013 = vadd.f32 %v1012, %v966
        %v1014 = vadd.f32 %v1013, %v967
        %v1015 = vadd.f32 %v1014, %v968
        %v1016 = vadd.f32 %v1015, %v969
        %v1017 = vadd.f32 %v1016, %v970
        %v1018 = vadd.f32 %v1017, %v971
        %v1019 = vadd.f32 %v1018, %v972
        %v1020 = vadd.f32 %v1019, %v973
        %v1021 = vadd.f32 %v1020, %v974
        %v1022 = vadd.f32 %v1021, %v975
        %v1023 = vadd.f32 %v1022, %v976
        %v1024 = vadd.f32 %v1023, %v977
        %v1025 = vrot.slane %v1024, 4
        %v1026 = vadd.f32 %v1024, %v1025
        %v1027 = vrot.slane %v1026, 2
        %v1028 = vadd.f32 %v1026, %v1027
        %v1029 = vrot.slane %v1028, 1
        %v1030 = vadd.f32 %v1028, %v1029
        %v1031 = vld [vmem:[#allocation2 + $0x1] sm:$0x1]
        %v1032 = vadd.f32 %v1031, %v1030
        %1033 = vst [vmem:[#allocation2 + $0x1] sm:$0x1] %v1032
        %s1034 = scalar_lea.vmem %s645, 768 [#allocation4]
        %v1035 = vld [vmem:[%s1034] sm:$0xff]
        %v1036 = vld [vmem:[%s1034 + $0x8] sm:$0xff]
        %v1037 = vld [vmem:[%s1034 + $0x10] sm:$0xff]
        %v1038 = vld [vmem:[%s1034 + $0x18] sm:$0xff]
        %v1039 = vld [vmem:[%s1034 + $0x20] sm:$0xff]
        %v1040 = vld [vmem:[%s1034 + $0x28] sm:$0xff]
        %v1041 = vld [vmem:[%s1034 + $0x30] sm:$0xff]
        %v1042 = vld [vmem:[%s1034 + $0x38] sm:$0xff]
        %v1043 = vld [vmem:[%s1034 + $0x40] sm:$0xff]
        %v1044 = vld [vmem:[%s1034 + $0x48] sm:$0xff]
        %v1045 = vld [vmem:[%s1034 + $0x50] sm:$0xff]
        %v1046 = vld [vmem:[%s1034 + $0x58] sm:$0xff]
        %v1047 = vld [vmem:[%s1034 + $0x60] sm:$0xff]
        %v1048 = vld [vmem:[%s1034 + $0x68] sm:$0xff]
        %v1049 = vld [vmem:[%s1034 + $0x70] sm:$0xff]
        %v1050 = vld [vmem:[%s1034 + $0x78] sm:$0xff]
        %v1051 = vld [vmem:[%s1034 + $0x80] sm:$0xff]
        %v1052 = vld [vmem:[%s1034 + $0x88] sm:$0xff]
        %v1053 = vld [vmem:[%s1034 + $0x90] sm:$0xff]
        %v1054 = vld [vmem:[%s1034 + $0x98] sm:$0xff]
        %v1055 = vld [vmem:[%s1034 + $0xa0] sm:$0xff]
        %v1056 = vld [vmem:[%s1034 + $0xa8] sm:$0xff]
        %v1057 = vld [vmem:[%s1034 + $0xb0] sm:$0xff]
        %v1058 = vld [vmem:[%s1034 + $0xb8] sm:$0xff]
        %v1059 = vld [vmem:[%s1034 + $0xc0] sm:$0xff]
        %v1060 = vld [vmem:[%s1034 + $0xc8] sm:$0xff]
        %v1061 = vld [vmem:[%s1034 + $0xd0] sm:$0xff]
        %v1062 = vld [vmem:[%s1034 + $0xd8] sm:$0xff]
        %v1063 = vld [vmem:[%s1034 + $0xe0] sm:$0xff]
        %v1064 = vld [vmem:[%s1034 + $0xe8] sm:$0xff]
        %v1065 = vld [vmem:[%s1034 + $0xf0] sm:$0xff]
        %v1066 = vld [vmem:[%s1034 + $0xf8] sm:$0xff]
        %v1067 = vld [vmem:[%s1034 + $0x100] sm:$0xff]
        %v1068 = vld [vmem:[%s1034 + $0x108] sm:$0xff]
        %v1069 = vld [vmem:[%s1034 + $0x110] sm:$0xff]
        %v1070 = vld [vmem:[%s1034 + $0x118] sm:$0xff]
        %v1071 = vld [vmem:[%s1034 + $0x120] sm:$0xff]
        %v1072 = vld [vmem:[%s1034 + $0x128] sm:$0xff]
        %v1073 = vld [vmem:[%s1034 + $0x130] sm:$0xff]
        %v1074 = vld [vmem:[%s1034 + $0x138] sm:$0xff]
        %v1075 = vld [vmem:[%s1034 + $0x140] sm:$0xff]
        %v1076 = vld [vmem:[%s1034 + $0x148] sm:$0xff]
        %v1077 = vld [vmem:[%s1034 + $0x150] sm:$0xff]
        %v1078 = vld [vmem:[%s1034 + $0x158] sm:$0xff]
        %v1079 = vld [vmem:[%s1034 + $0x160] sm:$0xff]
        %v1080 = vld [vmem:[%s1034 + $0x168] sm:$0xff]
        %v1081 = vld [vmem:[%s1034 + $0x170] sm:$0xff]
        %v1082 = vld [vmem:[%s1034 + $0x178] sm:$0xff]
        %v1083 = vmul.f32 %v681, %v1035
        %v1084 = vmul.f32 %v682, %v1036
        %v1085 = vmul.f32 %v683, %v1037
        %v1086 = vmul.f32 %v684, %v1038
        %v1087 = vmul.f32 %v685, %v1039
        %v1088 = vmul.f32 %v686, %v1040
        %v1089 = vmul.f32 %v687, %v1041
        %v1090 = vmul.f32 %v688, %v1042
        %v1091 = vmul.f32 %v689, %v1043
        %v1092 = vmul.f32 %v690, %v1044
        %v1093 = vmul.f32 %v691, %v1045
        %v1094 = vmul.f32 %v692, %v1046
        %v1095 = vmul.f32 %v693, %v1047
        %v1096 = vmul.f32 %v694, %v1048
        %v1097 = vmul.f32 %v695, %v1049
        %v1098 = vmul.f32 %v696, %v1050
        %v1099 = vmul.f32 %v697, %v1051
        %v1100 = vmul.f32 %v698, %v1052
        %v1101 = vmul.f32 %v699, %v1053
        %v1102 = vmul.f32 %v700, %v1054
        %v1103 = vmul.f32 %v701, %v1055
        %v1104 = vmul.f32 %v702, %v1056
        %v1105 = vmul.f32 %v703, %v1057
        %v1106 = vmul.f32 %v704, %v1058
        %v1107 = vmul.f32 %v705, %v1059
        %v1108 = vmul.f32 %v706, %v1060
        %v1109 = vmul.f32 %v707, %v1061
        %v1110 = vmul.f32 %v708, %v1062
        %v1111 = vmul.f32 %v709, %v1063
        %v1112 = vmul.f32 %v710, %v1064
        %v1113 = vmul.f32 %v711, %v1065
        %v1114 = vmul.f32 %v712, %v1066
        %v1115 = vmul.f32 %v713, %v1067
        %v1116 = vmul.f32 %v714, %v1068
        %v1117 = vmul.f32 %v715, %v1069
        %v1118 = vmul.f32 %v716, %v1070
        %v1119 = vmul.f32 %v717, %v1071
        %v1120 = vmul.f32 %v718, %v1072
        %v1121 = vmul.f32 %v719, %v1073
        %v1122 = vmul.f32 %v720, %v1074
        %v1123 = vmul.f32 %v721, %v1075
        %v1124 = vmul.f32 %v722, %v1076
        %v1125 = vmul.f32 %v723, %v1077
        %v1126 = vmul.f32 %v724, %v1078
        %v1127 = vmul.f32 %v725, %v1079
        %v1128 = vmul.f32 %v726, %v1080
        %v1129 = vmul.f32 %v727, %v1081
        %v1130 = vmul.f32 %v728, %v1082
        %v1131 = vadd.f32 %v1083, %v1084
        %v1132 = vadd.f32 %v1131, %v1085
        %v1133 = vadd.f32 %v1132, %v1086
        %v1134 = vadd.f32 %v1133, %v1087
        %v1135 = vadd.f32 %v1134, %v1088
        %v1136 = vadd.f32 %v1135, %v1089
        %v1137 = vadd.f32 %v1136, %v1090
        %v1138 = vadd.f32 %v1137, %v1091
        %v1139 = vadd.f32 %v1138, %v1092
        %v1140 = vadd.f32 %v1139, %v1093
        %v1141 = vadd.f32 %v1140, %v1094
        %v1142 = vadd.f32 %v1141, %v1095
        %v1143 = vadd.f32 %v1142, %v1096
        %v1144 = vadd.f32 %v1143, %v1097
        %v1145 = vadd.f32 %v1144, %v1098
        %v1146 = vadd.f32 %v1145, %v1099
        %v1147 = vadd.f32 %v1146, %v1100
        %v1148 = vadd.f32 %v1147, %v1101
        %v1149 = vadd.f32 %v1148, %v1102
        %v1150 = vadd.f32 %v1149, %v1103
        %v1151 = vadd.f32 %v1150, %v1104
        %v1152 = vadd.f32 %v1151, %v1105
        %v1153 = vadd.f32 %v1152, %v1106
        %v1154 = vadd.f32 %v1153, %v1107
        %v1155 = vadd.f32 %v1154, %v1108
        %v1156 = vadd.f32 %v1155, %v1109
        %v1157 = vadd.f32 %v1156, %v1110
        %v1158 = vadd.f32 %v1157, %v1111
        %v1159 = vadd.f32 %v1158, %v1112
        %v1160 = vadd.f32 %v1159, %v1113
        %v1161 = vadd.f32 %v1160, %v1114
        %v1162 = vadd.f32 %v1161, %v1115
        %v1163 = vadd.f32 %v1162, %v1116
        %v1164 = vadd.f32 %v1163, %v1117
        %v1165 = vadd.f32 %v1164, %v1118
        %v1166 = vadd.f32 %v1165, %v1119
        %v1167 = vadd.f32 %v1166, %v1120
        %v1168 = vadd.f32 %v1167, %v1121
        %v1169 = vadd.f32 %v1168, %v1122
        %v1170 = vadd.f32 %v1169, %v1123
        %v1171 = vadd.f32 %v1170, %v1124
        %v1172 = vadd.f32 %v1171, %v1125
        %v1173 = vadd.f32 %v1172, %v1126
        %v1174 = vadd.f32 %v1173, %v1127
        %v1175 = vadd.f32 %v1174, %v1128
        %v1176 = vadd.f32 %v1175, %v1129
        %v1177 = vadd.f32 %v1176, %v1130
        %v1178 = vrot.slane %v1177, 4
        %v1179 = vadd.f32 %v1177, %v1178
        %v1180 = vrot.slane %v1179, 2
        %v1181 = vadd.f32 %v1179, %v1180
        %v1182 = vrot.slane %v1181, 1
        %v1183 = vadd.f32 %v1181, %v1182
        %v1184 = vld [vmem:[#allocation2 + $0x2] sm:$0x1]
        %v1185 = vadd.f32 %v1184, %v1183
        %1186 = vst [vmem:[#allocation2 + $0x2] sm:$0x1] %v1185
        %s1187 = scalar_lea.vmem %s645, 1152 [#allocation4]
        %v1188 = vld [vmem:[%s1187] sm:$0xff]
        %v1189 = vld [vmem:[%s1187 + $0x8] sm:$0xff]
        %v1190 = vld [vmem:[%s1187 + $0x10] sm:$0xff]
        %v1191 = vld [vmem:[%s1187 + $0x18] sm:$0xff]
        %v1192 = vld [vmem:[%s1187 + $0x20] sm:$0xff]
        %v1193 = vld [vmem:[%s1187 + $0x28] sm:$0xff]
        %v1194 = vld [vmem:[%s1187 + $0x30] sm:$0xff]
        %v1195 = vld [vmem:[%s1187 + $0x38] sm:$0xff]
        %v1196 = vld [vmem:[%s1187 + $0x40] sm:$0xff]
        %v1197 = vld [vmem:[%s1187 + $0x48] sm:$0xff]
        %v1198 = vld [vmem:[%s1187 + $0x50] sm:$0xff]
        %v1199 = vld [vmem:[%s1187 + $0x58] sm:$0xff]
        %v1200 = vld [vmem:[%s1187 + $0x60] sm:$0xff]
        %v1201 = vld [vmem:[%s1187 + $0x68] sm:$0xff]
        %v1202 = vld [vmem:[%s1187 + $0x70] sm:$0xff]
        %v1203 = vld [vmem:[%s1187 + $0x78] sm:$0xff]
        %v1204 = vld [vmem:[%s1187 + $0x80] sm:$0xff]
        %v1205 = vld [vmem:[%s1187 + $0x88] sm:$0xff]
        %v1206 = vld [vmem:[%s1187 + $0x90] sm:$0xff]
        %v1207 = vld [vmem:[%s1187 + $0x98] sm:$0xff]
        %v1208 = vld [vmem:[%s1187 + $0xa0] sm:$0xff]
        %v1209 = vld [vmem:[%s1187 + $0xa8] sm:$0xff]
        %v1210 = vld [vmem:[%s1187 + $0xb0] sm:$0xff]
        %v1211 = vld [vmem:[%s1187 + $0xb8] sm:$0xff]
        %v1212 = vld [vmem:[%s1187 + $0xc0] sm:$0xff]
        %v1213 = vld [vmem:[%s1187 + $0xc8] sm:$0xff]
        %v1214 = vld [vmem:[%s1187 + $0xd0] sm:$0xff]
        %v1215 = vld [vmem:[%s1187 + $0xd8] sm:$0xff]
        %v1216 = vld [vmem:[%s1187 + $0xe0] sm:$0xff]
        %v1217 = vld [vmem:[%s1187 + $0xe8] sm:$0xff]
        %v1218 = vld [vmem:[%s1187 + $0xf0] sm:$0xff]
        %v1219 = vld [vmem:[%s1187 + $0xf8] sm:$0xff]
        %v1220 = vld [vmem:[%s1187 + $0x100] sm:$0xff]
        %v1221 = vld [vmem:[%s1187 + $0x108] sm:$0xff]
        %v1222 = vld [vmem:[%s1187 + $0x110] sm:$0xff]
        %v1223 = vld [vmem:[%s1187 + $0x118] sm:$0xff]
        %v1224 = vld [vmem:[%s1187 + $0x120] sm:$0xff]
        %v1225 = vld [vmem:[%s1187 + $0x128] sm:$0xff]
        %v1226 = vld [vmem:[%s1187 + $0x130] sm:$0xff]
        %v1227 = vld [vmem:[%s1187 + $0x138] sm:$0xff]
        %v1228 = vld [vmem:[%s1187 + $0x140] sm:$0xff]
        %v1229 = vld [vmem:[%s1187 + $0x148] sm:$0xff]
        %v1230 = vld [vmem:[%s1187 + $0x150] sm:$0xff]
        %v1231 = vld [vmem:[%s1187 + $0x158] sm:$0xff]
        %v1232 = vld [vmem:[%s1187 + $0x160] sm:$0xff]
        %v1233 = vld [vmem:[%s1187 + $0x168] sm:$0xff]
        %v1234 = vld [vmem:[%s1187 + $0x170] sm:$0xff]
        %v1235 = vld [vmem:[%s1187 + $0x178] sm:$0xff]
        %v1236 = vmul.f32 %v681, %v1188
        %v1237 = vmul.f32 %v682, %v1189
        %v1238 = vmul.f32 %v683, %v1190
        %v1239 = vmul.f32 %v684, %v1191
        %v1240 = vmul.f32 %v685, %v1192
        %v1241 = vmul.f32 %v686, %v1193
        %v1242 = vmul.f32 %v687, %v1194
        %v1243 = vmul.f32 %v688, %v1195
        %v1244 = vmul.f32 %v689, %v1196
        %v1245 = vmul.f32 %v690, %v1197
        %v1246 = vmul.f32 %v691, %v1198
        %v1247 = vmul.f32 %v692, %v1199
        %v1248 = vmul.f32 %v693, %v1200
        %v1249 = vmul.f32 %v694, %v1201
        %v1250 = vmul.f32 %v695, %v1202
        %v1251 = vmul.f32 %v696, %v1203
        %v1252 = vmul.f32 %v697, %v1204
        %v1253 = vmul.f32 %v698, %v1205
        %v1254 = vmul.f32 %v699, %v1206
        %v1255 = vmul.f32 %v700, %v1207
        %v1256 = vmul.f32 %v701, %v1208
        %v1257 = vmul.f32 %v702, %v1209
        %v1258 = vmul.f32 %v703, %v1210
        %v1259 = vmul.f32 %v704, %v1211
        %v1260 = vmul.f32 %v705, %v1212
        %v1261 = vmul.f32 %v706, %v1213
        %v1262 = vmul.f32 %v707, %v1214
        %v1263 = vmul.f32 %v708, %v1215
        %v1264 = vmul.f32 %v709, %v1216
        %v1265 = vmul.f32 %v710, %v1217
        %v1266 = vmul.f32 %v711, %v1218
        %v1267 = vmul.f32 %v712, %v1219
        %v1268 = vmul.f32 %v713, %v1220
        %v1269 = vmul.f32 %v714, %v1221
        %v1270 = vmul.f32 %v715, %v1222
        %v1271 = vmul.f32 %v716, %v1223
        %v1272 = vmul.f32 %v717, %v1224
        %v1273 = vmul.f32 %v718, %v1225
        %v1274 = vmul.f32 %v719, %v1226
        %v1275 = vmul.f32 %v720, %v1227
        %v1276 = vmul.f32 %v721, %v1228
        %v1277 = vmul.f32 %v722, %v1229
        %v1278 = vmul.f32 %v723, %v1230
        %v1279 = vmul.f32 %v724, %v1231
        %v1280 = vmul.f32 %v725, %v1232
        %v1281 = vmul.f32 %v726, %v1233
        %v1282 = vmul.f32 %v727, %v1234
        %v1283 = vmul.f32 %v728, %v1235
        %v1284 = vadd.f32 %v1236, %v1237
        %v1285 = vadd.f32 %v1284, %v1238
        %v1286 = vadd.f32 %v1285, %v1239
        %v1287 = vadd.f32 %v1286, %v1240
        %v1288 = vadd.f32 %v1287, %v1241
        %v1289 = vadd.f32 %v1288, %v1242
        %v1290 = vadd.f32 %v1289, %v1243
        %v1291 = vadd.f32 %v1290, %v1244
        %v1292 = vadd.f32 %v1291, %v1245
        %v1293 = vadd.f32 %v1292, %v1246
        %v1294 = vadd.f32 %v1293, %v1247
        %v1295 = vadd.f32 %v1294, %v1248
        %v1296 = vadd.f32 %v1295, %v1249
        %v1297 = vadd.f32 %v1296, %v1250
        %v1298 = vadd.f32 %v1297, %v1251
        %v1299 = vadd.f32 %v1298, %v1252
        %v1300 = vadd.f32 %v1299, %v1253
        %v1301 = vadd.f32 %v1300, %v1254
        %v1302 = vadd.f32 %v1301, %v1255
        %v1303 = vadd.f32 %v1302, %v1256
        %v1304 = vadd.f32 %v1303, %v1257
        %v1305 = vadd.f32 %v1304, %v1258
        %v1306 = vadd.f32 %v1305, %v1259
        %v1307 = vadd.f32 %v1306, %v1260
        %v1308 = vadd.f32 %v1307, %v1261
        %v1309 = vadd.f32 %v1308, %v1262
        %v1310 = vadd.f32 %v1309, %v1263
        %v1311 = vadd.f32 %v1310, %v1264
        %v1312 = vadd.f32 %v1311, %v1265
        %v1313 = vadd.f32 %v1312, %v1266
        %v1314 = vadd.f32 %v1313, %v1267
        %v1315 = vadd.f32 %v1314, %v1268
        %v1316 = vadd.f32 %v1315, %v1269
        %v1317 = vadd.f32 %v1316, %v1270
        %v1318 = vadd.f32 %v1317, %v1271
        %v1319 = vadd.f32 %v1318, %v1272
        %v1320 = vadd.f32 %v1319, %v1273
        %v1321 = vadd.f32 %v1320, %v1274
        %v1322 = vadd.f32 %v1321, %v1275
        %v1323 = vadd.f32 %v1322, %v1276
        %v1324 = vadd.f32 %v1323, %v1277
        %v1325 = vadd.f32 %v1324, %v1278
        %v1326 = vadd.f32 %v1325, %v1279
        %v1327 = vadd.f32 %v1326, %v1280
        %v1328 = vadd.f32 %v1327, %v1281
        %v1329 = vadd.f32 %v1328, %v1282
        %v1330 = vadd.f32 %v1329, %v1283
        %v1331 = vrot.slane %v1330, 4
        %v1332 = vadd.f32 %v1330, %v1331
        %v1333 = vrot.slane %v1332, 2
        %v1334 = vadd.f32 %v1332, %v1333
        %v1335 = vrot.slane %v1334, 1
        %v1336 = vadd.f32 %v1334, %v1335
        %v1337 = vld [vmem:[#allocation2 + $0x3] sm:$0x1]
        %v1338 = vadd.f32 %v1337, %v1336
        %1339 = vst [vmem:[#allocation2 + $0x3] sm:$0x1] %v1338
        %s1340 = scalar_lea.vmem %s645, 1536 [#allocation4]
        %v1341 = vld [vmem:[%s1340] sm:$0xff]
        %v1342 = vld [vmem:[%s1340 + $0x8] sm:$0xff]
        %v1343 = vld [vmem:[%s1340 + $0x10] sm:$0xff]
        %v1344 = vld [vmem:[%s1340 + $0x18] sm:$0xff]
        %v1345 = vld [vmem:[%s1340 + $0x20] sm:$0xff]
        %v1346 = vld [vmem:[%s1340 + $0x28] sm:$0xff]
        %v1347 = vld [vmem:[%s1340 + $0x30] sm:$0xff]
        %v1348 = vld [vmem:[%s1340 + $0x38] sm:$0xff]
        %v1349 = vld [vmem:[%s1340 + $0x40] sm:$0xff]
        %v1350 = vld [vmem:[%s1340 + $0x48] sm:$0xff]
        %v1351 = vld [vmem:[%s1340 + $0x50] sm:$0xff]
        %v1352 = vld [vmem:[%s1340 + $0x58] sm:$0xff]
        %v1353 = vld [vmem:[%s1340 + $0x60] sm:$0xff]
        %v1354 = vld [vmem:[%s1340 + $0x68] sm:$0xff]
        %v1355 = vld [vmem:[%s1340 + $0x70] sm:$0xff]
        %v1356 = vld [vmem:[%s1340 + $0x78] sm:$0xff]
        %v1357 = vld [vmem:[%s1340 + $0x80] sm:$0xff]
        %v1358 = vld [vmem:[%s1340 + $0x88] sm:$0xff]
        %v1359 = vld [vmem:[%s1340 + $0x90] sm:$0xff]
        %v1360 = vld [vmem:[%s1340 + $0x98] sm:$0xff]
        %v1361 = vld [vmem:[%s1340 + $0xa0] sm:$0xff]
        %v1362 = vld [vmem:[%s1340 + $0xa8] sm:$0xff]
        %v1363 = vld [vmem:[%s1340 + $0xb0] sm:$0xff]
        %v1364 = vld [vmem:[%s1340 + $0xb8] sm:$0xff]
        %v1365 = vld [vmem:[%s1340 + $0xc0] sm:$0xff]
        %v1366 = vld [vmem:[%s1340 + $0xc8] sm:$0xff]
        %v1367 = vld [vmem:[%s1340 + $0xd0] sm:$0xff]
        %v1368 = vld [vmem:[%s1340 + $0xd8] sm:$0xff]
        %v1369 = vld [vmem:[%s1340 + $0xe0] sm:$0xff]
        %v1370 = vld [vmem:[%s1340 + $0xe8] sm:$0xff]
        %v1371 = vld [vmem:[%s1340 + $0xf0] sm:$0xff]
        %v1372 = vld [vmem:[%s1340 + $0xf8] sm:$0xff]
        %v1373 = vld [vmem:[%s1340 + $0x100] sm:$0xff]
        %v1374 = vld [vmem:[%s1340 + $0x108] sm:$0xff]
        %v1375 = vld [vmem:[%s1340 + $0x110] sm:$0xff]
        %v1376 = vld [vmem:[%s1340 + $0x118] sm:$0xff]
        %v1377 = vld [vmem:[%s1340 + $0x120] sm:$0xff]
        %v1378 = vld [vmem:[%s1340 + $0x128] sm:$0xff]
        %v1379 = vld [vmem:[%s1340 + $0x130] sm:$0xff]
        %v1380 = vld [vmem:[%s1340 + $0x138] sm:$0xff]
        %v1381 = vld [vmem:[%s1340 + $0x140] sm:$0xff]
        %v1382 = vld [vmem:[%s1340 + $0x148] sm:$0xff]
        %v1383 = vld [vmem:[%s1340 + $0x150] sm:$0xff]
        %v1384 = vld [vmem:[%s1340 + $0x158] sm:$0xff]
        %v1385 = vld [vmem:[%s1340 + $0x160] sm:$0xff]
        %v1386 = vld [vmem:[%s1340 + $0x168] sm:$0xff]
        %v1387 = vld [vmem:[%s1340 + $0x170] sm:$0xff]
        %v1388 = vld [vmem:[%s1340 + $0x178] sm:$0xff]
        %v1389 = vmul.f32 %v681, %v1341
        %v1390 = vmul.f32 %v682, %v1342
        %v1391 = vmul.f32 %v683, %v1343
        %v1392 = vmul.f32 %v684, %v1344
        %v1393 = vmul.f32 %v685, %v1345
        %v1394 = vmul.f32 %v686, %v1346
        %v1395 = vmul.f32 %v687, %v1347
        %v1396 = vmul.f32 %v688, %v1348
        %v1397 = vmul.f32 %v689, %v1349
        %v1398 = vmul.f32 %v690, %v1350
        %v1399 = vmul.f32 %v691, %v1351
        %v1400 = vmul.f32 %v692, %v1352
        %v1401 = vmul.f32 %v693, %v1353
        %v1402 = vmul.f32 %v694, %v1354
        %v1403 = vmul.f32 %v695, %v1355
        %v1404 = vmul.f32 %v696, %v1356
        %v1405 = vmul.f32 %v697, %v1357
        %v1406 = vmul.f32 %v698, %v1358
        %v1407 = vmul.f32 %v699, %v1359
        %v1408 = vmul.f32 %v700, %v1360
        %v1409 = vmul.f32 %v701, %v1361
        %v1410 = vmul.f32 %v702, %v1362
        %v1411 = vmul.f32 %v703, %v1363
        %v1412 = vmul.f32 %v704, %v1364
        %v1413 = vmul.f32 %v705, %v1365
        %v1414 = vmul.f32 %v706, %v1366
        %v1415 = vmul.f32 %v707, %v1367
        %v1416 = vmul.f32 %v708, %v1368
        %v1417 = vmul.f32 %v709, %v1369
        %v1418 = vmul.f32 %v710, %v1370
        %v1419 = vmul.f32 %v711, %v1371
        %v1420 = vmul.f32 %v712, %v1372
        %v1421 = vmul.f32 %v713, %v1373
        %v1422 = vmul.f32 %v714, %v1374
        %v1423 = vmul.f32 %v715, %v1375
        %v1424 = vmul.f32 %v716, %v1376
        %v1425 = vmul.f32 %v717, %v1377
        %v1426 = vmul.f32 %v718, %v1378
        %v1427 = vmul.f32 %v719, %v1379
        %v1428 = vmul.f32 %v720, %v1380
        %v1429 = vmul.f32 %v721, %v1381
        %v1430 = vmul.f32 %v722, %v1382
        %v1431 = vmul.f32 %v723, %v1383
        %v1432 = vmul.f32 %v724, %v1384
        %v1433 = vmul.f32 %v725, %v1385
        %v1434 = vmul.f32 %v726, %v1386
        %v1435 = vmul.f32 %v727, %v1387
        %v1436 = vmul.f32 %v728, %v1388
        %v1437 = vadd.f32 %v1389, %v1390
        %v1438 = vadd.f32 %v1437, %v1391
        %v1439 = vadd.f32 %v1438, %v1392
        %v1440 = vadd.f32 %v1439, %v1393
        %v1441 = vadd.f32 %v1440, %v1394
        %v1442 = vadd.f32 %v1441, %v1395
        %v1443 = vadd.f32 %v1442, %v1396
        %v1444 = vadd.f32 %v1443, %v1397
        %v1445 = vadd.f32 %v1444, %v1398
        %v1446 = vadd.f32 %v1445, %v1399
        %v1447 = vadd.f32 %v1446, %v1400
        %v1448 = vadd.f32 %v1447, %v1401
        %v1449 = vadd.f32 %v1448, %v1402
        %v1450 = vadd.f32 %v1449, %v1403
        %v1451 = vadd.f32 %v1450, %v1404
        %v1452 = vadd.f32 %v1451, %v1405
        %v1453 = vadd.f32 %v1452, %v1406
        %v1454 = vadd.f32 %v1453, %v1407
        %v1455 = vadd.f32 %v1454, %v1408
        %v1456 = vadd.f32 %v1455, %v1409
        %v1457 = vadd.f32 %v1456, %v1410
        %v1458 = vadd.f32 %v1457, %v1411
        %v1459 = vadd.f32 %v1458, %v1412
        %v1460 = vadd.f32 %v1459, %v1413
        %v1461 = vadd.f32 %v1460, %v1414
        %v1462 = vadd.f32 %v1461, %v1415
        %v1463 = vadd.f32 %v1462, %v1416
        %v1464 = vadd.f32 %v1463, %v1417
        %v1465 = vadd.f32 %v1464, %v1418
        %v1466 = vadd.f32 %v1465, %v1419
        %v1467 = vadd.f32 %v1466, %v1420
        %v1468 = vadd.f32 %v1467, %v1421
        %v1469 = vadd.f32 %v1468, %v1422
        %v1470 = vadd.f32 %v1469, %v1423
        %v1471 = vadd.f32 %v1470, %v1424
        %v1472 = vadd.f32 %v1471, %v1425
        %v1473 = vadd.f32 %v1472, %v1426
        %v1474 = vadd.f32 %v1473, %v1427
        %v1475 = vadd.f32 %v1474, %v1428
        %v1476 = vadd.f32 %v1475, %v1429
        %v1477 = vadd.f32 %v1476, %v1430
        %v1478 = vadd.f32 %v1477, %v1431
        %v1479 = vadd.f32 %v1478, %v1432
        %v1480 = vadd.f32 %v1479, %v1433
        %v1481 = vadd.f32 %v1480, %v1434
        %v1482 = vadd.f32 %v1481, %v1435
        %v1483 = vadd.f32 %v1482, %v1436
        %v1484 = vrot.slane %v1483, 4
        %v1485 = vadd.f32 %v1483, %v1484
        %v1486 = vrot.slane %v1485, 2
        %v1487 = vadd.f32 %v1485, %v1486
        %v1488 = vrot.slane %v1487, 1
        %v1489 = vadd.f32 %v1487, %v1488
        %v1490 = vld [vmem:[#allocation2 + $0x4] sm:$0x1]
        %v1491 = vadd.f32 %v1490, %v1489
        %1492 = vst [vmem:[#allocation2 + $0x4] sm:$0x1] %v1491
        %s1493 = scalar_lea.vmem %s645, 1920 [#allocation4]
        %v1494 = vld [vmem:[%s1493] sm:$0xff]
        %v1495 = vld [vmem:[%s1493 + $0x8] sm:$0xff]
        %v1496 = vld [vmem:[%s1493 + $0x10] sm:$0xff]
        %v1497 = vld [vmem:[%s1493 + $0x18] sm:$0xff]
        %v1498 = vld [vmem:[%s1493 + $0x20] sm:$0xff]
        %v1499 = vld [vmem:[%s1493 + $0x28] sm:$0xff]
        %v1500 = vld [vmem:[%s1493 + $0x30] sm:$0xff]
        %v1501 = vld [vmem:[%s1493 + $0x38] sm:$0xff]
        %v1502 = vld [vmem:[%s1493 + $0x40] sm:$0xff]
        %v1503 = vld [vmem:[%s1493 + $0x48] sm:$0xff]
        %v1504 = vld [vmem:[%s1493 + $0x50] sm:$0xff]
        %v1505 = vld [vmem:[%s1493 + $0x58] sm:$0xff]
        %v1506 = vld [vmem:[%s1493 + $0x60] sm:$0xff]
        %v1507 = vld [vmem:[%s1493 + $0x68] sm:$0xff]
        %v1508 = vld [vmem:[%s1493 + $0x70] sm:$0xff]
        %v1509 = vld [vmem:[%s1493 + $0x78] sm:$0xff]
        %v1510 = vld [vmem:[%s1493 + $0x80] sm:$0xff]
        %v1511 = vld [vmem:[%s1493 + $0x88] sm:$0xff]
        %v1512 = vld [vmem:[%s1493 + $0x90] sm:$0xff]
        %v1513 = vld [vmem:[%s1493 + $0x98] sm:$0xff]
        %v1514 = vld [vmem:[%s1493 + $0xa0] sm:$0xff]
        %v1515 = vld [vmem:[%s1493 + $0xa8] sm:$0xff]
        %v1516 = vld [vmem:[%s1493 + $0xb0] sm:$0xff]
        %v1517 = vld [vmem:[%s1493 + $0xb8] sm:$0xff]
        %v1518 = vld [vmem:[%s1493 + $0xc0] sm:$0xff]
        %v1519 = vld [vmem:[%s1493 + $0xc8] sm:$0xff]
        %v1520 = vld [vmem:[%s1493 + $0xd0] sm:$0xff]
        %v1521 = vld [vmem:[%s1493 + $0xd8] sm:$0xff]
        %v1522 = vld [vmem:[%s1493 + $0xe0] sm:$0xff]
        %v1523 = vld [vmem:[%s1493 + $0xe8] sm:$0xff]
        %v1524 = vld [vmem:[%s1493 + $0xf0] sm:$0xff]
        %v1525 = vld [vmem:[%s1493 + $0xf8] sm:$0xff]
        %v1526 = vld [vmem:[%s1493 + $0x100] sm:$0xff]
        %v1527 = vld [vmem:[%s1493 + $0x108] sm:$0xff]
        %v1528 = vld [vmem:[%s1493 + $0x110] sm:$0xff]
        %v1529 = vld [vmem:[%s1493 + $0x118] sm:$0xff]
        %v1530 = vld [vmem:[%s1493 + $0x120] sm:$0xff]
        %v1531 = vld [vmem:[%s1493 + $0x128] sm:$0xff]
        %v1532 = vld [vmem:[%s1493 + $0x130] sm:$0xff]
        %v1533 = vld [vmem:[%s1493 + $0x138] sm:$0xff]
        %v1534 = vld [vmem:[%s1493 + $0x140] sm:$0xff]
        %v1535 = vld [vmem:[%s1493 + $0x148] sm:$0xff]
        %v1536 = vld [vmem:[%s1493 + $0x150] sm:$0xff]
        %v1537 = vld [vmem:[%s1493 + $0x158] sm:$0xff]
        %v1538 = vld [vmem:[%s1493 + $0x160] sm:$0xff]
        %v1539 = vld [vmem:[%s1493 + $0x168] sm:$0xff]
        %v1540 = vld [vmem:[%s1493 + $0x170] sm:$0xff]
        %v1541 = vld [vmem:[%s1493 + $0x178] sm:$0xff]
        %v1542 = vmul.f32 %v681, %v1494
        %v1543 = vmul.f32 %v682, %v1495
        %v1544 = vmul.f32 %v683, %v1496
        %v1545 = vmul.f32 %v684, %v1497
        %v1546 = vmul.f32 %v685, %v1498
        %v1547 = vmul.f32 %v686, %v1499
        %v1548 = vmul.f32 %v687, %v1500
        %v1549 = vmul.f32 %v688, %v1501
        %v1550 = vmul.f32 %v689, %v1502
        %v1551 = vmul.f32 %v690, %v1503
        %v1552 = vmul.f32 %v691, %v1504
        %v1553 = vmul.f32 %v692, %v1505
        %v1554 = vmul.f32 %v693, %v1506
        %v1555 = vmul.f32 %v694, %v1507
        %v1556 = vmul.f32 %v695, %v1508
        %v1557 = vmul.f32 %v696, %v1509
        %v1558 = vmul.f32 %v697, %v1510
        %v1559 = vmul.f32 %v698, %v1511
        %v1560 = vmul.f32 %v699, %v1512
        %v1561 = vmul.f32 %v700, %v1513
        %v1562 = vmul.f32 %v701, %v1514
        %v1563 = vmul.f32 %v702, %v1515
        %v1564 = vmul.f32 %v703, %v1516
        %v1565 = vmul.f32 %v704, %v1517
        %v1566 = vmul.f32 %v705, %v1518
        %v1567 = vmul.f32 %v706, %v1519
        %v1568 = vmul.f32 %v707, %v1520
        %v1569 = vmul.f32 %v708, %v1521
        %v1570 = vmul.f32 %v709, %v1522
        %v1571 = vmul.f32 %v710, %v1523
        %v1572 = vmul.f32 %v711, %v1524
        %v1573 = vmul.f32 %v712, %v1525
        %v1574 = vmul.f32 %v713, %v1526
        %v1575 = vmul.f32 %v714, %v1527
        %v1576 = vmul.f32 %v715, %v1528
        %v1577 = vmul.f32 %v716, %v1529
        %v1578 = vmul.f32 %v717, %v1530
        %v1579 = vmul.f32 %v718, %v1531
        %v1580 = vmul.f32 %v719, %v1532
        %v1581 = vmul.f32 %v720, %v1533
        %v1582 = vmul.f32 %v721, %v1534
        %v1583 = vmul.f32 %v722, %v1535
        %v1584 = vmul.f32 %v723, %v1536
        %v1585 = vmul.f32 %v724, %v1537
        %v1586 = vmul.f32 %v725, %v1538
        %v1587 = vmul.f32 %v726, %v1539
        %v1588 = vmul.f32 %v727, %v1540
        %v1589 = vmul.f32 %v728, %v1541
        %v1590 = vadd.f32 %v1542, %v1543
        %v1591 = vadd.f32 %v1590, %v1544
        %v1592 = vadd.f32 %v1591, %v1545
        %v1593 = vadd.f32 %v1592, %v1546
        %v1594 = vadd.f32 %v1593, %v1547
        %v1595 = vadd.f32 %v1594, %v1548
        %v1596 = vadd.f32 %v1595, %v1549
        %v1597 = vadd.f32 %v1596, %v1550
        %v1598 = vadd.f32 %v1597, %v1551
        %v1599 = vadd.f32 %v1598, %v1552
        %v1600 = vadd.f32 %v1599, %v1553
        %v1601 = vadd.f32 %v1600, %v1554
        %v1602 = vadd.f32 %v1601, %v1555
        %v1603 = vadd.f32 %v1602, %v1556
        %v1604 = vadd.f32 %v1603, %v1557
        %v1605 = vadd.f32 %v1604, %v1558
        %v1606 = vadd.f32 %v1605, %v1559
        %v1607 = vadd.f32 %v1606, %v1560
        %v1608 = vadd.f32 %v1607, %v1561
        %v1609 = vadd.f32 %v1608, %v1562
        %v1610 = vadd.f32 %v1609, %v1563
        %v1611 = vadd.f32 %v1610, %v1564
        %v1612 = vadd.f32 %v1611, %v1565
        %v1613 = vadd.f32 %v1612, %v1566
        %v1614 = vadd.f32 %v1613, %v1567
        %v1615 = vadd.f32 %v1614, %v1568
        %v1616 = vadd.f32 %v1615, %v1569
        %v1617 = vadd.f32 %v1616, %v1570
        %v1618 = vadd.f32 %v1617, %v1571
        %v1619 = vadd.f32 %v1618, %v1572
        %v1620 = vadd.f32 %v1619, %v1573
        %v1621 = vadd.f32 %v1620, %v1574
        %v1622 = vadd.f32 %v1621, %v1575
        %v1623 = vadd.f32 %v1622, %v1576
        %v1624 = vadd.f32 %v1623, %v1577
        %v1625 = vadd.f32 %v1624, %v1578
        %v1626 = vadd.f32 %v1625, %v1579
        %v1627 = vadd.f32 %v1626, %v1580
        %v1628 = vadd.f32 %v1627, %v1581
        %v1629 = vadd.f32 %v1628, %v1582
        %v1630 = vadd.f32 %v1629, %v1583
        %v1631 = vadd.f32 %v1630, %v1584
        %v1632 = vadd.f32 %v1631, %v1585
        %v1633 = vadd.f32 %v1632, %v1586
        %v1634 = vadd.f32 %v1633, %v1587
        %v1635 = vadd.f32 %v1634, %v1588
        %v1636 = vadd.f32 %v1635, %v1589
        %v1637 = vrot.slane %v1636, 4
        %v1638 = vadd.f32 %v1636, %v1637
        %v1639 = vrot.slane %v1638, 2
        %v1640 = vadd.f32 %v1638, %v1639
        %v1641 = vrot.slane %v1640, 1
        %v1642 = vadd.f32 %v1640, %v1641
        %v1643 = vld [vmem:[#allocation2 + $0x5] sm:$0x1]
        %v1644 = vadd.f32 %v1643, %v1642
        %1645 = vst [vmem:[#allocation2 + $0x5] sm:$0x1] %v1644
        %s1646 = scalar_lea.vmem %s645, 2304 [#allocation4]
        %v1647 = vld [vmem:[%s1646] sm:$0xff]
        %v1648 = vld [vmem:[%s1646 + $0x8] sm:$0xff]
        %v1649 = vld [vmem:[%s1646 + $0x10] sm:$0xff]
        %v1650 = vld [vmem:[%s1646 + $0x18] sm:$0xff]
        %v1651 = vld [vmem:[%s1646 + $0x20] sm:$0xff]
        %v1652 = vld [vmem:[%s1646 + $0x28] sm:$0xff]
        %v1653 = vld [vmem:[%s1646 + $0x30] sm:$0xff]
        %v1654 = vld [vmem:[%s1646 + $0x38] sm:$0xff]
        %v1655 = vld [vmem:[%s1646 + $0x40] sm:$0xff]
        %v1656 = vld [vmem:[%s1646 + $0x48] sm:$0xff]
        %v1657 = vld [vmem:[%s1646 + $0x50] sm:$0xff]
        %v1658 = vld [vmem:[%s1646 + $0x58] sm:$0xff]
        %v1659 = vld [vmem:[%s1646 + $0x60] sm:$0xff]
        %v1660 = vld [vmem:[%s1646 + $0x68] sm:$0xff]
        %v1661 = vld [vmem:[%s1646 + $0x70] sm:$0xff]
        %v1662 = vld [vmem:[%s1646 + $0x78] sm:$0xff]
        %v1663 = vld [vmem:[%s1646 + $0x80] sm:$0xff]
        %v1664 = vld [vmem:[%s1646 + $0x88] sm:$0xff]
        %v1665 = vld [vmem:[%s1646 + $0x90] sm:$0xff]
        %v1666 = vld [vmem:[%s1646 + $0x98] sm:$0xff]
        %v1667 = vld [vmem:[%s1646 + $0xa0] sm:$0xff]
        %v1668 = vld [vmem:[%s1646 + $0xa8] sm:$0xff]
        %v1669 = vld [vmem:[%s1646 + $0xb0] sm:$0xff]
        %v1670 = vld [vmem:[%s1646 + $0xb8] sm:$0xff]
        %v1671 = vld [vmem:[%s1646 + $0xc0] sm:$0xff]
        %v1672 = vld [vmem:[%s1646 + $0xc8] sm:$0xff]
        %v1673 = vld [vmem:[%s1646 + $0xd0] sm:$0xff]
        %v1674 = vld [vmem:[%s1646 + $0xd8] sm:$0xff]
        %v1675 = vld [vmem:[%s1646 + $0xe0] sm:$0xff]
        %v1676 = vld [vmem:[%s1646 + $0xe8] sm:$0xff]
        %v1677 = vld [vmem:[%s1646 + $0xf0] sm:$0xff]
        %v1678 = vld [vmem:[%s1646 + $0xf8] sm:$0xff]
        %v1679 = vld [vmem:[%s1646 + $0x100] sm:$0xff]
        %v1680 = vld [vmem:[%s1646 + $0x108] sm:$0xff]
        %v1681 = vld [vmem:[%s1646 + $0x110] sm:$0xff]
        %v1682 = vld [vmem:[%s1646 + $0x118] sm:$0xff]
        %v1683 = vld [vmem:[%s1646 + $0x120] sm:$0xff]
        %v1684 = vld [vmem:[%s1646 + $0x128] sm:$0xff]
        %v1685 = vld [vmem:[%s1646 + $0x130] sm:$0xff]
        %v1686 = vld [vmem:[%s1646 + $0x138] sm:$0xff]
        %v1687 = vld [vmem:[%s1646 + $0x140] sm:$0xff]
        %v1688 = vld [vmem:[%s1646 + $0x148] sm:$0xff]
        %v1689 = vld [vmem:[%s1646 + $0x150] sm:$0xff]
        %v1690 = vld [vmem:[%s1646 + $0x158] sm:$0xff]
        %v1691 = vld [vmem:[%s1646 + $0x160] sm:$0xff]
        %v1692 = vld [vmem:[%s1646 + $0x168] sm:$0xff]
        %v1693 = vld [vmem:[%s1646 + $0x170] sm:$0xff]
        %v1694 = vld [vmem:[%s1646 + $0x178] sm:$0xff]
        %v1695 = vmul.f32 %v681, %v1647
        %v1696 = vmul.f32 %v682, %v1648
        %v1697 = vmul.f32 %v683, %v1649
        %v1698 = vmul.f32 %v684, %v1650
        %v1699 = vmul.f32 %v685, %v1651
        %v1700 = vmul.f32 %v686, %v1652
        %v1701 = vmul.f32 %v687, %v1653
        %v1702 = vmul.f32 %v688, %v1654
        %v1703 = vmul.f32 %v689, %v1655
        %v1704 = vmul.f32 %v690, %v1656
        %v1705 = vmul.f32 %v691, %v1657
        %v1706 = vmul.f32 %v692, %v1658
        %v1707 = vmul.f32 %v693, %v1659
        %v1708 = vmul.f32 %v694, %v1660
        %v1709 = vmul.f32 %v695, %v1661
        %v1710 = vmul.f32 %v696, %v1662
        %v1711 = vmul.f32 %v697, %v1663
        %v1712 = vmul.f32 %v698, %v1664
        %v1713 = vmul.f32 %v699, %v1665
        %v1714 = vmul.f32 %v700, %v1666
        %v1715 = vmul.f32 %v701, %v1667
        %v1716 = vmul.f32 %v702, %v1668
        %v1717 = vmul.f32 %v703, %v1669
        %v1718 = vmul.f32 %v704, %v1670
        %v1719 = vmul.f32 %v705, %v1671
        %v1720 = vmul.f32 %v706, %v1672
        %v1721 = vmul.f32 %v707, %v1673
        %v1722 = vmul.f32 %v708, %v1674
        %v1723 = vmul.f32 %v709, %v1675
        %v1724 = vmul.f32 %v710, %v1676
        %v1725 = vmul.f32 %v711, %v1677
        %v1726 = vmul.f32 %v712, %v1678
        %v1727 = vmul.f32 %v713, %v1679
        %v1728 = vmul.f32 %v714, %v1680
        %v1729 = vmul.f32 %v715, %v1681
        %v1730 = vmul.f32 %v716, %v1682
        %v1731 = vmul.f32 %v717, %v1683
        %v1732 = vmul.f32 %v718, %v1684
        %v1733 = vmul.f32 %v719, %v1685
        %v1734 = vmul.f32 %v720, %v1686
        %v1735 = vmul.f32 %v721, %v1687
        %v1736 = vmul.f32 %v722, %v1688
        %v1737 = vmul.f32 %v723, %v1689
        %v1738 = vmul.f32 %v724, %v1690
        %v1739 = vmul.f32 %v725, %v1691
        %v1740 = vmul.f32 %v726, %v1692
        %v1741 = vmul.f32 %v727, %v1693
        %v1742 = vmul.f32 %v728, %v1694
        %v1743 = vadd.f32 %v1695, %v1696
        %v1744 = vadd.f32 %v1743, %v1697
        %v1745 = vadd.f32 %v1744, %v1698
        %v1746 = vadd.f32 %v1745, %v1699
        %v1747 = vadd.f32 %v1746, %v1700
        %v1748 = vadd.f32 %v1747, %v1701
        %v1749 = vadd.f32 %v1748, %v1702
        %v1750 = vadd.f32 %v1749, %v1703
        %v1751 = vadd.f32 %v1750, %v1704
        %v1752 = vadd.f32 %v1751, %v1705
        %v1753 = vadd.f32 %v1752, %v1706
        %v1754 = vadd.f32 %v1753, %v1707
        %v1755 = vadd.f32 %v1754, %v1708
        %v1756 = vadd.f32 %v1755, %v1709
        %v1757 = vadd.f32 %v1756, %v1710
        %v1758 = vadd.f32 %v1757, %v1711
        %v1759 = vadd.f32 %v1758, %v1712
        %v1760 = vadd.f32 %v1759, %v1713
        %v1761 = vadd.f32 %v1760, %v1714
        %v1762 = vadd.f32 %v1761, %v1715
        %v1763 = vadd.f32 %v1762, %v1716
        %v1764 = vadd.f32 %v1763, %v1717
        %v1765 = vadd.f32 %v1764, %v1718
        %v1766 = vadd.f32 %v1765, %v1719
        %v1767 = vadd.f32 %v1766, %v1720
        %v1768 = vadd.f32 %v1767, %v1721
        %v1769 = vadd.f32 %v1768, %v1722
        %v1770 = vadd.f32 %v1769, %v1723
        %v1771 = vadd.f32 %v1770, %v1724
        %v1772 = vadd.f32 %v1771, %v1725
        %v1773 = vadd.f32 %v1772, %v1726
        %v1774 = vadd.f32 %v1773, %v1727
        %v1775 = vadd.f32 %v1774, %v1728
        %v1776 = vadd.f32 %v1775, %v1729
        %v1777 = vadd.f32 %v1776, %v1730
        %v1778 = vadd.f32 %v1777, %v1731
        %v1779 = vadd.f32 %v1778, %v1732
        %v1780 = vadd.f32 %v1779, %v1733
        %v1781 = vadd.f32 %v1780, %v1734
        %v1782 = vadd.f32 %v1781, %v1735
        %v1783 = vadd.f32 %v1782, %v1736
        %v1784 = vadd.f32 %v1783, %v1737
        %v1785 = vadd.f32 %v1784, %v1738
        %v1786 = vadd.f32 %v1785, %v1739
        %v1787 = vadd.f32 %v1786, %v1740
        %v1788 = vadd.f32 %v1787, %v1741
        %v1789 = vadd.f32 %v1788, %v1742
        %v1790 = vrot.slane %v1789, 4
        %v1791 = vadd.f32 %v1789, %v1790
        %v1792 = vrot.slane %v1791, 2
        %v1793 = vadd.f32 %v1791, %v1792
        %v1794 = vrot.slane %v1793, 1
        %v1795 = vadd.f32 %v1793, %v1794
        %v1796 = vld [vmem:[#allocation2 + $0x6] sm:$0x1]
        %v1797 = vadd.f32 %v1796, %v1795
        %1798 = vst [vmem:[#allocation2 + $0x6] sm:$0x1] %v1797
        %s1799 = scalar_lea.vmem %s645, 2688 [#allocation4]
        %v1800 = vld [vmem:[%s1799] sm:$0xff]
        %v1801 = vld [vmem:[%s1799 + $0x8] sm:$0xff]
        %v1802 = vld [vmem:[%s1799 + $0x10] sm:$0xff]
        %v1803 = vld [vmem:[%s1799 + $0x18] sm:$0xff]
        %v1804 = vld [vmem:[%s1799 + $0x20] sm:$0xff]
        %v1805 = vld [vmem:[%s1799 + $0x28] sm:$0xff]
        %v1806 = vld [vmem:[%s1799 + $0x30] sm:$0xff]
        %v1807 = vld [vmem:[%s1799 + $0x38] sm:$0xff]
        %v1808 = vld [vmem:[%s1799 + $0x40] sm:$0xff]
        %v1809 = vld [vmem:[%s1799 + $0x48] sm:$0xff]
        %v1810 = vld [vmem:[%s1799 + $0x50] sm:$0xff]
        %v1811 = vld [vmem:[%s1799 + $0x58] sm:$0xff]
        %v1812 = vld [vmem:[%s1799 + $0x60] sm:$0xff]
        %v1813 = vld [vmem:[%s1799 + $0x68] sm:$0xff]
        %v1814 = vld [vmem:[%s1799 + $0x70] sm:$0xff]
        %v1815 = vld [vmem:[%s1799 + $0x78] sm:$0xff]
        %v1816 = vld [vmem:[%s1799 + $0x80] sm:$0xff]
        %v1817 = vld [vmem:[%s1799 + $0x88] sm:$0xff]
        %v1818 = vld [vmem:[%s1799 + $0x90] sm:$0xff]
        %v1819 = vld [vmem:[%s1799 + $0x98] sm:$0xff]
        %v1820 = vld [vmem:[%s1799 + $0xa0] sm:$0xff]
        %v1821 = vld [vmem:[%s1799 + $0xa8] sm:$0xff]
        %v1822 = vld [vmem:[%s1799 + $0xb0] sm:$0xff]
        %v1823 = vld [vmem:[%s1799 + $0xb8] sm:$0xff]
        %v1824 = vld [vmem:[%s1799 + $0xc0] sm:$0xff]
        %v1825 = vld [vmem:[%s1799 + $0xc8] sm:$0xff]
        %v1826 = vld [vmem:[%s1799 + $0xd0] sm:$0xff]
        %v1827 = vld [vmem:[%s1799 + $0xd8] sm:$0xff]
        %v1828 = vld [vmem:[%s1799 + $0xe0] sm:$0xff]
        %v1829 = vld [vmem:[%s1799 + $0xe8] sm:$0xff]
        %v1830 = vld [vmem:[%s1799 + $0xf0] sm:$0xff]
        %v1831 = vld [vmem:[%s1799 + $0xf8] sm:$0xff]
        %v1832 = vld [vmem:[%s1799 + $0x100] sm:$0xff]
        %v1833 = vld [vmem:[%s1799 + $0x108] sm:$0xff]
        %v1834 = vld [vmem:[%s1799 + $0x110] sm:$0xff]
        %v1835 = vld [vmem:[%s1799 + $0x118] sm:$0xff]
        %v1836 = vld [vmem:[%s1799 + $0x120] sm:$0xff]
        %v1837 = vld [vmem:[%s1799 + $0x128] sm:$0xff]
        %v1838 = vld [vmem:[%s1799 + $0x130] sm:$0xff]
        %v1839 = vld [vmem:[%s1799 + $0x138] sm:$0xff]
        %v1840 = vld [vmem:[%s1799 + $0x140] sm:$0xff]
        %v1841 = vld [vmem:[%s1799 + $0x148] sm:$0xff]
        %v1842 = vld [vmem:[%s1799 + $0x150] sm:$0xff]
        %v1843 = vld [vmem:[%s1799 + $0x158] sm:$0xff]
        %v1844 = vld [vmem:[%s1799 + $0x160] sm:$0xff]
        %v1845 = vld [vmem:[%s1799 + $0x168] sm:$0xff]
        %v1846 = vld [vmem:[%s1799 + $0x170] sm:$0xff]
        %v1847 = vld [vmem:[%s1799 + $0x178] sm:$0xff]
        %v1848 = vmul.f32 %v681, %v1800
        %v1849 = vmul.f32 %v682, %v1801
        %v1850 = vmul.f32 %v683, %v1802
        %v1851 = vmul.f32 %v684, %v1803
        %v1852 = vmul.f32 %v685, %v1804
        %v1853 = vmul.f32 %v686, %v1805
        %v1854 = vmul.f32 %v687, %v1806
        %v1855 = vmul.f32 %v688, %v1807
        %v1856 = vmul.f32 %v689, %v1808
        %v1857 = vmul.f32 %v690, %v1809
        %v1858 = vmul.f32 %v691, %v1810
        %v1859 = vmul.f32 %v692, %v1811
        %v1860 = vmul.f32 %v693, %v1812
        %v1861 = vmul.f32 %v694, %v1813
        %v1862 = vmul.f32 %v695, %v1814
        %v1863 = vmul.f32 %v696, %v1815
        %v1864 = vmul.f32 %v697, %v1816
        %v1865 = vmul.f32 %v698, %v1817
        %v1866 = vmul.f32 %v699, %v1818
        %v1867 = vmul.f32 %v700, %v1819
        %v1868 = vmul.f32 %v701, %v1820
        %v1869 = vmul.f32 %v702, %v1821
        %v1870 = vmul.f32 %v703, %v1822
        %v1871 = vmul.f32 %v704, %v1823
        %v1872 = vmul.f32 %v705, %v1824
        %v1873 = vmul.f32 %v706, %v1825
        %v1874 = vmul.f32 %v707, %v1826
        %v1875 = vmul.f32 %v708, %v1827
        %v1876 = vmul.f32 %v709, %v1828
        %v1877 = vmul.f32 %v710, %v1829
        %v1878 = vmul.f32 %v711, %v1830
        %v1879 = vmul.f32 %v712, %v1831
        %v1880 = vmul.f32 %v713, %v1832
        %v1881 = vmul.f32 %v714, %v1833
        %v1882 = vmul.f32 %v715, %v1834
        %v1883 = vmul.f32 %v716, %v1835
        %v1884 = vmul.f32 %v717, %v1836
        %v1885 = vmul.f32 %v718, %v1837
        %v1886 = vmul.f32 %v719, %v1838
        %v1887 = vmul.f32 %v720, %v1839
        %v1888 = vmul.f32 %v721, %v1840
        %v1889 = vmul.f32 %v722, %v1841
        %v1890 = vmul.f32 %v723, %v1842
        %v1891 = vmul.f32 %v724, %v1843
        %v1892 = vmul.f32 %v725, %v1844
        %v1893 = vmul.f32 %v726, %v1845
        %v1894 = vmul.f32 %v727, %v1846
        %v1895 = vmul.f32 %v728, %v1847
        %v1896 = vadd.f32 %v1848, %v1849
        %v1897 = vadd.f32 %v1896, %v1850
        %v1898 = vadd.f32 %v1897, %v1851
        %v1899 = vadd.f32 %v1898, %v1852
        %v1900 = vadd.f32 %v1899, %v1853
        %v1901 = vadd.f32 %v1900, %v1854
        %v1902 = vadd.f32 %v1901, %v1855
        %v1903 = vadd.f32 %v1902, %v1856
        %v1904 = vadd.f32 %v1903, %v1857
        %v1905 = vadd.f32 %v1904, %v1858
        %v1906 = vadd.f32 %v1905, %v1859
        %v1907 = vadd.f32 %v1906, %v1860
        %v1908 = vadd.f32 %v1907, %v1861
        %v1909 = vadd.f32 %v1908, %v1862
        %v1910 = vadd.f32 %v1909, %v1863
        %v1911 = vadd.f32 %v1910, %v1864
        %v1912 = vadd.f32 %v1911, %v1865
        %v1913 = vadd.f32 %v1912, %v1866
        %v1914 = vadd.f32 %v1913, %v1867
        %v1915 = vadd.f32 %v1914, %v1868
        %v1916 = vadd.f32 %v1915, %v1869
        %v1917 = vadd.f32 %v1916, %v1870
        %v1918 = vadd.f32 %v1917, %v1871
        %v1919 = vadd.f32 %v1918, %v1872
        %v1920 = vadd.f32 %v1919, %v1873
        %v1921 = vadd.f32 %v1920, %v1874
        %v1922 = vadd.f32 %v1921, %v1875
        %v1923 = vadd.f32 %v1922, %v1876
        %v1924 = vadd.f32 %v1923, %v1877
        %v1925 = vadd.f32 %v1924, %v1878
        %v1926 = vadd.f32 %v1925, %v1879
        %v1927 = vadd.f32 %v1926, %v1880
        %v1928 = vadd.f32 %v1927, %v1881
        %v1929 = vadd.f32 %v1928, %v1882
        %v1930 = vadd.f32 %v1929, %v1883
        %v1931 = vadd.f32 %v1930, %v1884
        %v1932 = vadd.f32 %v1931, %v1885
        %v1933 = vadd.f32 %v1932, %v1886
        %v1934 = vadd.f32 %v1933, %v1887
        %v1935 = vadd.f32 %v1934, %v1888
        %v1936 = vadd.f32 %v1935, %v1889
        %v1937 = vadd.f32 %v1936, %v1890
        %v1938 = vadd.f32 %v1937, %v1891
        %v1939 = vadd.f32 %v1938, %v1892
        %v1940 = vadd.f32 %v1939, %v1893
        %v1941 = vadd.f32 %v1940, %v1894
        %v1942 = vadd.f32 %v1941, %v1895
        %v1943 = vrot.slane %v1942, 4
        %v1944 = vadd.f32 %v1942, %v1943
        %v1945 = vrot.slane %v1944, 2
        %v1946 = vadd.f32 %v1944, %v1945
        %v1947 = vrot.slane %v1946, 1
        %v1948 = vadd.f32 %v1946, %v1947
        %v1949 = vld [vmem:[#allocation2 + $0x7] sm:$0x1]
        %v1950 = vadd.f32 %v1949, %v1948
        %1951 = vst [vmem:[#allocation2 + $0x7] sm:$0x1] %v1950
        %s1952 = scalar_lea.vmem %s645, 3072 [#allocation4]
        %v1953 = vld [vmem:[%s1952] sm:$0xff]
        %v1954 = vld [vmem:[%s1952 + $0x8] sm:$0xff]
        %v1955 = vld [vmem:[%s1952 + $0x10] sm:$0xff]
        %v1956 = vld [vmem:[%s1952 + $0x18] sm:$0xff]
        %v1957 = vld [vmem:[%s1952 + $0x20] sm:$0xff]
        %v1958 = vld [vmem:[%s1952 + $0x28] sm:$0xff]
        %v1959 = vld [vmem:[%s1952 + $0x30] sm:$0xff]
        %v1960 = vld [vmem:[%s1952 + $0x38] sm:$0xff]
        %v1961 = vld [vmem:[%s1952 + $0x40] sm:$0xff]
        %v1962 = vld [vmem:[%s1952 + $0x48] sm:$0xff]
        %v1963 = vld [vmem:[%s1952 + $0x50] sm:$0xff]
        %v1964 = vld [vmem:[%s1952 + $0x58] sm:$0xff]
        %v1965 = vld [vmem:[%s1952 + $0x60] sm:$0xff]
        %v1966 = vld [vmem:[%s1952 + $0x68] sm:$0xff]
        %v1967 = vld [vmem:[%s1952 + $0x70] sm:$0xff]
        %v1968 = vld [vmem:[%s1952 + $0x78] sm:$0xff]
        %v1969 = vld [vmem:[%s1952 + $0x80] sm:$0xff]
        %v1970 = vld [vmem:[%s1952 + $0x88] sm:$0xff]
        %v1971 = vld [vmem:[%s1952 + $0x90] sm:$0xff]
        %v1972 = vld [vmem:[%s1952 + $0x98] sm:$0xff]
        %v1973 = vld [vmem:[%s1952 + $0xa0] sm:$0xff]
        %v1974 = vld [vmem:[%s1952 + $0xa8] sm:$0xff]
        %v1975 = vld [vmem:[%s1952 + $0xb0] sm:$0xff]
        %v1976 = vld [vmem:[%s1952 + $0xb8] sm:$0xff]
        %v1977 = vld [vmem:[%s1952 + $0xc0] sm:$0xff]
        %v1978 = vld [vmem:[%s1952 + $0xc8] sm:$0xff]
        %v1979 = vld [vmem:[%s1952 + $0xd0] sm:$0xff]
        %v1980 = vld [vmem:[%s1952 + $0xd8] sm:$0xff]
        %v1981 = vld [vmem:[%s1952 + $0xe0] sm:$0xff]
        %v1982 = vld [vmem:[%s1952 + $0xe8] sm:$0xff]
        %v1983 = vld [vmem:[%s1952 + $0xf0] sm:$0xff]
        %v1984 = vld [vmem:[%s1952 + $0xf8] sm:$0xff]
        %v1985 = vld [vmem:[%s1952 + $0x100] sm:$0xff]
        %v1986 = vld [vmem:[%s1952 + $0x108] sm:$0xff]
        %v1987 = vld [vmem:[%s1952 + $0x110] sm:$0xff]
        %v1988 = vld [vmem:[%s1952 + $0x118] sm:$0xff]
        %v1989 = vld [vmem:[%s1952 + $0x120] sm:$0xff]
        %v1990 = vld [vmem:[%s1952 + $0x128] sm:$0xff]
        %v1991 = vld [vmem:[%s1952 + $0x130] sm:$0xff]
        %v1992 = vld [vmem:[%s1952 + $0x138] sm:$0xff]
        %v1993 = vld [vmem:[%s1952 + $0x140] sm:$0xff]
        %v1994 = vld [vmem:[%s1952 + $0x148] sm:$0xff]
        %v1995 = vld [vmem:[%s1952 + $0x150] sm:$0xff]
        %v1996 = vld [vmem:[%s1952 + $0x158] sm:$0xff]
        %v1997 = vld [vmem:[%s1952 + $0x160] sm:$0xff]
        %v1998 = vld [vmem:[%s1952 + $0x168] sm:$0xff]
        %v1999 = vld [vmem:[%s1952 + $0x170] sm:$0xff]
        %v2000 = vld [vmem:[%s1952 + $0x178] sm:$0xff]
        %v2001 = vmul.f32 %v681, %v1953
        %v2002 = vmul.f32 %v682, %v1954
        %v2003 = vmul.f32 %v683, %v1955
        %v2004 = vmul.f32 %v684, %v1956
        %v2005 = vmul.f32 %v685, %v1957
        %v2006 = vmul.f32 %v686, %v1958
        %v2007 = vmul.f32 %v687, %v1959
        %v2008 = vmul.f32 %v688, %v1960
        %v2009 = vmul.f32 %v689, %v1961
        %v2010 = vmul.f32 %v690, %v1962
        %v2011 = vmul.f32 %v691, %v1963
        %v2012 = vmul.f32 %v692, %v1964
        %v2013 = vmul.f32 %v693, %v1965
        %v2014 = vmul.f32 %v694, %v1966
        %v2015 = vmul.f32 %v695, %v1967
        %v2016 = vmul.f32 %v696, %v1968
        %v2017 = vmul.f32 %v697, %v1969
        %v2018 = vmul.f32 %v698, %v1970
        %v2019 = vmul.f32 %v699, %v1971
        %v2020 = vmul.f32 %v700, %v1972
        %v2021 = vmul.f32 %v701, %v1973
        %v2022 = vmul.f32 %v702, %v1974
        %v2023 = vmul.f32 %v703, %v1975
        %v2024 = vmul.f32 %v704, %v1976
        %v2025 = vmul.f32 %v705, %v1977
        %v2026 = vmul.f32 %v706, %v1978
        %v2027 = vmul.f32 %v707, %v1979
        %v2028 = vmul.f32 %v708, %v1980
        %v2029 = vmul.f32 %v709, %v1981
        %v2030 = vmul.f32 %v710, %v1982
        %v2031 = vmul.f32 %v711, %v1983
        %v2032 = vmul.f32 %v712, %v1984
        %v2033 = vmul.f32 %v713, %v1985
        %v2034 = vmul.f32 %v714, %v1986
        %v2035 = vmul.f32 %v715, %v1987
        %v2036 = vmul.f32 %v716, %v1988
        %v2037 = vmul.f32 %v717, %v1989
        %v2038 = vmul.f32 %v718, %v1990
        %v2039 = vmul.f32 %v719, %v1991
        %v2040 = vmul.f32 %v720, %v1992
        %v2041 = vmul.f32 %v721, %v1993
        %v2042 = vmul.f32 %v722, %v1994
        %v2043 = vmul.f32 %v723, %v1995
        %v2044 = vmul.f32 %v724, %v1996
        %v2045 = vmul.f32 %v725, %v1997
        %v2046 = vmul.f32 %v726, %v1998
        %v2047 = vmul.f32 %v727, %v1999
        %v2048 = vmul.f32 %v728, %v2000
        %v2049 = vadd.f32 %v2001, %v2002
        %v2050 = vadd.f32 %v2049, %v2003
        %v2051 = vadd.f32 %v2050, %v2004
        %v2052 = vadd.f32 %v2051, %v2005
        %v2053 = vadd.f32 %v2052, %v2006
        %v2054 = vadd.f32 %v2053, %v2007
        %v2055 = vadd.f32 %v2054, %v2008
        %v2056 = vadd.f32 %v2055, %v2009
        %v2057 = vadd.f32 %v2056, %v2010
        %v2058 = vadd.f32 %v2057, %v2011
        %v2059 = vadd.f32 %v2058, %v2012
        %v2060 = vadd.f32 %v2059, %v2013
        %v2061 = vadd.f32 %v2060, %v2014
        %v2062 = vadd.f32 %v2061, %v2015
        %v2063 = vadd.f32 %v2062, %v2016
        %v2064 = vadd.f32 %v2063, %v2017
        %v2065 = vadd.f32 %v2064, %v2018
        %v2066 = vadd.f32 %v2065, %v2019
        %v2067 = vadd.f32 %v2066, %v2020
        %v2068 = vadd.f32 %v2067, %v2021
        %v2069 = vadd.f32 %v2068, %v2022
        %v2070 = vadd.f32 %v2069, %v2023
        %v2071 = vadd.f32 %v2070, %v2024
        %v2072 = vadd.f32 %v2071, %v2025
        %v2073 = vadd.f32 %v2072, %v2026
        %v2074 = vadd.f32 %v2073, %v2027
        %v2075 = vadd.f32 %v2074, %v2028
        %v2076 = vadd.f32 %v2075, %v2029
        %v2077 = vadd.f32 %v2076, %v2030
        %v2078 = vadd.f32 %v2077, %v2031
        %v2079 = vadd.f32 %v2078, %v2032
        %v2080 = vadd.f32 %v2079, %v2033
        %v2081 = vadd.f32 %v2080, %v2034
        %v2082 = vadd.f32 %v2081, %v2035
        %v2083 = vadd.f32 %v2082, %v2036
        %v2084 = vadd.f32 %v2083, %v2037
        %v2085 = vadd.f32 %v2084, %v2038
        %v2086 = vadd.f32 %v2085, %v2039
        %v2087 = vadd.f32 %v2086, %v2040
        %v2088 = vadd.f32 %v2087, %v2041
        %v2089 = vadd.f32 %v2088, %v2042
        %v2090 = vadd.f32 %v2089, %v2043
        %v2091 = vadd.f32 %v2090, %v2044
        %v2092 = vadd.f32 %v2091, %v2045
        %v2093 = vadd.f32 %v2092, %v2046
        %v2094 = vadd.f32 %v2093, %v2047
        %v2095 = vadd.f32 %v2094, %v2048
        %v2096 = vrot.slane %v2095, 4
        %v2097 = vadd.f32 %v2095, %v2096
        %v2098 = vrot.slane %v2097, 2
        %v2099 = vadd.f32 %v2097, %v2098
        %v2100 = vrot.slane %v2099, 1
        %v2101 = vadd.f32 %v2099, %v2100
        %v2102 = vld [vmem:[#allocation2 + $0x8] sm:$0x1]
        %v2103 = vadd.f32 %v2102, %v2101
        %2104 = vst [vmem:[#allocation2 + $0x8] sm:$0x1] %v2103
        %s2105 = scalar_lea.vmem %s645, 3456 [#allocation4]
        %v2106 = vld [vmem:[%s2105] sm:$0xff]
        %v2107 = vld [vmem:[%s2105 + $0x8] sm:$0xff]
        %v2108 = vld [vmem:[%s2105 + $0x10] sm:$0xff]
        %v2109 = vld [vmem:[%s2105 + $0x18] sm:$0xff]
        %v2110 = vld [vmem:[%s2105 + $0x20] sm:$0xff]
        %v2111 = vld [vmem:[%s2105 + $0x28] sm:$0xff]
        %v2112 = vld [vmem:[%s2105 + $0x30] sm:$0xff]
        %v2113 = vld [vmem:[%s2105 + $0x38] sm:$0xff]
        %v2114 = vld [vmem:[%s2105 + $0x40] sm:$0xff]
        %v2115 = vld [vmem:[%s2105 + $0x48] sm:$0xff]
        %v2116 = vld [vmem:[%s2105 + $0x50] sm:$0xff]
        %v2117 = vld [vmem:[%s2105 + $0x58] sm:$0xff]
        %v2118 = vld [vmem:[%s2105 + $0x60] sm:$0xff]
        %v2119 = vld [vmem:[%s2105 + $0x68] sm:$0xff]
        %v2120 = vld [vmem:[%s2105 + $0x70] sm:$0xff]
        %v2121 = vld [vmem:[%s2105 + $0x78] sm:$0xff]
        %v2122 = vld [vmem:[%s2105 + $0x80] sm:$0xff]
        %v2123 = vld [vmem:[%s2105 + $0x88] sm:$0xff]
        %v2124 = vld [vmem:[%s2105 + $0x90] sm:$0xff]
        %v2125 = vld [vmem:[%s2105 + $0x98] sm:$0xff]
        %v2126 = vld [vmem:[%s2105 + $0xa0] sm:$0xff]
        %v2127 = vld [vmem:[%s2105 + $0xa8] sm:$0xff]
        %v2128 = vld [vmem:[%s2105 + $0xb0] sm:$0xff]
        %v2129 = vld [vmem:[%s2105 + $0xb8] sm:$0xff]
        %v2130 = vld [vmem:[%s2105 + $0xc0] sm:$0xff]
        %v2131 = vld [vmem:[%s2105 + $0xc8] sm:$0xff]
        %v2132 = vld [vmem:[%s2105 + $0xd0] sm:$0xff]
        %v2133 = vld [vmem:[%s2105 + $0xd8] sm:$0xff]
        %v2134 = vld [vmem:[%s2105 + $0xe0] sm:$0xff]
        %v2135 = vld [vmem:[%s2105 + $0xe8] sm:$0xff]
        %v2136 = vld [vmem:[%s2105 + $0xf0] sm:$0xff]
        %v2137 = vld [vmem:[%s2105 + $0xf8] sm:$0xff]
        %v2138 = vld [vmem:[%s2105 + $0x100] sm:$0xff]
        %v2139 = vld [vmem:[%s2105 + $0x108] sm:$0xff]
        %v2140 = vld [vmem:[%s2105 + $0x110] sm:$0xff]
        %v2141 = vld [vmem:[%s2105 + $0x118] sm:$0xff]
        %v2142 = vld [vmem:[%s2105 + $0x120] sm:$0xff]
        %v2143 = vld [vmem:[%s2105 + $0x128] sm:$0xff]
        %v2144 = vld [vmem:[%s2105 + $0x130] sm:$0xff]
        %v2145 = vld [vmem:[%s2105 + $0x138] sm:$0xff]
        %v2146 = vld [vmem:[%s2105 + $0x140] sm:$0xff]
        %v2147 = vld [vmem:[%s2105 + $0x148] sm:$0xff]
        %v2148 = vld [vmem:[%s2105 + $0x150] sm:$0xff]
        %v2149 = vld [vmem:[%s2105 + $0x158] sm:$0xff]
        %v2150 = vld [vmem:[%s2105 + $0x160] sm:$0xff]
        %v2151 = vld [vmem:[%s2105 + $0x168] sm:$0xff]
        %v2152 = vld [vmem:[%s2105 + $0x170] sm:$0xff]
        %v2153 = vld [vmem:[%s2105 + $0x178] sm:$0xff]
        %v2154 = vmul.f32 %v681, %v2106
        %v2155 = vmul.f32 %v682, %v2107
        %v2156 = vmul.f32 %v683, %v2108
        %v2157 = vmul.f32 %v684, %v2109
        %v2158 = vmul.f32 %v685, %v2110
        %v2159 = vmul.f32 %v686, %v2111
        %v2160 = vmul.f32 %v687, %v2112
        %v2161 = vmul.f32 %v688, %v2113
        %v2162 = vmul.f32 %v689, %v2114
        %v2163 = vmul.f32 %v690, %v2115
        %v2164 = vmul.f32 %v691, %v2116
        %v2165 = vmul.f32 %v692, %v2117
        %v2166 = vmul.f32 %v693, %v2118
        %v2167 = vmul.f32 %v694, %v2119
        %v2168 = vmul.f32 %v695, %v2120
        %v2169 = vmul.f32 %v696, %v2121
        %v2170 = vmul.f32 %v697, %v2122
        %v2171 = vmul.f32 %v698, %v2123
        %v2172 = vmul.f32 %v699, %v2124
        %v2173 = vmul.f32 %v700, %v2125
        %v2174 = vmul.f32 %v701, %v2126
        %v2175 = vmul.f32 %v702, %v2127
        %v2176 = vmul.f32 %v703, %v2128
        %v2177 = vmul.f32 %v704, %v2129
        %v2178 = vmul.f32 %v705, %v2130
        %v2179 = vmul.f32 %v706, %v2131
        %v2180 = vmul.f32 %v707, %v2132
        %v2181 = vmul.f32 %v708, %v2133
        %v2182 = vmul.f32 %v709, %v2134
        %v2183 = vmul.f32 %v710, %v2135
        %v2184 = vmul.f32 %v711, %v2136
        %v2185 = vmul.f32 %v712, %v2137
        %v2186 = vmul.f32 %v713, %v2138
        %v2187 = vmul.f32 %v714, %v2139
        %v2188 = vmul.f32 %v715, %v2140
        %v2189 = vmul.f32 %v716, %v2141
        %v2190 = vmul.f32 %v717, %v2142
        %v2191 = vmul.f32 %v718, %v2143
        %v2192 = vmul.f32 %v719, %v2144
        %v2193 = vmul.f32 %v720, %v2145
        %v2194 = vmul.f32 %v721, %v2146
        %v2195 = vmul.f32 %v722, %v2147
        %v2196 = vmul.f32 %v723, %v2148
        %v2197 = vmul.f32 %v724, %v2149
        %v2198 = vmul.f32 %v725, %v2150
        %v2199 = vmul.f32 %v726, %v2151
        %v2200 = vmul.f32 %v727, %v2152
        %v2201 = vmul.f32 %v728, %v2153
        %v2202 = vadd.f32 %v2154, %v2155
        %v2203 = vadd.f32 %v2202, %v2156
        %v2204 = vadd.f32 %v2203, %v2157
        %v2205 = vadd.f32 %v2204, %v2158
        %v2206 = vadd.f32 %v2205, %v2159
        %v2207 = vadd.f32 %v2206, %v2160
        %v2208 = vadd.f32 %v2207, %v2161
        %v2209 = vadd.f32 %v2208, %v2162
        %v2210 = vadd.f32 %v2209, %v2163
        %v2211 = vadd.f32 %v2210, %v2164
        %v2212 = vadd.f32 %v2211, %v2165
        %v2213 = vadd.f32 %v2212, %v2166
        %v2214 = vadd.f32 %v2213, %v2167
        %v2215 = vadd.f32 %v2214, %v2168
        %v2216 = vadd.f32 %v2215, %v2169
        %v2217 = vadd.f32 %v2216, %v2170
        %v2218 = vadd.f32 %v2217, %v2171
        %v2219 = vadd.f32 %v2218, %v2172
        %v2220 = vadd.f32 %v2219, %v2173
        %v2221 = vadd.f32 %v2220, %v2174
        %v2222 = vadd.f32 %v2221, %v2175
        %v2223 = vadd.f32 %v2222, %v2176
        %v2224 = vadd.f32 %v2223, %v2177
        %v2225 = vadd.f32 %v2224, %v2178
        %v2226 = vadd.f32 %v2225, %v2179
        %v2227 = vadd.f32 %v2226, %v2180
        %v2228 = vadd.f32 %v2227, %v2181
        %v2229 = vadd.f32 %v2228, %v2182
        %v2230 = vadd.f32 %v2229, %v2183
        %v2231 = vadd.f32 %v2230, %v2184
        %v2232 = vadd.f32 %v2231, %v2185
        %v2233 = vadd.f32 %v2232, %v2186
        %v2234 = vadd.f32 %v2233, %v2187
        %v2235 = vadd.f32 %v2234, %v2188
        %v2236 = vadd.f32 %v2235, %v2189
        %v2237 = vadd.f32 %v2236, %v2190
        %v2238 = vadd.f32 %v2237, %v2191
        %v2239 = vadd.f32 %v2238, %v2192
        %v2240 = vadd.f32 %v2239, %v2193
        %v2241 = vadd.f32 %v2240, %v2194
        %v2242 = vadd.f32 %v2241, %v2195
        %v2243 = vadd.f32 %v2242, %v2196
        %v2244 = vadd.f32 %v2243, %v2197
        %v2245 = vadd.f32 %v2244, %v2198
        %v2246 = vadd.f32 %v2245, %v2199
        %v2247 = vadd.f32 %v2246, %v2200
        %v2248 = vadd.f32 %v2247, %v2201
        %v2249 = vrot.slane %v2248, 4
        %v2250 = vadd.f32 %v2248, %v2249
        %v2251 = vrot.slane %v2250, 2
        %v2252 = vadd.f32 %v2250, %v2251
        %v2253 = vrot.slane %v2252, 1
        %v2254 = vadd.f32 %v2252, %v2253
        %v2255 = vld [vmem:[#allocation2 + $0x9] sm:$0x1]
        %v2256 = vadd.f32 %v2255, %v2254
        %2257 = vst [vmem:[#allocation2 + $0x9] sm:$0x1] %v2256
        %s2258 = scalar_lea.vmem %s637, 384 [#allocation3]
        %v2259 = vld [vmem:[%s2258] sm:$0xff]
        %v2260 = vld [vmem:[%s2258 + $0x8] sm:$0xff]
        %v2261 = vld [vmem:[%s2258 + $0x10] sm:$0xff]
        %v2262 = vld [vmem:[%s2258 + $0x18] sm:$0xff]
        %v2263 = vld [vmem:[%s2258 + $0x20] sm:$0xff]
        %v2264 = vld [vmem:[%s2258 + $0x28] sm:$0xff]
        %v2265 = vld [vmem:[%s2258 + $0x30] sm:$0xff]
        %v2266 = vld [vmem:[%s2258 + $0x38] sm:$0xff]
        %v2267 = vld [vmem:[%s2258 + $0x40] sm:$0xff]
        %v2268 = vld [vmem:[%s2258 + $0x48] sm:$0xff]
        %v2269 = vld [vmem:[%s2258 + $0x50] sm:$0xff]
        %v2270 = vld [vmem:[%s2258 + $0x58] sm:$0xff]
        %v2271 = vld [vmem:[%s2258 + $0x60] sm:$0xff]
        %v2272 = vld [vmem:[%s2258 + $0x68] sm:$0xff]
        %v2273 = vld [vmem:[%s2258 + $0x70] sm:$0xff]
        %v2274 = vld [vmem:[%s2258 + $0x78] sm:$0xff]
        %v2275 = vld [vmem:[%s2258 + $0x80] sm:$0xff]
        %v2276 = vld [vmem:[%s2258 + $0x88] sm:$0xff]
        %v2277 = vld [vmem:[%s2258 + $0x90] sm:$0xff]
        %v2278 = vld [vmem:[%s2258 + $0x98] sm:$0xff]
        %v2279 = vld [vmem:[%s2258 + $0xa0] sm:$0xff]
        %v2280 = vld [vmem:[%s2258 + $0xa8] sm:$0xff]
        %v2281 = vld [vmem:[%s2258 + $0xb0] sm:$0xff]
        %v2282 = vld [vmem:[%s2258 + $0xb8] sm:$0xff]
        %v2283 = vld [vmem:[%s2258 + $0xc0] sm:$0xff]
        %v2284 = vld [vmem:[%s2258 + $0xc8] sm:$0xff]
        %v2285 = vld [vmem:[%s2258 + $0xd0] sm:$0xff]
        %v2286 = vld [vmem:[%s2258 + $0xd8] sm:$0xff]
        %v2287 = vld [vmem:[%s2258 + $0xe0] sm:$0xff]
        %v2288 = vld [vmem:[%s2258 + $0xe8] sm:$0xff]
        %v2289 = vld [vmem:[%s2258 + $0xf0] sm:$0xff]
        %v2290 = vld [vmem:[%s2258 + $0xf8] sm:$0xff]
        %v2291 = vld [vmem:[%s2258 + $0x100] sm:$0xff]
        %v2292 = vld [vmem:[%s2258 + $0x108] sm:$0xff]
        %v2293 = vld [vmem:[%s2258 + $0x110] sm:$0xff]
        %v2294 = vld [vmem:[%s2258 + $0x118] sm:$0xff]
        %v2295 = vld [vmem:[%s2258 + $0x120] sm:$0xff]
        %v2296 = vld [vmem:[%s2258 + $0x128] sm:$0xff]
        %v2297 = vld [vmem:[%s2258 + $0x130] sm:$0xff]
        %v2298 = vld [vmem:[%s2258 + $0x138] sm:$0xff]
        %v2299 = vld [vmem:[%s2258 + $0x140] sm:$0xff]
        %v2300 = vld [vmem:[%s2258 + $0x148] sm:$0xff]
        %v2301 = vld [vmem:[%s2258 + $0x150] sm:$0xff]
        %v2302 = vld [vmem:[%s2258 + $0x158] sm:$0xff]
        %v2303 = vld [vmem:[%s2258 + $0x160] sm:$0xff]
        %v2304 = vld [vmem:[%s2258 + $0x168] sm:$0xff]
        %v2305 = vld [vmem:[%s2258 + $0x170] sm:$0xff]
        %v2306 = vld [vmem:[%s2258 + $0x178] sm:$0xff]
        %v2307 = vld [vmem:[%s645] sm:$0xff]
        %v2308 = vld [vmem:[%s645 + $0x8] sm:$0xff]
        %v2309 = vld [vmem:[%s645 + $0x10] sm:$0xff]
        %v2310 = vld [vmem:[%s645 + $0x18] sm:$0xff]
        %v2311 = vld [vmem:[%s645 + $0x20] sm:$0xff]
        %v2312 = vld [vmem:[%s645 + $0x28] sm:$0xff]
        %v2313 = vld [vmem:[%s645 + $0x30] sm:$0xff]
        %v2314 = vld [vmem:[%s645 + $0x38] sm:$0xff]
        %v2315 = vld [vmem:[%s645 + $0x40] sm:$0xff]
        %v2316 = vld [vmem:[%s645 + $0x48] sm:$0xff]
        %v2317 = vld [vmem:[%s645 + $0x50] sm:$0xff]
        %v2318 = vld [vmem:[%s645 + $0x58] sm:$0xff]
        %v2319 = vld [vmem:[%s645 + $0x60] sm:$0xff]
        %v2320 = vld [vmem:[%s645 + $0x68] sm:$0xff]
        %v2321 = vld [vmem:[%s645 + $0x70] sm:$0xff]
        %v2322 = vld [vmem:[%s645 + $0x78] sm:$0xff]
        %v2323 = vld [vmem:[%s645 + $0x80] sm:$0xff]
        %v2324 = vld [vmem:[%s645 + $0x88] sm:$0xff]
        %v2325 = vld [vmem:[%s645 + $0x90] sm:$0xff]
        %v2326 = vld [vmem:[%s645 + $0x98] sm:$0xff]
        %v2327 = vld [vmem:[%s645 + $0xa0] sm:$0xff]
        %v2328 = vld [vmem:[%s645 + $0xa8] sm:$0xff]
        %v2329 = vld [vmem:[%s645 + $0xb0] sm:$0xff]
        %v2330 = vld [vmem:[%s645 + $0xb8] sm:$0xff]
        %v2331 = vld [vmem:[%s645 + $0xc0] sm:$0xff]
        %v2332 = vld [vmem:[%s645 + $0xc8] sm:$0xff]
        %v2333 = vld [vmem:[%s645 + $0xd0] sm:$0xff]
        %v2334 = vld [vmem:[%s645 + $0xd8] sm:$0xff]
        %v2335 = vld [vmem:[%s645 + $0xe0] sm:$0xff]
        %v2336 = vld [vmem:[%s645 + $0xe8] sm:$0xff]
        %v2337 = vld [vmem:[%s645 + $0xf0] sm:$0xff]
        %v2338 = vld [vmem:[%s645 + $0xf8] sm:$0xff]
        %v2339 = vld [vmem:[%s645 + $0x100] sm:$0xff]
        %v2340 = vld [vmem:[%s645 + $0x108] sm:$0xff]
        %v2341 = vld [vmem:[%s645 + $0x110] sm:$0xff]
        %v2342 = vld [vmem:[%s645 + $0x118] sm:$0xff]
        %v2343 = vld [vmem:[%s645 + $0x120] sm:$0xff]
        %v2344 = vld [vmem:[%s645 + $0x128] sm:$0xff]
        %v2345 = vld [vmem:[%s645 + $0x130] sm:$0xff]
        %v2346 = vld [vmem:[%s645 + $0x138] sm:$0xff]
        %v2347 = vld [vmem:[%s645 + $0x140] sm:$0xff]
        %v2348 = vld [vmem:[%s645 + $0x148] sm:$0xff]
        %v2349 = vld [vmem:[%s645 + $0x150] sm:$0xff]
        %v2350 = vld [vmem:[%s645 + $0x158] sm:$0xff]
        %v2351 = vld [vmem:[%s645 + $0x160] sm:$0xff]
        %v2352 = vld [vmem:[%s645 + $0x168] sm:$0xff]
        %v2353 = vld [vmem:[%s645 + $0x170] sm:$0xff]
        %v2354 = vld [vmem:[%s645 + $0x178] sm:$0xff]
        %v2355 = vmul.f32 %v2259, %v2307
        %v2356 = vmul.f32 %v2260, %v2308
        %v2357 = vmul.f32 %v2261, %v2309
        %v2358 = vmul.f32 %v2262, %v2310
        %v2359 = vmul.f32 %v2263, %v2311
        %v2360 = vmul.f32 %v2264, %v2312
        %v2361 = vmul.f32 %v2265, %v2313
        %v2362 = vmul.f32 %v2266, %v2314
        %v2363 = vmul.f32 %v2267, %v2315
        %v2364 = vmul.f32 %v2268, %v2316
        %v2365 = vmul.f32 %v2269, %v2317
        %v2366 = vmul.f32 %v2270, %v2318
        %v2367 = vmul.f32 %v2271, %v2319
        %v2368 = vmul.f32 %v2272, %v2320
        %v2369 = vmul.f32 %v2273, %v2321
        %v2370 = vmul.f32 %v2274, %v2322
        %v2371 = vmul.f32 %v2275, %v2323
        %v2372 = vmul.f32 %v2276, %v2324
        %v2373 = vmul.f32 %v2277, %v2325
        %v2374 = vmul.f32 %v2278, %v2326
        %v2375 = vmul.f32 %v2279, %v2327
        %v2376 = vmul.f32 %v2280, %v2328
        %v2377 = vmul.f32 %v2281, %v2329
        %v2378 = vmul.f32 %v2282, %v2330
        %v2379 = vmul.f32 %v2283, %v2331
        %v2380 = vmul.f32 %v2284, %v2332
        %v2381 = vmul.f32 %v2285, %v2333
        %v2382 = vmul.f32 %v2286, %v2334
        %v2383 = vmul.f32 %v2287, %v2335
        %v2384 = vmul.f32 %v2288, %v2336
        %v2385 = vmul.f32 %v2289, %v2337
        %v2386 = vmul.f32 %v2290, %v2338
        %v2387 = vmul.f32 %v2291, %v2339
        %v2388 = vmul.f32 %v2292, %v2340
        %v2389 = vmul.f32 %v2293, %v2341
        %v2390 = vmul.f32 %v2294, %v2342
        %v2391 = vmul.f32 %v2295, %v2343
        %v2392 = vmul.f32 %v2296, %v2344
        %v2393 = vmul.f32 %v2297, %v2345
        %v2394 = vmul.f32 %v2298, %v2346
        %v2395 = vmul.f32 %v2299, %v2347
        %v2396 = vmul.f32 %v2300, %v2348
        %v2397 = vmul.f32 %v2301, %v2349
        %v2398 = vmul.f32 %v2302, %v2350
        %v2399 = vmul.f32 %v2303, %v2351
        %v2400 = vmul.f32 %v2304, %v2352
        %v2401 = vmul.f32 %v2305, %v2353
        %v2402 = vmul.f32 %v2306, %v2354
        %v2403 = vadd.f32 %v2355, %v2356
        %v2404 = vadd.f32 %v2403, %v2357
        %v2405 = vadd.f32 %v2404, %v2358
        %v2406 = vadd.f32 %v2405, %v2359
        %v2407 = vadd.f32 %v2406, %v2360
        %v2408 = vadd.f32 %v2407, %v2361
        %v2409 = vadd.f32 %v2408, %v2362
        %v2410 = vadd.f32 %v2409, %v2363
        %v2411 = vadd.f32 %v2410, %v2364
        %v2412 = vadd.f32 %v2411, %v2365
        %v2413 = vadd.f32 %v2412, %v2366
        %v2414 = vadd.f32 %v2413, %v2367
        %v2415 = vadd.f32 %v2414, %v2368
        %v2416 = vadd.f32 %v2415, %v2369
        %v2417 = vadd.f32 %v2416, %v2370
        %v2418 = vadd.f32 %v2417, %v2371
        %v2419 = vadd.f32 %v2418, %v2372
        %v2420 = vadd.f32 %v2419, %v2373
        %v2421 = vadd.f32 %v2420, %v2374
        %v2422 = vadd.f32 %v2421, %v2375
        %v2423 = vadd.f32 %v2422, %v2376
        %v2424 = vadd.f32 %v2423, %v2377
        %v2425 = vadd.f32 %v2424, %v2378
        %v2426 = vadd.f32 %v2425, %v2379
        %v2427 = vadd.f32 %v2426, %v2380
        %v2428 = vadd.f32 %v2427, %v2381
        %v2429 = vadd.f32 %v2428, %v2382
        %v2430 = vadd.f32 %v2429, %v2383
        %v2431 = vadd.f32 %v2430, %v2384
        %v2432 = vadd.f32 %v2431, %v2385
        %v2433 = vadd.f32 %v2432, %v2386
        %v2434 = vadd.f32 %v2433, %v2387
        %v2435 = vadd.f32 %v2434, %v2388
        %v2436 = vadd.f32 %v2435, %v2389
        %v2437 = vadd.f32 %v2436, %v2390
        %v2438 = vadd.f32 %v2437, %v2391
        %v2439 = vadd.f32 %v2438, %v2392
        %v2440 = vadd.f32 %v2439, %v2393
        %v2441 = vadd.f32 %v2440, %v2394
        %v2442 = vadd.f32 %v2441, %v2395
        %v2443 = vadd.f32 %v2442, %v2396
        %v2444 = vadd.f32 %v2443, %v2397
        %v2445 = vadd.f32 %v2444, %v2398
        %v2446 = vadd.f32 %v2445, %v2399
        %v2447 = vadd.f32 %v2446, %v2400
        %v2448 = vadd.f32 %v2447, %v2401
        %v2449 = vadd.f32 %v2448, %v2402
        %v2450 = vrot.slane %v2449, 4
        %v2451 = vadd.f32 %v2449, %v2450
        %v2452 = vrot.slane %v2451, 2
        %v2453 = vadd.f32 %v2451, %v2452
        %v2454 = vrot.slane %v2453, 1
        %v2455 = vadd.f32 %v2453, %v2454
        %s2456 = scalar_lea.vmem [#allocation2], 16
        %v2457 = vld [vmem:[%s2456] sm:$0x1]
        %v2458 = vadd.f32 %v2457, %v2455
        %2459 = vst [vmem:[%s2456] sm:$0x1] %v2458
        %v2460 = vld [vmem:[%s881] sm:$0xff]
        %v2461 = vld [vmem:[%s881 + $0x8] sm:$0xff]
        %v2462 = vld [vmem:[%s881 + $0x10] sm:$0xff]
        %v2463 = vld [vmem:[%s881 + $0x18] sm:$0xff]
        %v2464 = vld [vmem:[%s881 + $0x20] sm:$0xff]
        %v2465 = vld [vmem:[%s881 + $0x28] sm:$0xff]
        %v2466 = vld [vmem:[%s881 + $0x30] sm:$0xff]
        %v2467 = vld [vmem:[%s881 + $0x38] sm:$0xff]
        %v2468 = vld [vmem:[%s881 + $0x40] sm:$0xff]
        %v2469 = vld [vmem:[%s881 + $0x48] sm:$0xff]
        %v2470 = vld [vmem:[%s881 + $0x50] sm:$0xff]
        %v2471 = vld [vmem:[%s881 + $0x58] sm:$0xff]
        %v2472 = vld [vmem:[%s881 + $0x60] sm:$0xff]
        %v2473 = vld [vmem:[%s881 + $0x68] sm:$0xff]
        %v2474 = vld [vmem:[%s881 + $0x70] sm:$0xff]
        %v2475 = vld [vmem:[%s881 + $0x78] sm:$0xff]
        %v2476 = vld [vmem:[%s881 + $0x80] sm:$0xff]
        %v2477 = vld [vmem:[%s881 + $0x88] sm:$0xff]
        %v2478 = vld [vmem:[%s881 + $0x90] sm:$0xff]
        %v2479 = vld [vmem:[%s881 + $0x98] sm:$0xff]
        %v2480 = vld [vmem:[%s881 + $0xa0] sm:$0xff]
        %v2481 = vld [vmem:[%s881 + $0xa8] sm:$0xff]
        %v2482 = vld [vmem:[%s881 + $0xb0] sm:$0xff]
        %v2483 = vld [vmem:[%s881 + $0xb8] sm:$0xff]
        %v2484 = vld [vmem:[%s881 + $0xc0] sm:$0xff]
        %v2485 = vld [vmem:[%s881 + $0xc8] sm:$0xff]
        %v2486 = vld [vmem:[%s881 + $0xd0] sm:$0xff]
        %v2487 = vld [vmem:[%s881 + $0xd8] sm:$0xff]
        %v2488 = vld [vmem:[%s881 + $0xe0] sm:$0xff]
        %v2489 = vld [vmem:[%s881 + $0xe8] sm:$0xff]
        %v2490 = vld [vmem:[%s881 + $0xf0] sm:$0xff]
        %v2491 = vld [vmem:[%s881 + $0xf8] sm:$0xff]
        %v2492 = vld [vmem:[%s881 + $0x100] sm:$0xff]
        %v2493 = vld [vmem:[%s881 + $0x108] sm:$0xff]
        %v2494 = vld [vmem:[%s881 + $0x110] sm:$0xff]
        %v2495 = vld [vmem:[%s881 + $0x118] sm:$0xff]
        %v2496 = vld [vmem:[%s881 + $0x120] sm:$0xff]
        %v2497 = vld [vmem:[%s881 + $0x128] sm:$0xff]
        %v2498 = vld [vmem:[%s881 + $0x130] sm:$0xff]
        %v2499 = vld [vmem:[%s881 + $0x138] sm:$0xff]
        %v2500 = vld [vmem:[%s881 + $0x140] sm:$0xff]
        %v2501 = vld [vmem:[%s881 + $0x148] sm:$0xff]
        %v2502 = vld [vmem:[%s881 + $0x150] sm:$0xff]
        %v2503 = vld [vmem:[%s881 + $0x158] sm:$0xff]
        %v2504 = vld [vmem:[%s881 + $0x160] sm:$0xff]
        %v2505 = vld [vmem:[%s881 + $0x168] sm:$0xff]
        %v2506 = vld [vmem:[%s881 + $0x170] sm:$0xff]
        %v2507 = vld [vmem:[%s881 + $0x178] sm:$0xff]
        %v2508 = vmul.f32 %v2259, %v2460
        %v2509 = vmul.f32 %v2260, %v2461
        %v2510 = vmul.f32 %v2261, %v2462
        %v2511 = vmul.f32 %v2262, %v2463
        %v2512 = vmul.f32 %v2263, %v2464
        %v2513 = vmul.f32 %v2264, %v2465
        %v2514 = vmul.f32 %v2265, %v2466
        %v2515 = vmul.f32 %v2266, %v2467
        %v2516 = vmul.f32 %v2267, %v2468
        %v2517 = vmul.f32 %v2268, %v2469
        %v2518 = vmul.f32 %v2269, %v2470
        %v2519 = vmul.f32 %v2270, %v2471
        %v2520 = vmul.f32 %v2271, %v2472
        %v2521 = vmul.f32 %v2272, %v2473
        %v2522 = vmul.f32 %v2273, %v2474
        %v2523 = vmul.f32 %v2274, %v2475
        %v2524 = vmul.f32 %v2275, %v2476
        %v2525 = vmul.f32 %v2276, %v2477
        %v2526 = vmul.f32 %v2277, %v2478
        %v2527 = vmul.f32 %v2278, %v2479
        %v2528 = vmul.f32 %v2279, %v2480
        %v2529 = vmul.f32 %v2280, %v2481
        %v2530 = vmul.f32 %v2281, %v2482
        %v2531 = vmul.f32 %v2282, %v2483
        %v2532 = vmul.f32 %v2283, %v2484
        %v2533 = vmul.f32 %v2284, %v2485
        %v2534 = vmul.f32 %v2285, %v2486
        %v2535 = vmul.f32 %v2286, %v2487
        %v2536 = vmul.f32 %v2287, %v2488
        %v2537 = vmul.f32 %v2288, %v2489
        %v2538 = vmul.f32 %v2289, %v2490
        %v2539 = vmul.f32 %v2290, %v2491
        %v2540 = vmul.f32 %v2291, %v2492
        %v2541 = vmul.f32 %v2292, %v2493
        %v2542 = vmul.f32 %v2293, %v2494
        %v2543 = vmul.f32 %v2294, %v2495
        %v2544 = vmul.f32 %v2295, %v2496
        %v2545 = vmul.f32 %v2296, %v2497
        %v2546 = vmul.f32 %v2297, %v2498
        %v2547 = vmul.f32 %v2298, %v2499
        %v2548 = vmul.f32 %v2299, %v2500
        %v2549 = vmul.f32 %v2300, %v2501
        %v2550 = vmul.f32 %v2301, %v2502
        %v2551 = vmul.f32 %v2302, %v2503
        %v2552 = vmul.f32 %v2303, %v2504
        %v2553 = vmul.f32 %v2304, %v2505
        %v2554 = vmul.f32 %v2305, %v2506
        %v2555 = vmul.f32 %v2306, %v2507
        %v2556 = vadd.f32 %v2508, %v2509
        %v2557 = vadd.f32 %v2556, %v2510
        %v2558 = vadd.f32 %v2557, %v2511
        %v2559 = vadd.f32 %v2558, %v2512
        %v2560 = vadd.f32 %v2559, %v2513
        %v2561 = vadd.f32 %v2560, %v2514
        %v2562 = vadd.f32 %v2561, %v2515
        %v2563 = vadd.f32 %v2562, %v2516
        %v2564 = vadd.f32 %v2563, %v2517
        %v2565 = vadd.f32 %v2564, %v2518
        %v2566 = vadd.f32 %v2565, %v2519
        %v2567 = vadd.f32 %v2566, %v2520
        %v2568 = vadd.f32 %v2567, %v2521
        %v2569 = vadd.f32 %v2568, %v2522
        %v2570 = vadd.f32 %v2569, %v2523
        %v2571 = vadd.f32 %v2570, %v2524
        %v2572 = vadd.f32 %v2571, %v2525
        %v2573 = vadd.f32 %v2572, %v2526
        %v2574 = vadd.f32 %v2573, %v2527
        %v2575 = vadd.f32 %v2574, %v2528
        %v2576 = vadd.f32 %v2575, %v2529
        %v2577 = vadd.f32 %v2576, %v2530
        %v2578 = vadd.f32 %v2577, %v2531
        %v2579 = vadd.f32 %v2578, %v2532
        %v2580 = vadd.f32 %v2579, %v2533
        %v2581 = vadd.f32 %v2580, %v2534
        %v2582 = vadd.f32 %v2581, %v2535
        %v2583 = vadd.f32 %v2582, %v2536
        %v2584 = vadd.f32 %v2583, %v2537
        %v2585 = vadd.f32 %v2584, %v2538
        %v2586 = vadd.f32 %v2585, %v2539
        %v2587 = vadd.f32 %v2586, %v2540
        %v2588 = vadd.f32 %v2587, %v2541
        %v2589 = vadd.f32 %v2588, %v2542
        %v2590 = vadd.f32 %v2589, %v2543
        %v2591 = vadd.f32 %v2590, %v2544
        %v2592 = vadd.f32 %v2591, %v2545
        %v2593 = vadd.f32 %v2592, %v2546
        %v2594 = vadd.f32 %v2593, %v2547
        %v2595 = vadd.f32 %v2594, %v2548
        %v2596 = vadd.f32 %v2595, %v2549
        %v2597 = vadd.f32 %v2596, %v2550
        %v2598 = vadd.f32 %v2597, %v2551
        %v2599 = vadd.f32 %v2598, %v2552
        %v2600 = vadd.f32 %v2599, %v2553
        %v2601 = vadd.f32 %v2600, %v2554
        %v2602 = vadd.f32 %v2601, %v2555
        %v2603 = vrot.slane %v2602, 4
        %v2604 = vadd.f32 %v2602, %v2603
        %v2605 = vrot.slane %v2604, 2
        %v2606 = vadd.f32 %v2604, %v2605
        %v2607 = vrot.slane %v2606, 1
        %v2608 = vadd.f32 %v2606, %v2607
        %v2609 = vld [vmem:[%s2456 + $0x1] sm:$0x1]
        %v2610 = vadd.f32 %v2609, %v2608
        %2611 = vst [vmem:[%s2456 + $0x1] sm:$0x1] %v2610
        %v2612 = vld [vmem:[%s1034] sm:$0xff]
        %v2613 = vld [vmem:[%s1034 + $0x8] sm:$0xff]
        %v2614 = vld [vmem:[%s1034 + $0x10] sm:$0xff]
        %v2615 = vld [vmem:[%s1034 + $0x18] sm:$0xff]
        %v2616 = vld [vmem:[%s1034 + $0x20] sm:$0xff]
        %v2617 = vld [vmem:[%s1034 + $0x28] sm:$0xff]
        %v2618 = vld [vmem:[%s1034 + $0x30] sm:$0xff]
        %v2619 = vld [vmem:[%s1034 + $0x38] sm:$0xff]
        %v2620 = vld [vmem:[%s1034 + $0x40] sm:$0xff]
        %v2621 = vld [vmem:[%s1034 + $0x48] sm:$0xff]
        %v2622 = vld [vmem:[%s1034 + $0x50] sm:$0xff]
        %v2623 = vld [vmem:[%s1034 + $0x58] sm:$0xff]
        %v2624 = vld [vmem:[%s1034 + $0x60] sm:$0xff]
        %v2625 = vld [vmem:[%s1034 + $0x68] sm:$0xff]
        %v2626 = vld [vmem:[%s1034 + $0x70] sm:$0xff]
        %v2627 = vld [vmem:[%s1034 + $0x78] sm:$0xff]
        %v2628 = vld [vmem:[%s1034 + $0x80] sm:$0xff]
        %v2629 = vld [vmem:[%s1034 + $0x88] sm:$0xff]
        %v2630 = vld [vmem:[%s1034 + $0x90] sm:$0xff]
        %v2631 = vld [vmem:[%s1034 + $0x98] sm:$0xff]
        %v2632 = vld [vmem:[%s1034 + $0xa0] sm:$0xff]
        %v2633 = vld [vmem:[%s1034 + $0xa8] sm:$0xff]
        %v2634 = vld [vmem:[%s1034 + $0xb0] sm:$0xff]
        %v2635 = vld [vmem:[%s1034 + $0xb8] sm:$0xff]
        %v2636 = vld [vmem:[%s1034 + $0xc0] sm:$0xff]
        %v2637 = vld [vmem:[%s1034 + $0xc8] sm:$0xff]
        %v2638 = vld [vmem:[%s1034 + $0xd0] sm:$0xff]
        %v2639 = vld [vmem:[%s1034 + $0xd8] sm:$0xff]
        %v2640 = vld [vmem:[%s1034 + $0xe0] sm:$0xff]
        %v2641 = vld [vmem:[%s1034 + $0xe8] sm:$0xff]
        %v2642 = vld [vmem:[%s1034 + $0xf0] sm:$0xff]
        %v2643 = vld [vmem:[%s1034 + $0xf8] sm:$0xff]
        %v2644 = vld [vmem:[%s1034 + $0x100] sm:$0xff]
        %v2645 = vld [vmem:[%s1034 + $0x108] sm:$0xff]
        %v2646 = vld [vmem:[%s1034 + $0x110] sm:$0xff]
        %v2647 = vld [vmem:[%s1034 + $0x118] sm:$0xff]
        %v2648 = vld [vmem:[%s1034 + $0x120] sm:$0xff]
        %v2649 = vld [vmem:[%s1034 + $0x128] sm:$0xff]
        %v2650 = vld [vmem:[%s1034 + $0x130] sm:$0xff]
        %v2651 = vld [vmem:[%s1034 + $0x138] sm:$0xff]
        %v2652 = vld [vmem:[%s1034 + $0x140] sm:$0xff]
        %v2653 = vld [vmem:[%s1034 + $0x148] sm:$0xff]
        %v2654 = vld [vmem:[%s1034 + $0x150] sm:$0xff]
        %v2655 = vld [vmem:[%s1034 + $0x158] sm:$0xff]
        %v2656 = vld [vmem:[%s1034 + $0x160] sm:$0xff]
        %v2657 = vld [vmem:[%s1034 + $0x168] sm:$0xff]
        %v2658 = vld [vmem:[%s1034 + $0x170] sm:$0xff]
        %v2659 = vld [vmem:[%s1034 + $0x178] sm:$0xff]
        %v2660 = vmul.f32 %v2259, %v2612
        %v2661 = vmul.f32 %v2260, %v2613
        %v2662 = vmul.f32 %v2261, %v2614
        %v2663 = vmul.f32 %v2262, %v2615
        %v2664 = vmul.f32 %v2263, %v2616
        %v2665 = vmul.f32 %v2264, %v2617
        %v2666 = vmul.f32 %v2265, %v2618
        %v2667 = vmul.f32 %v2266, %v2619
        %v2668 = vmul.f32 %v2267, %v2620
        %v2669 = vmul.f32 %v2268, %v2621
        %v2670 = vmul.f32 %v2269, %v2622
        %v2671 = vmul.f32 %v2270, %v2623
        %v2672 = vmul.f32 %v2271, %v2624
        %v2673 = vmul.f32 %v2272, %v2625
        %v2674 = vmul.f32 %v2273, %v2626
        %v2675 = vmul.f32 %v2274, %v2627
        %v2676 = vmul.f32 %v2275, %v2628
        %v2677 = vmul.f32 %v2276, %v2629
        %v2678 = vmul.f32 %v2277, %v2630
        %v2679 = vmul.f32 %v2278, %v2631
        %v2680 = vmul.f32 %v2279, %v2632
        %v2681 = vmul.f32 %v2280, %v2633
        %v2682 = vmul.f32 %v2281, %v2634
        %v2683 = vmul.f32 %v2282, %v2635
        %v2684 = vmul.f32 %v2283, %v2636
        %v2685 = vmul.f32 %v2284, %v2637
        %v2686 = vmul.f32 %v2285, %v2638
        %v2687 = vmul.f32 %v2286, %v2639
        %v2688 = vmul.f32 %v2287, %v2640
        %v2689 = vmul.f32 %v2288, %v2641
        %v2690 = vmul.f32 %v2289, %v2642
        %v2691 = vmul.f32 %v2290, %v2643
        %v2692 = vmul.f32 %v2291, %v2644
        %v2693 = vmul.f32 %v2292, %v2645
        %v2694 = vmul.f32 %v2293, %v2646
        %v2695 = vmul.f32 %v2294, %v2647
        %v2696 = vmul.f32 %v2295, %v2648
        %v2697 = vmul.f32 %v2296, %v2649
        %v2698 = vmul.f32 %v2297, %v2650
        %v2699 = vmul.f32 %v2298, %v2651
        %v2700 = vmul.f32 %v2299, %v2652
        %v2701 = vmul.f32 %v2300, %v2653
        %v2702 = vmul.f32 %v2301, %v2654
        %v2703 = vmul.f32 %v2302, %v2655
        %v2704 = vmul.f32 %v2303, %v2656
        %v2705 = vmul.f32 %v2304, %v2657
        %v2706 = vmul.f32 %v2305, %v2658
        %v2707 = vmul.f32 %v2306, %v2659
        %v2708 = vadd.f32 %v2660, %v2661
        %v2709 = vadd.f32 %v2708, %v2662
        %v2710 = vadd.f32 %v2709, %v2663
        %v2711 = vadd.f32 %v2710, %v2664
        %v2712 = vadd.f32 %v2711, %v2665
        %v2713 = vadd.f32 %v2712, %v2666
        %v2714 = vadd.f32 %v2713, %v2667
        %v2715 = vadd.f32 %v2714, %v2668
        %v2716 = vadd.f32 %v2715, %v2669
        %v2717 = vadd.f32 %v2716, %v2670
        %v2718 = vadd.f32 %v2717, %v2671
        %v2719 = vadd.f32 %v2718, %v2672
        %v2720 = vadd.f32 %v2719, %v2673
        %v2721 = vadd.f32 %v2720, %v2674
        %v2722 = vadd.f32 %v2721, %v2675
        %v2723 = vadd.f32 %v2722, %v2676
        %v2724 = vadd.f32 %v2723, %v2677
        %v2725 = vadd.f32 %v2724, %v2678
        %v2726 = vadd.f32 %v2725, %v2679
        %v2727 = vadd.f32 %v2726, %v2680
        %v2728 = vadd.f32 %v2727, %v2681
        %v2729 = vadd.f32 %v2728, %v2682
        %v2730 = vadd.f32 %v2729, %v2683
        %v2731 = vadd.f32 %v2730, %v2684
        %v2732 = vadd.f32 %v2731, %v2685
        %v2733 = vadd.f32 %v2732, %v2686
        %v2734 = vadd.f32 %v2733, %v2687
        %v2735 = vadd.f32 %v2734, %v2688
        %v2736 = vadd.f32 %v2735, %v2689
        %v2737 = vadd.f32 %v2736, %v2690
        %v2738 = vadd.f32 %v2737, %v2691
        %v2739 = vadd.f32 %v2738, %v2692
        %v2740 = vadd.f32 %v2739, %v2693
        %v2741 = vadd.f32 %v2740, %v2694
        %v2742 = vadd.f32 %v2741, %v2695
        %v2743 = vadd.f32 %v2742, %v2696
        %v2744 = vadd.f32 %v2743, %v2697
        %v2745 = vadd.f32 %v2744, %v2698
        %v2746 = vadd.f32 %v2745, %v2699
        %v2747 = vadd.f32 %v2746, %v2700
        %v2748 = vadd.f32 %v2747, %v2701
        %v2749 = vadd.f32 %v2748, %v2702
        %v2750 = vadd.f32 %v2749, %v2703
        %v2751 = vadd.f32 %v2750, %v2704
        %v2752 = vadd.f32 %v2751, %v2705
        %v2753 = vadd.f32 %v2752, %v2706
        %v2754 = vadd.f32 %v2753, %v2707
        %v2755 = vrot.slane %v2754, 4
        %v2756 = vadd.f32 %v2754, %v2755
        %v2757 = vrot.slane %v2756, 2
        %v2758 = vadd.f32 %v2756, %v2757
        %v2759 = vrot.slane %v2758, 1
        %v2760 = vadd.f32 %v2758, %v2759
        %v2761 = vld [vmem:[%s2456 + $0x2] sm:$0x1]
        %v2762 = vadd.f32 %v2761, %v2760
        %2763 = vst [vmem:[%s2456 + $0x2] sm:$0x1] %v2762
        %v2764 = vld [vmem:[%s1187] sm:$0xff]
        %v2765 = vld [vmem:[%s1187 + $0x8] sm:$0xff]
        %v2766 = vld [vmem:[%s1187 + $0x10] sm:$0xff]
        %v2767 = vld [vmem:[%s1187 + $0x18] sm:$0xff]
        %v2768 = vld [vmem:[%s1187 + $0x20] sm:$0xff]
        %v2769 = vld [vmem:[%s1187 + $0x28] sm:$0xff]
        %v2770 = vld [vmem:[%s1187 + $0x30] sm:$0xff]
        %v2771 = vld [vmem:[%s1187 + $0x38] sm:$0xff]
        %v2772 = vld [vmem:[%s1187 + $0x40] sm:$0xff]
        %v2773 = vld [vmem:[%s1187 + $0x48] sm:$0xff]
        %v2774 = vld [vmem:[%s1187 + $0x50] sm:$0xff]
        %v2775 = vld [vmem:[%s1187 + $0x58] sm:$0xff]
        %v2776 = vld [vmem:[%s1187 + $0x60] sm:$0xff]
        %v2777 = vld [vmem:[%s1187 + $0x68] sm:$0xff]
        %v2778 = vld [vmem:[%s1187 + $0x70] sm:$0xff]
        %v2779 = vld [vmem:[%s1187 + $0x78] sm:$0xff]
        %v2780 = vld [vmem:[%s1187 + $0x80] sm:$0xff]
        %v2781 = vld [vmem:[%s1187 + $0x88] sm:$0xff]
        %v2782 = vld [vmem:[%s1187 + $0x90] sm:$0xff]
        %v2783 = vld [vmem:[%s1187 + $0x98] sm:$0xff]
        %v2784 = vld [vmem:[%s1187 + $0xa0] sm:$0xff]
        %v2785 = vld [vmem:[%s1187 + $0xa8] sm:$0xff]
        %v2786 = vld [vmem:[%s1187 + $0xb0] sm:$0xff]
        %v2787 = vld [vmem:[%s1187 + $0xb8] sm:$0xff]
        %v2788 = vld [vmem:[%s1187 + $0xc0] sm:$0xff]
        %v2789 = vld [vmem:[%s1187 + $0xc8] sm:$0xff]
        %v2790 = vld [vmem:[%s1187 + $0xd0] sm:$0xff]
        %v2791 = vld [vmem:[%s1187 + $0xd8] sm:$0xff]
        %v2792 = vld [vmem:[%s1187 + $0xe0] sm:$0xff]
        %v2793 = vld [vmem:[%s1187 + $0xe8] sm:$0xff]
        %v2794 = vld [vmem:[%s1187 + $0xf0] sm:$0xff]
        %v2795 = vld [vmem:[%s1187 + $0xf8] sm:$0xff]
        %v2796 = vld [vmem:[%s1187 + $0x100] sm:$0xff]
        %v2797 = vld [vmem:[%s1187 + $0x108] sm:$0xff]
        %v2798 = vld [vmem:[%s1187 + $0x110] sm:$0xff]
        %v2799 = vld [vmem:[%s1187 + $0x118] sm:$0xff]
        %v2800 = vld [vmem:[%s1187 + $0x120] sm:$0xff]
        %v2801 = vld [vmem:[%s1187 + $0x128] sm:$0xff]
        %v2802 = vld [vmem:[%s1187 + $0x130] sm:$0xff]
        %v2803 = vld [vmem:[%s1187 + $0x138] sm:$0xff]
        %v2804 = vld [vmem:[%s1187 + $0x140] sm:$0xff]
        %v2805 = vld [vmem:[%s1187 + $0x148] sm:$0xff]
        %v2806 = vld [vmem:[%s1187 + $0x150] sm:$0xff]
        %v2807 = vld [vmem:[%s1187 + $0x158] sm:$0xff]
        %v2808 = vld [vmem:[%s1187 + $0x160] sm:$0xff]
        %v2809 = vld [vmem:[%s1187 + $0x168] sm:$0xff]
        %v2810 = vld [vmem:[%s1187 + $0x170] sm:$0xff]
        %v2811 = vld [vmem:[%s1187 + $0x178] sm:$0xff]
        %v2812 = vmul.f32 %v2259, %v2764
        %v2813 = vmul.f32 %v2260, %v2765
        %v2814 = vmul.f32 %v2261, %v2766
        %v2815 = vmul.f32 %v2262, %v2767
        %v2816 = vmul.f32 %v2263, %v2768
        %v2817 = vmul.f32 %v2264, %v2769
        %v2818 = vmul.f32 %v2265, %v2770
        %v2819 = vmul.f32 %v2266, %v2771
        %v2820 = vmul.f32 %v2267, %v2772
        %v2821 = vmul.f32 %v2268, %v2773
        %v2822 = vmul.f32 %v2269, %v2774
        %v2823 = vmul.f32 %v2270, %v2775
        %v2824 = vmul.f32 %v2271, %v2776
        %v2825 = vmul.f32 %v2272, %v2777
        %v2826 = vmul.f32 %v2273, %v2778
        %v2827 = vmul.f32 %v2274, %v2779
        %v2828 = vmul.f32 %v2275, %v2780
        %v2829 = vmul.f32 %v2276, %v2781
        %v2830 = vmul.f32 %v2277, %v2782
        %v2831 = vmul.f32 %v2278, %v2783
        %v2832 = vmul.f32 %v2279, %v2784
        %v2833 = vmul.f32 %v2280, %v2785
        %v2834 = vmul.f32 %v2281, %v2786
        %v2835 = vmul.f32 %v2282, %v2787
        %v2836 = vmul.f32 %v2283, %v2788
        %v2837 = vmul.f32 %v2284, %v2789
        %v2838 = vmul.f32 %v2285, %v2790
        %v2839 = vmul.f32 %v2286, %v2791
        %v2840 = vmul.f32 %v2287, %v2792
        %v2841 = vmul.f32 %v2288, %v2793
        %v2842 = vmul.f32 %v2289, %v2794
        %v2843 = vmul.f32 %v2290, %v2795
        %v2844 = vmul.f32 %v2291, %v2796
        %v2845 = vmul.f32 %v2292, %v2797
        %v2846 = vmul.f32 %v2293, %v2798
        %v2847 = vmul.f32 %v2294, %v2799
        %v2848 = vmul.f32 %v2295, %v2800
        %v2849 = vmul.f32 %v2296, %v2801
        %v2850 = vmul.f32 %v2297, %v2802
        %v2851 = vmul.f32 %v2298, %v2803
        %v2852 = vmul.f32 %v2299, %v2804
        %v2853 = vmul.f32 %v2300, %v2805
        %v2854 = vmul.f32 %v2301, %v2806
        %v2855 = vmul.f32 %v2302, %v2807
        %v2856 = vmul.f32 %v2303, %v2808
        %v2857 = vmul.f32 %v2304, %v2809
        %v2858 = vmul.f32 %v2305, %v2810
        %v2859 = vmul.f32 %v2306, %v2811
        %v2860 = vadd.f32 %v2812, %v2813
        %v2861 = vadd.f32 %v2860, %v2814
        %v2862 = vadd.f32 %v2861, %v2815
        %v2863 = vadd.f32 %v2862, %v2816
        %v2864 = vadd.f32 %v2863, %v2817
        %v2865 = vadd.f32 %v2864, %v2818
        %v2866 = vadd.f32 %v2865, %v2819
        %v2867 = vadd.f32 %v2866, %v2820
        %v2868 = vadd.f32 %v2867, %v2821
        %v2869 = vadd.f32 %v2868, %v2822
        %v2870 = vadd.f32 %v2869, %v2823
        %v2871 = vadd.f32 %v2870, %v2824
        %v2872 = vadd.f32 %v2871, %v2825
        %v2873 = vadd.f32 %v2872, %v2826
        %v2874 = vadd.f32 %v2873, %v2827
        %v2875 = vadd.f32 %v2874, %v2828
        %v2876 = vadd.f32 %v2875, %v2829
        %v2877 = vadd.f32 %v2876, %v2830
        %v2878 = vadd.f32 %v2877, %v2831
        %v2879 = vadd.f32 %v2878, %v2832
        %v2880 = vadd.f32 %v2879, %v2833
        %v2881 = vadd.f32 %v2880, %v2834
        %v2882 = vadd.f32 %v2881, %v2835
        %v2883 = vadd.f32 %v2882, %v2836
        %v2884 = vadd.f32 %v2883, %v2837
        %v2885 = vadd.f32 %v2884, %v2838
        %v2886 = vadd.f32 %v2885, %v2839
        %v2887 = vadd.f32 %v2886, %v2840
        %v2888 = vadd.f32 %v2887, %v2841
        %v2889 = vadd.f32 %v2888, %v2842
        %v2890 = vadd.f32 %v2889, %v2843
        %v2891 = vadd.f32 %v2890, %v2844
        %v2892 = vadd.f32 %v2891, %v2845
        %v2893 = vadd.f32 %v2892, %v2846
        %v2894 = vadd.f32 %v2893, %v2847
        %v2895 = vadd.f32 %v2894, %v2848
        %v2896 = vadd.f32 %v2895, %v2849
        %v2897 = vadd.f32 %v2896, %v2850
        %v2898 = vadd.f32 %v2897, %v2851
        %v2899 = vadd.f32 %v2898, %v2852
        %v2900 = vadd.f32 %v2899, %v2853
        %v2901 = vadd.f32 %v2900, %v2854
        %v2902 = vadd.f32 %v2901, %v2855
        %v2903 = vadd.f32 %v2902, %v2856
        %v2904 = vadd.f32 %v2903, %v2857
        %v2905 = vadd.f32 %v2904, %v2858
        %v2906 = vadd.f32 %v2905, %v2859
        %v2907 = vrot.slane %v2906, 4
        %v2908 = vadd.f32 %v2906, %v2907
        %v2909 = vrot.slane %v2908, 2
        %v2910 = vadd.f32 %v2908, %v2909
        %v2911 = vrot.slane %v2910, 1
        %v2912 = vadd.f32 %v2910, %v2911
        %v2913 = vld [vmem:[%s2456 + $0x3] sm:$0x1]
        %v2914 = vadd.f32 %v2913, %v2912
        %2915 = vst [vmem:[%s2456 + $0x3] sm:$0x1] %v2914
        %v2916 = vld [vmem:[%s1340] sm:$0xff]
        %v2917 = vld [vmem:[%s1340 + $0x8] sm:$0xff]
        %v2918 = vld [vmem:[%s1340 + $0x10] sm:$0xff]
        %v2919 = vld [vmem:[%s1340 + $0x18] sm:$0xff]
        %v2920 = vld [vmem:[%s1340 + $0x20] sm:$0xff]
        %v2921 = vld [vmem:[%s1340 + $0x28] sm:$0xff]
        %v2922 = vld [vmem:[%s1340 + $0x30] sm:$0xff]
        %v2923 = vld [vmem:[%s1340 + $0x38] sm:$0xff]
        %v2924 = vld [vmem:[%s1340 + $0x40] sm:$0xff]
        %v2925 = vld [vmem:[%s1340 + $0x48] sm:$0xff]
        %v2926 = vld [vmem:[%s1340 + $0x50] sm:$0xff]
        %v2927 = vld [vmem:[%s1340 + $0x58] sm:$0xff]
        %v2928 = vld [vmem:[%s1340 + $0x60] sm:$0xff]
        %v2929 = vld [vmem:[%s1340 + $0x68] sm:$0xff]
        %v2930 = vld [vmem:[%s1340 + $0x70] sm:$0xff]
        %v2931 = vld [vmem:[%s1340 + $0x78] sm:$0xff]
        %v2932 = vld [vmem:[%s1340 + $0x80] sm:$0xff]
        %v2933 = vld [vmem:[%s1340 + $0x88] sm:$0xff]
        %v2934 = vld [vmem:[%s1340 + $0x90] sm:$0xff]
        %v2935 = vld [vmem:[%s1340 + $0x98] sm:$0xff]
        %v2936 = vld [vmem:[%s1340 + $0xa0] sm:$0xff]
        %v2937 = vld [vmem:[%s1340 + $0xa8] sm:$0xff]
        %v2938 = vld [vmem:[%s1340 + $0xb0] sm:$0xff]
        %v2939 = vld [vmem:[%s1340 + $0xb8] sm:$0xff]
        %v2940 = vld [vmem:[%s1340 + $0xc0] sm:$0xff]
        %v2941 = vld [vmem:[%s1340 + $0xc8] sm:$0xff]
        %v2942 = vld [vmem:[%s1340 + $0xd0] sm:$0xff]
        %v2943 = vld [vmem:[%s1340 + $0xd8] sm:$0xff]
        %v2944 = vld [vmem:[%s1340 + $0xe0] sm:$0xff]
        %v2945 = vld [vmem:[%s1340 + $0xe8] sm:$0xff]
        %v2946 = vld [vmem:[%s1340 + $0xf0] sm:$0xff]
        %v2947 = vld [vmem:[%s1340 + $0xf8] sm:$0xff]
        %v2948 = vld [vmem:[%s1340 + $0x100] sm:$0xff]
        %v2949 = vld [vmem:[%s1340 + $0x108] sm:$0xff]
        %v2950 = vld [vmem:[%s1340 + $0x110] sm:$0xff]
        %v2951 = vld [vmem:[%s1340 + $0x118] sm:$0xff]
        %v2952 = vld [vmem:[%s1340 + $0x120] sm:$0xff]
        %v2953 = vld [vmem:[%s1340 + $0x128] sm:$0xff]
        %v2954 = vld [vmem:[%s1340 + $0x130] sm:$0xff]
        %v2955 = vld [vmem:[%s1340 + $0x138] sm:$0xff]
        %v2956 = vld [vmem:[%s1340 + $0x140] sm:$0xff]
        %v2957 = vld [vmem:[%s1340 + $0x148] sm:$0xff]
        %v2958 = vld [vmem:[%s1340 + $0x150] sm:$0xff]
        %v2959 = vld [vmem:[%s1340 + $0x158] sm:$0xff]
        %v2960 = vld [vmem:[%s1340 + $0x160] sm:$0xff]
        %v2961 = vld [vmem:[%s1340 + $0x168] sm:$0xff]
        %v2962 = vld [vmem:[%s1340 + $0x170] sm:$0xff]
        %v2963 = vld [vmem:[%s1340 + $0x178] sm:$0xff]
        %v2964 = vmul.f32 %v2259, %v2916
        %v2965 = vmul.f32 %v2260, %v2917
        %v2966 = vmul.f32 %v2261, %v2918
        %v2967 = vmul.f32 %v2262, %v2919
        %v2968 = vmul.f32 %v2263, %v2920
        %v2969 = vmul.f32 %v2264, %v2921
        %v2970 = vmul.f32 %v2265, %v2922
        %v2971 = vmul.f32 %v2266, %v2923
        %v2972 = vmul.f32 %v2267, %v2924
        %v2973 = vmul.f32 %v2268, %v2925
        %v2974 = vmul.f32 %v2269, %v2926
        %v2975 = vmul.f32 %v2270, %v2927
        %v2976 = vmul.f32 %v2271, %v2928
        %v2977 = vmul.f32 %v2272, %v2929
        %v2978 = vmul.f32 %v2273, %v2930
        %v2979 = vmul.f32 %v2274, %v2931
        %v2980 = vmul.f32 %v2275, %v2932
        %v2981 = vmul.f32 %v2276, %v2933
        %v2982 = vmul.f32 %v2277, %v2934
        %v2983 = vmul.f32 %v2278, %v2935
        %v2984 = vmul.f32 %v2279, %v2936
        %v2985 = vmul.f32 %v2280, %v2937
        %v2986 = vmul.f32 %v2281, %v2938
        %v2987 = vmul.f32 %v2282, %v2939
        %v2988 = vmul.f32 %v2283, %v2940
        %v2989 = vmul.f32 %v2284, %v2941
        %v2990 = vmul.f32 %v2285, %v2942
        %v2991 = vmul.f32 %v2286, %v2943
        %v2992 = vmul.f32 %v2287, %v2944
        %v2993 = vmul.f32 %v2288, %v2945
        %v2994 = vmul.f32 %v2289, %v2946
        %v2995 = vmul.f32 %v2290, %v2947
        %v2996 = vmul.f32 %v2291, %v2948
        %v2997 = vmul.f32 %v2292, %v2949
        %v2998 = vmul.f32 %v2293, %v2950
        %v2999 = vmul.f32 %v2294, %v2951
        %v3000 = vmul.f32 %v2295, %v2952
        %v3001 = vmul.f32 %v2296, %v2953
        %v3002 = vmul.f32 %v2297, %v2954
        %v3003 = vmul.f32 %v2298, %v2955
        %v3004 = vmul.f32 %v2299, %v2956
        %v3005 = vmul.f32 %v2300, %v2957
        %v3006 = vmul.f32 %v2301, %v2958
        %v3007 = vmul.f32 %v2302, %v2959
        %v3008 = vmul.f32 %v2303, %v2960
        %v3009 = vmul.f32 %v2304, %v2961
        %v3010 = vmul.f32 %v2305, %v2962
        %v3011 = vmul.f32 %v2306, %v2963
        %v3012 = vadd.f32 %v2964, %v2965
        %v3013 = vadd.f32 %v3012, %v2966
        %v3014 = vadd.f32 %v3013, %v2967
        %v3015 = vadd.f32 %v3014, %v2968
        %v3016 = vadd.f32 %v3015, %v2969
        %v3017 = vadd.f32 %v3016, %v2970
        %v3018 = vadd.f32 %v3017, %v2971
        %v3019 = vadd.f32 %v3018, %v2972
        %v3020 = vadd.f32 %v3019, %v2973
        %v3021 = vadd.f32 %v3020, %v2974
        %v3022 = vadd.f32 %v3021, %v2975
        %v3023 = vadd.f32 %v3022, %v2976
        %v3024 = vadd.f32 %v3023, %v2977
        %v3025 = vadd.f32 %v3024, %v2978
        %v3026 = vadd.f32 %v3025, %v2979
        %v3027 = vadd.f32 %v3026, %v2980
        %v3028 = vadd.f32 %v3027, %v2981
        %v3029 = vadd.f32 %v3028, %v2982
        %v3030 = vadd.f32 %v3029, %v2983
        %v3031 = vadd.f32 %v3030, %v2984
        %v3032 = vadd.f32 %v3031, %v2985
        %v3033 = vadd.f32 %v3032, %v2986
        %v3034 = vadd.f32 %v3033, %v2987
        %v3035 = vadd.f32 %v3034, %v2988
        %v3036 = vadd.f32 %v3035, %v2989
        %v3037 = vadd.f32 %v3036, %v2990
        %v3038 = vadd.f32 %v3037, %v2991
        %v3039 = vadd.f32 %v3038, %v2992
        %v3040 = vadd.f32 %v3039, %v2993
        %v3041 = vadd.f32 %v3040, %v2994
        %v3042 = vadd.f32 %v3041, %v2995
        %v3043 = vadd.f32 %v3042, %v2996
        %v3044 = vadd.f32 %v3043, %v2997
        %v3045 = vadd.f32 %v3044, %v2998
        %v3046 = vadd.f32 %v3045, %v2999
        %v3047 = vadd.f32 %v3046, %v3000
        %v3048 = vadd.f32 %v3047, %v3001
        %v3049 = vadd.f32 %v3048, %v3002
        %v3050 = vadd.f32 %v3049, %v3003
        %v3051 = vadd.f32 %v3050, %v3004
        %v3052 = vadd.f32 %v3051, %v3005
        %v3053 = vadd.f32 %v3052, %v3006
        %v3054 = vadd.f32 %v3053, %v3007
        %v3055 = vadd.f32 %v3054, %v3008
        %v3056 = vadd.f32 %v3055, %v3009
        %v3057 = vadd.f32 %v3056, %v3010
        %v3058 = vadd.f32 %v3057, %v3011
        %v3059 = vrot.slane %v3058, 4
        %v3060 = vadd.f32 %v3058, %v3059
        %v3061 = vrot.slane %v3060, 2
        %v3062 = vadd.f32 %v3060, %v3061
        %v3063 = vrot.slane %v3062, 1
        %v3064 = vadd.f32 %v3062, %v3063
        %v3065 = vld [vmem:[%s2456 + $0x4] sm:$0x1]
        %v3066 = vadd.f32 %v3065, %v3064
        %3067 = vst [vmem:[%s2456 + $0x4] sm:$0x1] %v3066
        %v3068 = vld [vmem:[%s1493] sm:$0xff]
        %v3069 = vld [vmem:[%s1493 + $0x8] sm:$0xff]
        %v3070 = vld [vmem:[%s1493 + $0x10] sm:$0xff]
        %v3071 = vld [vmem:[%s1493 + $0x18] sm:$0xff]
        %v3072 = vld [vmem:[%s1493 + $0x20] sm:$0xff]
        %v3073 = vld [vmem:[%s1493 + $0x28] sm:$0xff]
        %v3074 = vld [vmem:[%s1493 + $0x30] sm:$0xff]
        %v3075 = vld [vmem:[%s1493 + $0x38] sm:$0xff]
        %v3076 = vld [vmem:[%s1493 + $0x40] sm:$0xff]
        %v3077 = vld [vmem:[%s1493 + $0x48] sm:$0xff]
        %v3078 = vld [vmem:[%s1493 + $0x50] sm:$0xff]
        %v3079 = vld [vmem:[%s1493 + $0x58] sm:$0xff]
        %v3080 = vld [vmem:[%s1493 + $0x60] sm:$0xff]
        %v3081 = vld [vmem:[%s1493 + $0x68] sm:$0xff]
        %v3082 = vld [vmem:[%s1493 + $0x70] sm:$0xff]
        %v3083 = vld [vmem:[%s1493 + $0x78] sm:$0xff]
        %v3084 = vld [vmem:[%s1493 + $0x80] sm:$0xff]
        %v3085 = vld [vmem:[%s1493 + $0x88] sm:$0xff]
        %v3086 = vld [vmem:[%s1493 + $0x90] sm:$0xff]
        %v3087 = vld [vmem:[%s1493 + $0x98] sm:$0xff]
        %v3088 = vld [vmem:[%s1493 + $0xa0] sm:$0xff]
        %v3089 = vld [vmem:[%s1493 + $0xa8] sm:$0xff]
        %v3090 = vld [vmem:[%s1493 + $0xb0] sm:$0xff]
        %v3091 = vld [vmem:[%s1493 + $0xb8] sm:$0xff]
        %v3092 = vld [vmem:[%s1493 + $0xc0] sm:$0xff]
        %v3093 = vld [vmem:[%s1493 + $0xc8] sm:$0xff]
        %v3094 = vld [vmem:[%s1493 + $0xd0] sm:$0xff]
        %v3095 = vld [vmem:[%s1493 + $0xd8] sm:$0xff]
        %v3096 = vld [vmem:[%s1493 + $0xe0] sm:$0xff]
        %v3097 = vld [vmem:[%s1493 + $0xe8] sm:$0xff]
        %v3098 = vld [vmem:[%s1493 + $0xf0] sm:$0xff]
        %v3099 = vld [vmem:[%s1493 + $0xf8] sm:$0xff]
        %v3100 = vld [vmem:[%s1493 + $0x100] sm:$0xff]
        %v3101 = vld [vmem:[%s1493 + $0x108] sm:$0xff]
        %v3102 = vld [vmem:[%s1493 + $0x110] sm:$0xff]
        %v3103 = vld [vmem:[%s1493 + $0x118] sm:$0xff]
        %v3104 = vld [vmem:[%s1493 + $0x120] sm:$0xff]
        %v3105 = vld [vmem:[%s1493 + $0x128] sm:$0xff]
        %v3106 = vld [vmem:[%s1493 + $0x130] sm:$0xff]
        %v3107 = vld [vmem:[%s1493 + $0x138] sm:$0xff]
        %v3108 = vld [vmem:[%s1493 + $0x140] sm:$0xff]
        %v3109 = vld [vmem:[%s1493 + $0x148] sm:$0xff]
        %v3110 = vld [vmem:[%s1493 + $0x150] sm:$0xff]
        %v3111 = vld [vmem:[%s1493 + $0x158] sm:$0xff]
        %v3112 = vld [vmem:[%s1493 + $0x160] sm:$0xff]
        %v3113 = vld [vmem:[%s1493 + $0x168] sm:$0xff]
        %v3114 = vld [vmem:[%s1493 + $0x170] sm:$0xff]
        %v3115 = vld [vmem:[%s1493 + $0x178] sm:$0xff]
        %v3116 = vmul.f32 %v2259, %v3068
        %v3117 = vmul.f32 %v2260, %v3069
        %v3118 = vmul.f32 %v2261, %v3070
        %v3119 = vmul.f32 %v2262, %v3071
        %v3120 = vmul.f32 %v2263, %v3072
        %v3121 = vmul.f32 %v2264, %v3073
        %v3122 = vmul.f32 %v2265, %v3074
        %v3123 = vmul.f32 %v2266, %v3075
        %v3124 = vmul.f32 %v2267, %v3076
        %v3125 = vmul.f32 %v2268, %v3077
        %v3126 = vmul.f32 %v2269, %v3078
        %v3127 = vmul.f32 %v2270, %v3079
        %v3128 = vmul.f32 %v2271, %v3080
        %v3129 = vmul.f32 %v2272, %v3081
        %v3130 = vmul.f32 %v2273, %v3082
        %v3131 = vmul.f32 %v2274, %v3083
        %v3132 = vmul.f32 %v2275, %v3084
        %v3133 = vmul.f32 %v2276, %v3085
        %v3134 = vmul.f32 %v2277, %v3086
        %v3135 = vmul.f32 %v2278, %v3087
        %v3136 = vmul.f32 %v2279, %v3088
        %v3137 = vmul.f32 %v2280, %v3089
        %v3138 = vmul.f32 %v2281, %v3090
        %v3139 = vmul.f32 %v2282, %v3091
        %v3140 = vmul.f32 %v2283, %v3092
        %v3141 = vmul.f32 %v2284, %v3093
        %v3142 = vmul.f32 %v2285, %v3094
        %v3143 = vmul.f32 %v2286, %v3095
        %v3144 = vmul.f32 %v2287, %v3096
        %v3145 = vmul.f32 %v2288, %v3097
        %v3146 = vmul.f32 %v2289, %v3098
        %v3147 = vmul.f32 %v2290, %v3099
        %v3148 = vmul.f32 %v2291, %v3100
        %v3149 = vmul.f32 %v2292, %v3101
        %v3150 = vmul.f32 %v2293, %v3102
        %v3151 = vmul.f32 %v2294, %v3103
        %v3152 = vmul.f32 %v2295, %v3104
        %v3153 = vmul.f32 %v2296, %v3105
        %v3154 = vmul.f32 %v2297, %v3106
        %v3155 = vmul.f32 %v2298, %v3107
        %v3156 = vmul.f32 %v2299, %v3108
        %v3157 = vmul.f32 %v2300, %v3109
        %v3158 = vmul.f32 %v2301, %v3110
        %v3159 = vmul.f32 %v2302, %v3111
        %v3160 = vmul.f32 %v2303, %v3112
        %v3161 = vmul.f32 %v2304, %v3113
        %v3162 = vmul.f32 %v2305, %v3114
        %v3163 = vmul.f32 %v2306, %v3115
        %v3164 = vadd.f32 %v3116, %v3117
        %v3165 = vadd.f32 %v3164, %v3118
        %v3166 = vadd.f32 %v3165, %v3119
        %v3167 = vadd.f32 %v3166, %v3120
        %v3168 = vadd.f32 %v3167, %v3121
        %v3169 = vadd.f32 %v3168, %v3122
        %v3170 = vadd.f32 %v3169, %v3123
        %v3171 = vadd.f32 %v3170, %v3124
        %v3172 = vadd.f32 %v3171, %v3125
        %v3173 = vadd.f32 %v3172, %v3126
        %v3174 = vadd.f32 %v3173, %v3127
        %v3175 = vadd.f32 %v3174, %v3128
        %v3176 = vadd.f32 %v3175, %v3129
        %v3177 = vadd.f32 %v3176, %v3130
        %v3178 = vadd.f32 %v3177, %v3131
        %v3179 = vadd.f32 %v3178, %v3132
        %v3180 = vadd.f32 %v3179, %v3133
        %v3181 = vadd.f32 %v3180, %v3134
        %v3182 = vadd.f32 %v3181, %v3135
        %v3183 = vadd.f32 %v3182, %v3136
        %v3184 = vadd.f32 %v3183, %v3137
        %v3185 = vadd.f32 %v3184, %v3138
        %v3186 = vadd.f32 %v3185, %v3139
        %v3187 = vadd.f32 %v3186, %v3140
        %v3188 = vadd.f32 %v3187, %v3141
        %v3189 = vadd.f32 %v3188, %v3142
        %v3190 = vadd.f32 %v3189, %v3143
        %v3191 = vadd.f32 %v3190, %v3144
        %v3192 = vadd.f32 %v3191, %v3145
        %v3193 = vadd.f32 %v3192, %v3146
        %v3194 = vadd.f32 %v3193, %v3147
        %v3195 = vadd.f32 %v3194, %v3148
        %v3196 = vadd.f32 %v3195, %v3149
        %v3197 = vadd.f32 %v3196, %v3150
        %v3198 = vadd.f32 %v3197, %v3151
        %v3199 = vadd.f32 %v3198, %v3152
        %v3200 = vadd.f32 %v3199, %v3153
        %v3201 = vadd.f32 %v3200, %v3154
        %v3202 = vadd.f32 %v3201, %v3155
        %v3203 = vadd.f32 %v3202, %v3156
        %v3204 = vadd.f32 %v3203, %v3157
        %v3205 = vadd.f32 %v3204, %v3158
        %v3206 = vadd.f32 %v3205, %v3159
        %v3207 = vadd.f32 %v3206, %v3160
        %v3208 = vadd.f32 %v3207, %v3161
        %v3209 = vadd.f32 %v3208, %v3162
        %v3210 = vadd.f32 %v3209, %v3163
        %v3211 = vrot.slane %v3210, 4
        %v3212 = vadd.f32 %v3210, %v3211
        %v3213 = vrot.slane %v3212, 2
        %v3214 = vadd.f32 %v3212, %v3213
        %v3215 = vrot.slane %v3214, 1
        %v3216 = vadd.f32 %v3214, %v3215
        %v3217 = vld [vmem:[%s2456 + $0x5] sm:$0x1]
        %v3218 = vadd.f32 %v3217, %v3216
        %3219 = vst [vmem:[%s2456 + $0x5] sm:$0x1] %v3218
        %v3220 = vld [vmem:[%s1646] sm:$0xff]
        %v3221 = vld [vmem:[%s1646 + $0x8] sm:$0xff]
        %v3222 = vld [vmem:[%s1646 + $0x10] sm:$0xff]
        %v3223 = vld [vmem:[%s1646 + $0x18] sm:$0xff]
        %v3224 = vld [vmem:[%s1646 + $0x20] sm:$0xff]
        %v3225 = vld [vmem:[%s1646 + $0x28] sm:$0xff]
        %v3226 = vld [vmem:[%s1646 + $0x30] sm:$0xff]
        %v3227 = vld [vmem:[%s1646 + $0x38] sm:$0xff]
        %v3228 = vld [vmem:[%s1646 + $0x40] sm:$0xff]
        %v3229 = vld [vmem:[%s1646 + $0x48] sm:$0xff]
        %v3230 = vld [vmem:[%s1646 + $0x50] sm:$0xff]
        %v3231 = vld [vmem:[%s1646 + $0x58] sm:$0xff]
        %v3232 = vld [vmem:[%s1646 + $0x60] sm:$0xff]
        %v3233 = vld [vmem:[%s1646 + $0x68] sm:$0xff]
        %v3234 = vld [vmem:[%s1646 + $0x70] sm:$0xff]
        %v3235 = vld [vmem:[%s1646 + $0x78] sm:$0xff]
        %v3236 = vld [vmem:[%s1646 + $0x80] sm:$0xff]
        %v3237 = vld [vmem:[%s1646 + $0x88] sm:$0xff]
        %v3238 = vld [vmem:[%s1646 + $0x90] sm:$0xff]
        %v3239 = vld [vmem:[%s1646 + $0x98] sm:$0xff]
        %v3240 = vld [vmem:[%s1646 + $0xa0] sm:$0xff]
        %v3241 = vld [vmem:[%s1646 + $0xa8] sm:$0xff]
        %v3242 = vld [vmem:[%s1646 + $0xb0] sm:$0xff]
        %v3243 = vld [vmem:[%s1646 + $0xb8] sm:$0xff]
        %v3244 = vld [vmem:[%s1646 + $0xc0] sm:$0xff]
        %v3245 = vld [vmem:[%s1646 + $0xc8] sm:$0xff]
        %v3246 = vld [vmem:[%s1646 + $0xd0] sm:$0xff]
        %v3247 = vld [vmem:[%s1646 + $0xd8] sm:$0xff]
        %v3248 = vld [vmem:[%s1646 + $0xe0] sm:$0xff]
        %v3249 = vld [vmem:[%s1646 + $0xe8] sm:$0xff]
        %v3250 = vld [vmem:[%s1646 + $0xf0] sm:$0xff]
        %v3251 = vld [vmem:[%s1646 + $0xf8] sm:$0xff]
        %v3252 = vld [vmem:[%s1646 + $0x100] sm:$0xff]
        %v3253 = vld [vmem:[%s1646 + $0x108] sm:$0xff]
        %v3254 = vld [vmem:[%s1646 + $0x110] sm:$0xff]
        %v3255 = vld [vmem:[%s1646 + $0x118] sm:$0xff]
        %v3256 = vld [vmem:[%s1646 + $0x120] sm:$0xff]
        %v3257 = vld [vmem:[%s1646 + $0x128] sm:$0xff]
        %v3258 = vld [vmem:[%s1646 + $0x130] sm:$0xff]
        %v3259 = vld [vmem:[%s1646 + $0x138] sm:$0xff]
        %v3260 = vld [vmem:[%s1646 + $0x140] sm:$0xff]
        %v3261 = vld [vmem:[%s1646 + $0x148] sm:$0xff]
        %v3262 = vld [vmem:[%s1646 + $0x150] sm:$0xff]
        %v3263 = vld [vmem:[%s1646 + $0x158] sm:$0xff]
        %v3264 = vld [vmem:[%s1646 + $0x160] sm:$0xff]
        %v3265 = vld [vmem:[%s1646 + $0x168] sm:$0xff]
        %v3266 = vld [vmem:[%s1646 + $0x170] sm:$0xff]
        %v3267 = vld [vmem:[%s1646 + $0x178] sm:$0xff]
        %v3268 = vmul.f32 %v2259, %v3220
        %v3269 = vmul.f32 %v2260, %v3221
        %v3270 = vmul.f32 %v2261, %v3222
        %v3271 = vmul.f32 %v2262, %v3223
        %v3272 = vmul.f32 %v2263, %v3224
        %v3273 = vmul.f32 %v2264, %v3225
        %v3274 = vmul.f32 %v2265, %v3226
        %v3275 = vmul.f32 %v2266, %v3227
        %v3276 = vmul.f32 %v2267, %v3228
        %v3277 = vmul.f32 %v2268, %v3229
        %v3278 = vmul.f32 %v2269, %v3230
        %v3279 = vmul.f32 %v2270, %v3231
        %v3280 = vmul.f32 %v2271, %v3232
        %v3281 = vmul.f32 %v2272, %v3233
        %v3282 = vmul.f32 %v2273, %v3234
        %v3283 = vmul.f32 %v2274, %v3235
        %v3284 = vmul.f32 %v2275, %v3236
        %v3285 = vmul.f32 %v2276, %v3237
        %v3286 = vmul.f32 %v2277, %v3238
        %v3287 = vmul.f32 %v2278, %v3239
        %v3288 = vmul.f32 %v2279, %v3240
        %v3289 = vmul.f32 %v2280, %v3241
        %v3290 = vmul.f32 %v2281, %v3242
        %v3291 = vmul.f32 %v2282, %v3243
        %v3292 = vmul.f32 %v2283, %v3244
        %v3293 = vmul.f32 %v2284, %v3245
        %v3294 = vmul.f32 %v2285, %v3246
        %v3295 = vmul.f32 %v2286, %v3247
        %v3296 = vmul.f32 %v2287, %v3248
        %v3297 = vmul.f32 %v2288, %v3249
        %v3298 = vmul.f32 %v2289, %v3250
        %v3299 = vmul.f32 %v2290, %v3251
        %v3300 = vmul.f32 %v2291, %v3252
        %v3301 = vmul.f32 %v2292, %v3253
        %v3302 = vmul.f32 %v2293, %v3254
        %v3303 = vmul.f32 %v2294, %v3255
        %v3304 = vmul.f32 %v2295, %v3256
        %v3305 = vmul.f32 %v2296, %v3257
        %v3306 = vmul.f32 %v2297, %v3258
        %v3307 = vmul.f32 %v2298, %v3259
        %v3308 = vmul.f32 %v2299, %v3260
        %v3309 = vmul.f32 %v2300, %v3261
        %v3310 = vmul.f32 %v2301, %v3262
        %v3311 = vmul.f32 %v2302, %v3263
        %v3312 = vmul.f32 %v2303, %v3264
        %v3313 = vmul.f32 %v2304, %v3265
        %v3314 = vmul.f32 %v2305, %v3266
        %v3315 = vmul.f32 %v2306, %v3267
        %v3316 = vadd.f32 %v3268, %v3269
        %v3317 = vadd.f32 %v3316, %v3270
        %v3318 = vadd.f32 %v3317, %v3271
        %v3319 = vadd.f32 %v3318, %v3272
        %v3320 = vadd.f32 %v3319, %v3273
        %v3321 = vadd.f32 %v3320, %v3274
        %v3322 = vadd.f32 %v3321, %v3275
        %v3323 = vadd.f32 %v3322, %v3276
        %v3324 = vadd.f32 %v3323, %v3277
        %v3325 = vadd.f32 %v3324, %v3278
        %v3326 = vadd.f32 %v3325, %v3279
        %v3327 = vadd.f32 %v3326, %v3280
        %v3328 = vadd.f32 %v3327, %v3281
        %v3329 = vadd.f32 %v3328, %v3282
        %v3330 = vadd.f32 %v3329, %v3283
        %v3331 = vadd.f32 %v3330, %v3284
        %v3332 = vadd.f32 %v3331, %v3285
        %v3333 = vadd.f32 %v3332, %v3286
        %v3334 = vadd.f32 %v3333, %v3287
        %v3335 = vadd.f32 %v3334, %v3288
        %v3336 = vadd.f32 %v3335, %v3289
        %v3337 = vadd.f32 %v3336, %v3290
        %v3338 = vadd.f32 %v3337, %v3291
        %v3339 = vadd.f32 %v3338, %v3292
        %v3340 = vadd.f32 %v3339, %v3293
        %v3341 = vadd.f32 %v3340, %v3294
        %v3342 = vadd.f32 %v3341, %v3295
        %v3343 = vadd.f32 %v3342, %v3296
        %v3344 = vadd.f32 %v3343, %v3297
        %v3345 = vadd.f32 %v3344, %v3298
        %v3346 = vadd.f32 %v3345, %v3299
        %v3347 = vadd.f32 %v3346, %v3300
        %v3348 = vadd.f32 %v3347, %v3301
        %v3349 = vadd.f32 %v3348, %v3302
        %v3350 = vadd.f32 %v3349, %v3303
        %v3351 = vadd.f32 %v3350, %v3304
        %v3352 = vadd.f32 %v3351, %v3305
        %v3353 = vadd.f32 %v3352, %v3306
        %v3354 = vadd.f32 %v3353, %v3307
        %v3355 = vadd.f32 %v3354, %v3308
        %v3356 = vadd.f32 %v3355, %v3309
        %v3357 = vadd.f32 %v3356, %v3310
        %v3358 = vadd.f32 %v3357, %v3311
        %v3359 = vadd.f32 %v3358, %v3312
        %v3360 = vadd.f32 %v3359, %v3313
        %v3361 = vadd.f32 %v3360, %v3314
        %v3362 = vadd.f32 %v3361, %v3315
        %v3363 = vrot.slane %v3362, 4
        %v3364 = vadd.f32 %v3362, %v3363
        %v3365 = vrot.slane %v3364, 2
        %v3366 = vadd.f32 %v3364, %v3365
        %v3367 = vrot.slane %v3366, 1
        %v3368 = vadd.f32 %v3366, %v3367
        %v3369 = vld [vmem:[%s2456 + $0x6] sm:$0x1]
        %v3370 = vadd.f32 %v3369, %v3368
        %3371 = vst [vmem:[%s2456 + $0x6] sm:$0x1] %v3370
        %v3372 = vld [vmem:[%s1799] sm:$0xff]
        %v3373 = vld [vmem:[%s1799 + $0x8] sm:$0xff]
        %v3374 = vld [vmem:[%s1799 + $0x10] sm:$0xff]
        %v3375 = vld [vmem:[%s1799 + $0x18] sm:$0xff]
        %v3376 = vld [vmem:[%s1799 + $0x20] sm:$0xff]
        %v3377 = vld [vmem:[%s1799 + $0x28] sm:$0xff]
        %v3378 = vld [vmem:[%s1799 + $0x30] sm:$0xff]
        %v3379 = vld [vmem:[%s1799 + $0x38] sm:$0xff]
        %v3380 = vld [vmem:[%s1799 + $0x40] sm:$0xff]
        %v3381 = vld [vmem:[%s1799 + $0x48] sm:$0xff]
        %v3382 = vld [vmem:[%s1799 + $0x50] sm:$0xff]
        %v3383 = vld [vmem:[%s1799 + $0x58] sm:$0xff]
        %v3384 = vld [vmem:[%s1799 + $0x60] sm:$0xff]
        %v3385 = vld [vmem:[%s1799 + $0x68] sm:$0xff]
        %v3386 = vld [vmem:[%s1799 + $0x70] sm:$0xff]
        %v3387 = vld [vmem:[%s1799 + $0x78] sm:$0xff]
        %v3388 = vld [vmem:[%s1799 + $0x80] sm:$0xff]
        %v3389 = vld [vmem:[%s1799 + $0x88] sm:$0xff]
        %v3390 = vld [vmem:[%s1799 + $0x90] sm:$0xff]
        %v3391 = vld [vmem:[%s1799 + $0x98] sm:$0xff]
        %v3392 = vld [vmem:[%s1799 + $0xa0] sm:$0xff]
        %v3393 = vld [vmem:[%s1799 + $0xa8] sm:$0xff]
        %v3394 = vld [vmem:[%s1799 + $0xb0] sm:$0xff]
        %v3395 = vld [vmem:[%s1799 + $0xb8] sm:$0xff]
        %v3396 = vld [vmem:[%s1799 + $0xc0] sm:$0xff]
        %v3397 = vld [vmem:[%s1799 + $0xc8] sm:$0xff]
        %v3398 = vld [vmem:[%s1799 + $0xd0] sm:$0xff]
        %v3399 = vld [vmem:[%s1799 + $0xd8] sm:$0xff]
        %v3400 = vld [vmem:[%s1799 + $0xe0] sm:$0xff]
        %v3401 = vld [vmem:[%s1799 + $0xe8] sm:$0xff]
        %v3402 = vld [vmem:[%s1799 + $0xf0] sm:$0xff]
        %v3403 = vld [vmem:[%s1799 + $0xf8] sm:$0xff]
        %v3404 = vld [vmem:[%s1799 + $0x100] sm:$0xff]
        %v3405 = vld [vmem:[%s1799 + $0x108] sm:$0xff]
        %v3406 = vld [vmem:[%s1799 + $0x110] sm:$0xff]
        %v3407 = vld [vmem:[%s1799 + $0x118] sm:$0xff]
        %v3408 = vld [vmem:[%s1799 + $0x120] sm:$0xff]
        %v3409 = vld [vmem:[%s1799 + $0x128] sm:$0xff]
        %v3410 = vld [vmem:[%s1799 + $0x130] sm:$0xff]
        %v3411 = vld [vmem:[%s1799 + $0x138] sm:$0xff]
        %v3412 = vld [vmem:[%s1799 + $0x140] sm:$0xff]
        %v3413 = vld [vmem:[%s1799 + $0x148] sm:$0xff]
        %v3414 = vld [vmem:[%s1799 + $0x150] sm:$0xff]
        %v3415 = vld [vmem:[%s1799 + $0x158] sm:$0xff]
        %v3416 = vld [vmem:[%s1799 + $0x160] sm:$0xff]
        %v3417 = vld [vmem:[%s1799 + $0x168] sm:$0xff]
        %v3418 = vld [vmem:[%s1799 + $0x170] sm:$0xff]
        %v3419 = vld [vmem:[%s1799 + $0x178] sm:$0xff]
        %v3420 = vmul.f32 %v2259, %v3372
        %v3421 = vmul.f32 %v2260, %v3373
        %v3422 = vmul.f32 %v2261, %v3374
        %v3423 = vmul.f32 %v2262, %v3375
        %v3424 = vmul.f32 %v2263, %v3376
        %v3425 = vmul.f32 %v2264, %v3377
        %v3426 = vmul.f32 %v2265, %v3378
        %v3427 = vmul.f32 %v2266, %v3379
        %v3428 = vmul.f32 %v2267, %v3380
        %v3429 = vmul.f32 %v2268, %v3381
        %v3430 = vmul.f32 %v2269, %v3382
        %v3431 = vmul.f32 %v2270, %v3383
        %v3432 = vmul.f32 %v2271, %v3384
        %v3433 = vmul.f32 %v2272, %v3385
        %v3434 = vmul.f32 %v2273, %v3386
        %v3435 = vmul.f32 %v2274, %v3387
        %v3436 = vmul.f32 %v2275, %v3388
        %v3437 = vmul.f32 %v2276, %v3389
        %v3438 = vmul.f32 %v2277, %v3390
        %v3439 = vmul.f32 %v2278, %v3391
        %v3440 = vmul.f32 %v2279, %v3392
        %v3441 = vmul.f32 %v2280, %v3393
        %v3442 = vmul.f32 %v2281, %v3394
        %v3443 = vmul.f32 %v2282, %v3395
        %v3444 = vmul.f32 %v2283, %v3396
        %v3445 = vmul.f32 %v2284, %v3397
        %v3446 = vmul.f32 %v2285, %v3398
        %v3447 = vmul.f32 %v2286, %v3399
        %v3448 = vmul.f32 %v2287, %v3400
        %v3449 = vmul.f32 %v2288, %v3401
        %v3450 = vmul.f32 %v2289, %v3402
        %v3451 = vmul.f32 %v2290, %v3403
        %v3452 = vmul.f32 %v2291, %v3404
        %v3453 = vmul.f32 %v2292, %v3405
        %v3454 = vmul.f32 %v2293, %v3406
        %v3455 = vmul.f32 %v2294, %v3407
        %v3456 = vmul.f32 %v2295, %v3408
        %v3457 = vmul.f32 %v2296, %v3409
        %v3458 = vmul.f32 %v2297, %v3410
        %v3459 = vmul.f32 %v2298, %v3411
        %v3460 = vmul.f32 %v2299, %v3412
        %v3461 = vmul.f32 %v2300, %v3413
        %v3462 = vmul.f32 %v2301, %v3414
        %v3463 = vmul.f32 %v2302, %v3415
        %v3464 = vmul.f32 %v2303, %v3416
        %v3465 = vmul.f32 %v2304, %v3417
        %v3466 = vmul.f32 %v2305, %v3418
        %v3467 = vmul.f32 %v2306, %v3419
        %v3468 = vadd.f32 %v3420, %v3421
        %v3469 = vadd.f32 %v3468, %v3422
        %v3470 = vadd.f32 %v3469, %v3423
        %v3471 = vadd.f32 %v3470, %v3424
        %v3472 = vadd.f32 %v3471, %v3425
        %v3473 = vadd.f32 %v3472, %v3426
        %v3474 = vadd.f32 %v3473, %v3427
        %v3475 = vadd.f32 %v3474, %v3428
        %v3476 = vadd.f32 %v3475, %v3429
        %v3477 = vadd.f32 %v3476, %v3430
        %v3478 = vadd.f32 %v3477, %v3431
        %v3479 = vadd.f32 %v3478, %v3432
        %v3480 = vadd.f32 %v3479, %v3433
        %v3481 = vadd.f32 %v3480, %v3434
        %v3482 = vadd.f32 %v3481, %v3435
        %v3483 = vadd.f32 %v3482, %v3436
        %v3484 = vadd.f32 %v3483, %v3437
        %v3485 = vadd.f32 %v3484, %v3438
        %v3486 = vadd.f32 %v3485, %v3439
        %v3487 = vadd.f32 %v3486, %v3440
        %v3488 = vadd.f32 %v3487, %v3441
        %v3489 = vadd.f32 %v3488, %v3442
        %v3490 = vadd.f32 %v3489, %v3443
        %v3491 = vadd.f32 %v3490, %v3444
        %v3492 = vadd.f32 %v3491, %v3445
        %v3493 = vadd.f32 %v3492, %v3446
        %v3494 = vadd.f32 %v3493, %v3447
        %v3495 = vadd.f32 %v3494, %v3448
        %v3496 = vadd.f32 %v3495, %v3449
        %v3497 = vadd.f32 %v3496, %v3450
        %v3498 = vadd.f32 %v3497, %v3451
        %v3499 = vadd.f32 %v3498, %v3452
        %v3500 = vadd.f32 %v3499, %v3453
        %v3501 = vadd.f32 %v3500, %v3454
        %v3502 = vadd.f32 %v3501, %v3455
        %v3503 = vadd.f32 %v3502, %v3456
        %v3504 = vadd.f32 %v3503, %v3457
        %v3505 = vadd.f32 %v3504, %v3458
        %v3506 = vadd.f32 %v3505, %v3459
        %v3507 = vadd.f32 %v3506, %v3460
        %v3508 = vadd.f32 %v3507, %v3461
        %v3509 = vadd.f32 %v3508, %v3462
        %v3510 = vadd.f32 %v3509, %v3463
        %v3511 = vadd.f32 %v3510, %v3464
        %v3512 = vadd.f32 %v3511, %v3465
        %v3513 = vadd.f32 %v3512, %v3466
        %v3514 = vadd.f32 %v3513, %v3467
        %v3515 = vrot.slane %v3514, 4
        %v3516 = vadd.f32 %v3514, %v3515
        %v3517 = vrot.slane %v3516, 2
        %v3518 = vadd.f32 %v3516, %v3517
        %v3519 = vrot.slane %v3518, 1
        %v3520 = vadd.f32 %v3518, %v3519
        %v3521 = vld [vmem:[%s2456 + $0x7] sm:$0x1]
        %v3522 = vadd.f32 %v3521, %v3520
        %3523 = vst [vmem:[%s2456 + $0x7] sm:$0x1] %v3522
        %v3524 = vld [vmem:[%s1952] sm:$0xff]
        %v3525 = vld [vmem:[%s1952 + $0x8] sm:$0xff]
        %v3526 = vld [vmem:[%s1952 + $0x10] sm:$0xff]
        %v3527 = vld [vmem:[%s1952 + $0x18] sm:$0xff]
        %v3528 = vld [vmem:[%s1952 + $0x20] sm:$0xff]
        %v3529 = vld [vmem:[%s1952 + $0x28] sm:$0xff]
        %v3530 = vld [vmem:[%s1952 + $0x30] sm:$0xff]
        %v3531 = vld [vmem:[%s1952 + $0x38] sm:$0xff]
        %v3532 = vld [vmem:[%s1952 + $0x40] sm:$0xff]
        %v3533 = vld [vmem:[%s1952 + $0x48] sm:$0xff]
        %v3534 = vld [vmem:[%s1952 + $0x50] sm:$0xff]
        %v3535 = vld [vmem:[%s1952 + $0x58] sm:$0xff]
        %v3536 = vld [vmem:[%s1952 + $0x60] sm:$0xff]
        %v3537 = vld [vmem:[%s1952 + $0x68] sm:$0xff]
        %v3538 = vld [vmem:[%s1952 + $0x70] sm:$0xff]
        %v3539 = vld [vmem:[%s1952 + $0x78] sm:$0xff]
        %v3540 = vld [vmem:[%s1952 + $0x80] sm:$0xff]
        %v3541 = vld [vmem:[%s1952 + $0x88] sm:$0xff]
        %v3542 = vld [vmem:[%s1952 + $0x90] sm:$0xff]
        %v3543 = vld [vmem:[%s1952 + $0x98] sm:$0xff]
        %v3544 = vld [vmem:[%s1952 + $0xa0] sm:$0xff]
        %v3545 = vld [vmem:[%s1952 + $0xa8] sm:$0xff]
        %v3546 = vld [vmem:[%s1952 + $0xb0] sm:$0xff]
        %v3547 = vld [vmem:[%s1952 + $0xb8] sm:$0xff]
        %v3548 = vld [vmem:[%s1952 + $0xc0] sm:$0xff]
        %v3549 = vld [vmem:[%s1952 + $0xc8] sm:$0xff]
        %v3550 = vld [vmem:[%s1952 + $0xd0] sm:$0xff]
        %v3551 = vld [vmem:[%s1952 + $0xd8] sm:$0xff]
        %v3552 = vld [vmem:[%s1952 + $0xe0] sm:$0xff]
        %v3553 = vld [vmem:[%s1952 + $0xe8] sm:$0xff]
        %v3554 = vld [vmem:[%s1952 + $0xf0] sm:$0xff]
        %v3555 = vld [vmem:[%s1952 + $0xf8] sm:$0xff]
        %v3556 = vld [vmem:[%s1952 + $0x100] sm:$0xff]
        %v3557 = vld [vmem:[%s1952 + $0x108] sm:$0xff]
        %v3558 = vld [vmem:[%s1952 + $0x110] sm:$0xff]
        %v3559 = vld [vmem:[%s1952 + $0x118] sm:$0xff]
        %v3560 = vld [vmem:[%s1952 + $0x120] sm:$0xff]
        %v3561 = vld [vmem:[%s1952 + $0x128] sm:$0xff]
        %v3562 = vld [vmem:[%s1952 + $0x130] sm:$0xff]
        %v3563 = vld [vmem:[%s1952 + $0x138] sm:$0xff]
        %v3564 = vld [vmem:[%s1952 + $0x140] sm:$0xff]
        %v3565 = vld [vmem:[%s1952 + $0x148] sm:$0xff]
        %v3566 = vld [vmem:[%s1952 + $0x150] sm:$0xff]
        %v3567 = vld [vmem:[%s1952 + $0x158] sm:$0xff]
        %v3568 = vld [vmem:[%s1952 + $0x160] sm:$0xff]
        %v3569 = vld [vmem:[%s1952 + $0x168] sm:$0xff]
        %v3570 = vld [vmem:[%s1952 + $0x170] sm:$0xff]
        %v3571 = vld [vmem:[%s1952 + $0x178] sm:$0xff]
        %v3572 = vmul.f32 %v2259, %v3524
        %v3573 = vmul.f32 %v2260, %v3525
        %v3574 = vmul.f32 %v2261, %v3526
        %v3575 = vmul.f32 %v2262, %v3527
        %v3576 = vmul.f32 %v2263, %v3528
        %v3577 = vmul.f32 %v2264, %v3529
        %v3578 = vmul.f32 %v2265, %v3530
        %v3579 = vmul.f32 %v2266, %v3531
        %v3580 = vmul.f32 %v2267, %v3532
        %v3581 = vmul.f32 %v2268, %v3533
        %v3582 = vmul.f32 %v2269, %v3534
        %v3583 = vmul.f32 %v2270, %v3535
        %v3584 = vmul.f32 %v2271, %v3536
        %v3585 = vmul.f32 %v2272, %v3537
        %v3586 = vmul.f32 %v2273, %v3538
        %v3587 = vmul.f32 %v2274, %v3539
        %v3588 = vmul.f32 %v2275, %v3540
        %v3589 = vmul.f32 %v2276, %v3541
        %v3590 = vmul.f32 %v2277, %v3542
        %v3591 = vmul.f32 %v2278, %v3543
        %v3592 = vmul.f32 %v2279, %v3544
        %v3593 = vmul.f32 %v2280, %v3545
        %v3594 = vmul.f32 %v2281, %v3546
        %v3595 = vmul.f32 %v2282, %v3547
        %v3596 = vmul.f32 %v2283, %v3548
        %v3597 = vmul.f32 %v2284, %v3549
        %v3598 = vmul.f32 %v2285, %v3550
        %v3599 = vmul.f32 %v2286, %v3551
        %v3600 = vmul.f32 %v2287, %v3552
        %v3601 = vmul.f32 %v2288, %v3553
        %v3602 = vmul.f32 %v2289, %v3554
        %v3603 = vmul.f32 %v2290, %v3555
        %v3604 = vmul.f32 %v2291, %v3556
        %v3605 = vmul.f32 %v2292, %v3557
        %v3606 = vmul.f32 %v2293, %v3558
        %v3607 = vmul.f32 %v2294, %v3559
        %v3608 = vmul.f32 %v2295, %v3560
        %v3609 = vmul.f32 %v2296, %v3561
        %v3610 = vmul.f32 %v2297, %v3562
        %v3611 = vmul.f32 %v2298, %v3563
        %v3612 = vmul.f32 %v2299, %v3564
        %v3613 = vmul.f32 %v2300, %v3565
        %v3614 = vmul.f32 %v2301, %v3566
        %v3615 = vmul.f32 %v2302, %v3567
        %v3616 = vmul.f32 %v2303, %v3568
        %v3617 = vmul.f32 %v2304, %v3569
        %v3618 = vmul.f32 %v2305, %v3570
        %v3619 = vmul.f32 %v2306, %v3571
        %v3620 = vadd.f32 %v3572, %v3573
        %v3621 = vadd.f32 %v3620, %v3574
        %v3622 = vadd.f32 %v3621, %v3575
        %v3623 = vadd.f32 %v3622, %v3576
        %v3624 = vadd.f32 %v3623, %v3577
        %v3625 = vadd.f32 %v3624, %v3578
        %v3626 = vadd.f32 %v3625, %v3579
        %v3627 = vadd.f32 %v3626, %v3580
        %v3628 = vadd.f32 %v3627, %v3581
        %v3629 = vadd.f32 %v3628, %v3582
        %v3630 = vadd.f32 %v3629, %v3583
        %v3631 = vadd.f32 %v3630, %v3584
        %v3632 = vadd.f32 %v3631, %v3585
        %v3633 = vadd.f32 %v3632, %v3586
        %v3634 = vadd.f32 %v3633, %v3587
        %v3635 = vadd.f32 %v3634, %v3588
        %v3636 = vadd.f32 %v3635, %v3589
        %v3637 = vadd.f32 %v3636, %v3590
        %v3638 = vadd.f32 %v3637, %v3591
        %v3639 = vadd.f32 %v3638, %v3592
        %v3640 = vadd.f32 %v3639, %v3593
        %v3641 = vadd.f32 %v3640, %v3594
        %v3642 = vadd.f32 %v3641, %v3595
        %v3643 = vadd.f32 %v3642, %v3596
        %v3644 = vadd.f32 %v3643, %v3597
        %v3645 = vadd.f32 %v3644, %v3598
        %v3646 = vadd.f32 %v3645, %v3599
        %v3647 = vadd.f32 %v3646, %v3600
        %v3648 = vadd.f32 %v3647, %v3601
        %v3649 = vadd.f32 %v3648, %v3602
        %v3650 = vadd.f32 %v3649, %v3603
        %v3651 = vadd.f32 %v3650, %v3604
        %v3652 = vadd.f32 %v3651, %v3605
        %v3653 = vadd.f32 %v3652, %v3606
        %v3654 = vadd.f32 %v3653, %v3607
        %v3655 = vadd.f32 %v3654, %v3608
        %v3656 = vadd.f32 %v3655, %v3609
        %v3657 = vadd.f32 %v3656, %v3610
        %v3658 = vadd.f32 %v3657, %v3611
        %v3659 = vadd.f32 %v3658, %v3612
        %v3660 = vadd.f32 %v3659, %v3613
        %v3661 = vadd.f32 %v3660, %v3614
        %v3662 = vadd.f32 %v3661, %v3615
        %v3663 = vadd.f32 %v3662, %v3616
        %v3664 = vadd.f32 %v3663, %v3617
        %v3665 = vadd.f32 %v3664, %v3618
        %v3666 = vadd.f32 %v3665, %v3619
        %v3667 = vrot.slane %v3666, 4
        %v3668 = vadd.f32 %v3666, %v3667
        %v3669 = vrot.slane %v3668, 2
        %v3670 = vadd.f32 %v3668, %v3669
        %v3671 = vrot.slane %v3670, 1
        %v3672 = vadd.f32 %v3670, %v3671
        %v3673 = vld [vmem:[%s2456 + $0x8] sm:$0x1]
        %v3674 = vadd.f32 %v3673, %v3672
        %3675 = vst [vmem:[%s2456 + $0x8] sm:$0x1] %v3674
        %v3676 = vld [vmem:[%s2105] sm:$0xff]
        %v3677 = vld [vmem:[%s2105 + $0x8] sm:$0xff]
        %v3678 = vld [vmem:[%s2105 + $0x10] sm:$0xff]
        %v3679 = vld [vmem:[%s2105 + $0x18] sm:$0xff]
        %v3680 = vld [vmem:[%s2105 + $0x20] sm:$0xff]
        %v3681 = vld [vmem:[%s2105 + $0x28] sm:$0xff]
        %v3682 = vld [vmem:[%s2105 + $0x30] sm:$0xff]
        %v3683 = vld [vmem:[%s2105 + $0x38] sm:$0xff]
        %v3684 = vld [vmem:[%s2105 + $0x40] sm:$0xff]
        %v3685 = vld [vmem:[%s2105 + $0x48] sm:$0xff]
        %v3686 = vld [vmem:[%s2105 + $0x50] sm:$0xff]
        %v3687 = vld [vmem:[%s2105 + $0x58] sm:$0xff]
        %v3688 = vld [vmem:[%s2105 + $0x60] sm:$0xff]
        %v3689 = vld [vmem:[%s2105 + $0x68] sm:$0xff]
        %v3690 = vld [vmem:[%s2105 + $0x70] sm:$0xff]
        %v3691 = vld [vmem:[%s2105 + $0x78] sm:$0xff]
        %v3692 = vld [vmem:[%s2105 + $0x80] sm:$0xff]
        %v3693 = vld [vmem:[%s2105 + $0x88] sm:$0xff]
        %v3694 = vld [vmem:[%s2105 + $0x90] sm:$0xff]
        %v3695 = vld [vmem:[%s2105 + $0x98] sm:$0xff]
        %v3696 = vld [vmem:[%s2105 + $0xa0] sm:$0xff]
        %v3697 = vld [vmem:[%s2105 + $0xa8] sm:$0xff]
        %v3698 = vld [vmem:[%s2105 + $0xb0] sm:$0xff]
        %v3699 = vld [vmem:[%s2105 + $0xb8] sm:$0xff]
        %v3700 = vld [vmem:[%s2105 + $0xc0] sm:$0xff]
        %v3701 = vld [vmem:[%s2105 + $0xc8] sm:$0xff]
        %v3702 = vld [vmem:[%s2105 + $0xd0] sm:$0xff]
        %v3703 = vld [vmem:[%s2105 + $0xd8] sm:$0xff]
        %v3704 = vld [vmem:[%s2105 + $0xe0] sm:$0xff]
        %v3705 = vld [vmem:[%s2105 + $0xe8] sm:$0xff]
        %v3706 = vld [vmem:[%s2105 + $0xf0] sm:$0xff]
        %v3707 = vld [vmem:[%s2105 + $0xf8] sm:$0xff]
        %v3708 = vld [vmem:[%s2105 + $0x100] sm:$0xff]
        %v3709 = vld [vmem:[%s2105 + $0x108] sm:$0xff]
        %v3710 = vld [vmem:[%s2105 + $0x110] sm:$0xff]
        %v3711 = vld [vmem:[%s2105 + $0x118] sm:$0xff]
        %v3712 = vld [vmem:[%s2105 + $0x120] sm:$0xff]
        %v3713 = vld [vmem:[%s2105 + $0x128] sm:$0xff]
        %v3714 = vld [vmem:[%s2105 + $0x130] sm:$0xff]
        %v3715 = vld [vmem:[%s2105 + $0x138] sm:$0xff]
        %v3716 = vld [vmem:[%s2105 + $0x140] sm:$0xff]
        %v3717 = vld [vmem:[%s2105 + $0x148] sm:$0xff]
        %v3718 = vld [vmem:[%s2105 + $0x150] sm:$0xff]
        %v3719 = vld [vmem:[%s2105 + $0x158] sm:$0xff]
        %v3720 = vld [vmem:[%s2105 + $0x160] sm:$0xff]
        %v3721 = vld [vmem:[%s2105 + $0x168] sm:$0xff]
        %v3722 = vld [vmem:[%s2105 + $0x170] sm:$0xff]
        %v3723 = vld [vmem:[%s2105 + $0x178] sm:$0xff]
        %v3724 = vmul.f32 %v2259, %v3676
        %v3725 = vmul.f32 %v2260, %v3677
        %v3726 = vmul.f32 %v2261, %v3678
        %v3727 = vmul.f32 %v2262, %v3679
        %v3728 = vmul.f32 %v2263, %v3680
        %v3729 = vmul.f32 %v2264, %v3681
        %v3730 = vmul.f32 %v2265, %v3682
        %v3731 = vmul.f32 %v2266, %v3683
        %v3732 = vmul.f32 %v2267, %v3684
        %v3733 = vmul.f32 %v2268, %v3685
        %v3734 = vmul.f32 %v2269, %v3686
        %v3735 = vmul.f32 %v2270, %v3687
        %v3736 = vmul.f32 %v2271, %v3688
        %v3737 = vmul.f32 %v2272, %v3689
        %v3738 = vmul.f32 %v2273, %v3690
        %v3739 = vmul.f32 %v2274, %v3691
        %v3740 = vmul.f32 %v2275, %v3692
        %v3741 = vmul.f32 %v2276, %v3693
        %v3742 = vmul.f32 %v2277, %v3694
        %v3743 = vmul.f32 %v2278, %v3695
        %v3744 = vmul.f32 %v2279, %v3696
        %v3745 = vmul.f32 %v2280, %v3697
        %v3746 = vmul.f32 %v2281, %v3698
        %v3747 = vmul.f32 %v2282, %v3699
        %v3748 = vmul.f32 %v2283, %v3700
        %v3749 = vmul.f32 %v2284, %v3701
        %v3750 = vmul.f32 %v2285, %v3702
        %v3751 = vmul.f32 %v2286, %v3703
        %v3752 = vmul.f32 %v2287, %v3704
        %v3753 = vmul.f32 %v2288, %v3705
        %v3754 = vmul.f32 %v2289, %v3706
        %v3755 = vmul.f32 %v2290, %v3707
        %v3756 = vmul.f32 %v2291, %v3708
        %v3757 = vmul.f32 %v2292, %v3709
        %v3758 = vmul.f32 %v2293, %v3710
        %v3759 = vmul.f32 %v2294, %v3711
        %v3760 = vmul.f32 %v2295, %v3712
        %v3761 = vmul.f32 %v2296, %v3713
        %v3762 = vmul.f32 %v2297, %v3714
        %v3763 = vmul.f32 %v2298, %v3715
        %v3764 = vmul.f32 %v2299, %v3716
        %v3765 = vmul.f32 %v2300, %v3717
        %v3766 = vmul.f32 %v2301, %v3718
        %v3767 = vmul.f32 %v2302, %v3719
        %v3768 = vmul.f32 %v2303, %v3720
        %v3769 = vmul.f32 %v2304, %v3721
        %v3770 = vmul.f32 %v2305, %v3722
        %v3771 = vmul.f32 %v2306, %v3723
        %v3772 = vadd.f32 %v3724, %v3725
        %v3773 = vadd.f32 %v3772, %v3726
        %v3774 = vadd.f32 %v3773, %v3727
        %v3775 = vadd.f32 %v3774, %v3728
        %v3776 = vadd.f32 %v3775, %v3729
        %v3777 = vadd.f32 %v3776, %v3730
        %v3778 = vadd.f32 %v3777, %v3731
        %v3779 = vadd.f32 %v3778, %v3732
        %v3780 = vadd.f32 %v3779, %v3733
        %v3781 = vadd.f32 %v3780, %v3734
        %v3782 = vadd.f32 %v3781, %v3735
        %v3783 = vadd.f32 %v3782, %v3736
        %v3784 = vadd.f32 %v3783, %v3737
        %v3785 = vadd.f32 %v3784, %v3738
        %v3786 = vadd.f32 %v3785, %v3739
        %v3787 = vadd.f32 %v3786, %v3740
        %v3788 = vadd.f32 %v3787, %v3741
        %v3789 = vadd.f32 %v3788, %v3742
        %v3790 = vadd.f32 %v3789, %v3743
        %v3791 = vadd.f32 %v3790, %v3744
        %v3792 = vadd.f32 %v3791, %v3745
        %v3793 = vadd.f32 %v3792, %v3746
        %v3794 = vadd.f32 %v3793, %v3747
        %v3795 = vadd.f32 %v3794, %v3748
        %v3796 = vadd.f32 %v3795, %v3749
        %v3797 = vadd.f32 %v3796, %v3750
        %v3798 = vadd.f32 %v3797, %v3751
        %v3799 = vadd.f32 %v3798, %v3752
        %v3800 = vadd.f32 %v3799, %v3753
        %v3801 = vadd.f32 %v3800, %v3754
        %v3802 = vadd.f32 %v3801, %v3755
        %v3803 = vadd.f32 %v3802, %v3756
        %v3804 = vadd.f32 %v3803, %v3757
        %v3805 = vadd.f32 %v3804, %v3758
        %v3806 = vadd.f32 %v3805, %v3759
        %v3807 = vadd.f32 %v3806, %v3760
        %v3808 = vadd.f32 %v3807, %v3761
        %v3809 = vadd.f32 %v3808, %v3762
        %v3810 = vadd.f32 %v3809, %v3763
        %v3811 = vadd.f32 %v3810, %v3764
        %v3812 = vadd.f32 %v3811, %v3765
        %v3813 = vadd.f32 %v3812, %v3766
        %v3814 = vadd.f32 %v3813, %v3767
        %v3815 = vadd.f32 %v3814, %v3768
        %v3816 = vadd.f32 %v3815, %v3769
        %v3817 = vadd.f32 %v3816, %v3770
        %v3818 = vadd.f32 %v3817, %v3771
        %v3819 = vrot.slane %v3818, 4
        %v3820 = vadd.f32 %v3818, %v3819
        %v3821 = vrot.slane %v3820, 2
        %v3822 = vadd.f32 %v3820, %v3821
        %v3823 = vrot.slane %v3822, 1
        %v3824 = vadd.f32 %v3822, %v3823
        %v3825 = vld [vmem:[%s2456 + $0x9] sm:$0x1]
        %v3826 = vadd.f32 %v3825, %v3824
        %3827 = vst [vmem:[%s2456 + $0x9] sm:$0x1] %v3826
        %p3828 = scmp.eq.s32.totalorder %s23, 3
        // Predicated region
        $region79: #{tudui_forward.1} parent=65 // pred_check
          %p3829 = pneg %p3828
        $region80: #{tudui_forward.1} parent=65 // pred_check_branch
          %3831 = sbr.rel (%p3829) target = $region82
        $region81: #{tudui_forward.1} parent=65 // pred_region
          %v3832 = vld [vmem:[#allocation2] sm:$0xff]
          %v3833 = vld [vmem:[#allocation2 + $0x8] sm:$0x3]
          %v3834 = vld [vmem:[#allocation2 + $0x10] sm:$0xff]
          %v3835 = vld [vmem:[#allocation2 + $0x18] sm:$0x3]
          %3836 = vadd.xlane.f32.xlu0 %v3832
          %v3837 = vpop.xlane.xlu0 %3836
          %vm3838 = vcmask 1041408
          %v3839 = vsel %vm3838, %v3833, 0.0
          %3840 = vadd.xlane.f32.xlu0 %v3839
          %v3841 = vpop.xlane.xlu0 %3840
          %3842 = vadd.xlane.f32.xlu0 %v3834
          %v3843 = vpop.xlane.xlu0 %3842
          %v3844 = vsel %vm3838, %v3835, 0.0
          %3845 = vadd.xlane.f32.xlu0 %v3844
          %v3846 = vpop.xlane.xlu0 %3845
          %p3847 = scmp.eq.s32.totalorder %s22, 0
          %s3848 = scalar_select %p3847, 1.0, 0.0
          %v3849 = vld [vmem:[%s2] sm:$0x1]
          %v3850 = vstv %s3848
          %v3851 = vmul.f32 %v3850, %v3849
          %v3853 = vlaneseq
          %v3854 = vshrl.u32 %v3853, 7
          %v3855 = vsub.s32 0, %v3854
          %v3856 = vrot.slane %v3851, %v3855
          %3858 = vbcast.lane.b32.xlu0 %v3856, 256
          %v3859 = vpop.permute.xlu0 %3858
          %s3861 = sor.u32 256, 8
          %3862 = vbcast.lane.b32.xlu0 %v3856, %s3861
          %v3863 = vpop.permute.xlu0 %3862
          %v3866 = vadd.f32 %v3837, %v3859
          %v3867 = vadd.f32 %v3841, %v3863
          %v3868 = vadd.f32 %v3843, %v3859
          %v3869 = vadd.f32 %v3846, %v3863
          %3874 = vset.pattern.permute.xlu0 0
          %3875 = vperm.xlu0 %3874, %v3866
          %v3876 = vpop.permute.xlu0 %3875
          %3877 = vset.pattern.permute.xlu0 0
          %3878 = vperm.xlu0 %3877, %v3867
          %v3879 = vpop.permute.xlu0 %3878
          %3880 = vset.pattern.permute.xlu0 0
          %3881 = vperm.xlu0 %3880, %v3868
          %v3882 = vpop.permute.xlu0 %3881
          %3883 = vset.pattern.permute.xlu0 0
          %3884 = vperm.xlu0 %3883, %v3869
          %v3885 = vpop.permute.xlu0 %3884
          %v3886 = vlaneseq
          %v3887 = vand.u32 %v3886, 127
          %v3888 = vlaneseq
          %v3889 = vshrl.u32 %v3888, 7
          %v3890 = vsub.s32 %v3887, %v3889
          %v3891 = vrot.slane %v3876, %v3890
          %v3892 = vadd.s32 %v3887, 4294967288
          %v3893 = vlaneseq
          %v3894 = vshrl.u32 %v3893, 7
          %v3895 = vsub.s32 %v3892, %v3894
          %v3896 = vrot.slane %v3879, %v3895
          %vm3897 = vcmask 130112
          %v3898 = vsel %vm3897, %v3896, %v3891
          %v3899 = vlaneseq
          %v3900 = vshrl.u32 %v3899, 7
          %v3901 = vsub.s32 %v3887, %v3900
          %v3902 = vrot.slane %v3882, %v3901
          %v3903 = vlaneseq
          %v3904 = vshrl.u32 %v3903, 7
          %v3905 = vsub.s32 %v3892, %v3904
          %v3906 = vrot.slane %v3885, %v3905
          %v3907 = vsel %vm3897, %v3906, %v3902
          %vm3908 = vcmask 1041409
          %v3909 = vsel %vm3908, %v3907, %v3898
          %vm3911 = vcmask 74752
          %3912 = vst.msk [vmem:[#allocation7] sm:$0x3] %vm3911, %v3909
        $region82: #{tudui_forward.1} parent=65 // pred_fallthru
          _
        // Predicated region
        $region83: #{tudui_forward.1} parent=65 // pred_check
          %p3913 = pneg %p129
        $region84: #{tudui_forward.1} parent=65 // pred_check_branch
          %3915 = sbr.rel (%p3913) target = $region86
        $region85: #{tudui_forward.1} parent=65 // pred_region
          %s3917 = ssub.s32 32, 32
          %3918 = vsyncadd [#allocation6], %s3917
          %s3919 = smul.addr %s22, 32
          %s3920 = scalar_lea.hbm %s3, %s3919
          %s3922 = sshll.u32 [#allocation7], 4
          %s3923 = int_to_ptr.vmem [resolvable:$true] %s3922
          %3925 = dma.vmem_to_hbm [thread:$0]  %s3923, 32, %s3920, [#allocation6]
        $region86: #{tudui_forward.1} parent=65 // pred_fallthru
          _
        // Predicated region
        $region87: #{tudui_forward.1} parent=65 // pred_check
          %p3926 = pneg %p129
        $region88: #{tudui_forward.1} parent=65 // pred_check_branch
          %3928 = sbr.rel (%p3926) target = $region90
        $region89: #{tudui_forward.1} parent=65 // pred_region
          %3929 = dma.done [#allocation6], 32
        $region90: #{tudui_forward.1} parent=65 // pred_fallthru
          _
      $region66: #{tudui_forward.1} parent=5 // pred_fallthru
        _
      %p3930 = scmp.le.s32.totalorder 2, %s13
      // Predicated region
      $region91: #{tudui_forward.1} parent=5 // pred_check
        %p3931 = pneg %p3930
      $region92: #{tudui_forward.1} parent=5 // pred_check_branch
        %3933 = sbr.rel (%p3931) target = $region94
      $region93: #{tudui_forward.1} parent=5 // pred_region
        %s3934 = ssub.s32 %s13, 2
      $region94: #{tudui_forward.1} parent=5 // pred_fallthru
        _
    $region6: #{tudui_forward.1} parent=1 // loop_footer
      %s17 = sadd.s32 1, %s13
    $region7: #{tudui_forward.1} parent=1 // loop_footer_branch
      %12 = sbr.rel target = $region3
    $region8: #{tudui_forward.1} parent=1 // loop_exit
      _
    %3935 = vsyncpa [#allocation5], 1
    %s3936 = scalar_lea.sflag [#allocation5], 1
    %3937 = vsyncpa %s3936, 1
    %3938 = vsyncpa [#allocation6], 1
    %s3939 = scalar_lea.sflag [#allocation6], 1
    %3940 = vsyncpa %s3939, 1

</llo_original>
